<compile_context>
chip_gen: v6e
topology: v6e:2x2x1
jax: 0.10.0
libtpu: 0.0.40
codegen_flags: <defaults>
</compile_context>

<pallas_src>
import jax
import jax.numpy as jnp
from jax.experimental import pallas as pl
from jax.experimental.pallas import tpu as pltpu


def _build_fused_kernel(B, H, W, C):
    """Returns (kernel, L) for the fully fused forward pass."""
    assert W % 2 == 0, "even input width assumed (pool kernel (1,2))"
    K1, K2 = 3, 5
    Ho1, Wo1 = H - K1 + 1, W - K1 + 1
    Ho2, Wo2 = H - K2 + 1, W - K2 + 1
    Wp1, Wp2 = Wo1 // 2, Wo2 // 2          # AvgPool drops the remainder column like PyTorch
    L1, L2 = Ho1 * Wp1, Ho2 * Wp2
    L = L1 + L2
    Wh = W // 2                            # de-interleaved (even/odd column) half width
    FP = (H + 1) * Wh                      # padded flat length (one extra zero row)
    NEG_SLOPE = 0.01
    N_BN = B * L                           # elements per channel for BatchNorm statistics

    def kernel(x_ref, w1_ref, b1_ref, w2_ref, b2_ref, g_ref, bt_ref, o_ref):
        # x_ref: (B,H,W)  w*_ref: (C,k*k)  b*_ref/g_ref/bt_ref: (C,1)  o_ref: (B,C,L)
        x = x_ref[...]                                                    # (B, H, W) f32

        # --- one-time column de-interleave: xe[..,q] = x[..,2q], xo[..,q] = x[..,2q+1] ---
        xe = jnp.concatenate([x[:, :, 2 * q:2 * q + 1] for q in range(Wh)], axis=2)
        xo = jnp.concatenate([x[:, :, 2 * q + 1:2 * q + 2] for q in range(Wh)], axis=2)

        # --- row-flatten (padded with one zero row) so every conv tap becomes a single
        #     contiguous lane slice: xef[b, 0, r*Wh + q] = xe[b, r, q] ---
        zrow = jnp.zeros((B, 1, Wh), jnp.float32)
        xef = jnp.concatenate([xe[:, p:p + 1, :] for p in range(H)] + [zrow], axis=2)  # (B,1,FP)
        xof = jnp.concatenate([xo[:, p:p + 1, :] for p in range(H)] + [zrow], axis=2)  # (B,1,FP)

        def branch(b, w_ref, bias_ref, k, Ho, Wp):
            """Conv2d(1->C, kxk, VALID) + LeakyReLU + AvgPool(1,2) for batch index b.

            Returns (C, Ho*Wp): channels on sublanes, row-major flattened spatial on lanes.
            Output columns are computed parity-split (even / odd conv columns) so the
            nonlinearity is applied before the 2-wide average, matching PyTorch order.
            """
            n = Ho * Wh                                   # padded flat extent (stride Wh per row)
            ef = xef[b]                                   # (1, FP)
            of = xof[b]                                   # (1, FP)
            wc = [w_ref[:, t:t + 1] for t in range(k * k)]   # per-tap weight columns (C,1)

            acc_e = jnp.zeros((C, n), jnp.float32)        # conv at even output columns
            acc_o = jnp.zeros((C, n), jnp.float32)        # conv at odd  output columns
            for dy in range(k):
                base = dy * Wh
                for dx in range(k):
                    t = dy * k + dx
                    m = dx // 2
                    if dx % 2 == 0:
                        # even col 2j  : x[i+dy, 2j+dx]   = xe[i+dy, j+m]
                        # odd  col 2j+1: x[i+dy, 2j+1+dx] = xo[i+dy, j+m]
                        se = ef[:, base + m: base + m + n]            # (1, n)
                        so = of[:, base + m: base + m + n]
                    else:
                        # even col 2j  : x[i+dy, 2j+dx]   = xo[i+dy, j+m]
                        # odd  col 2j+1: x[i+dy, 2j+1+dx] = xe[i+dy, j+m+1]
                        se = of[:, base + m: base + m + n]
                        so = ef[:, base + m + 1: base + m + 1 + n]
                    acc_e = acc_e + wc[t] * se            # (C,1)*(1,n) broadcast MAC
                    acc_o = acc_o + wc[t] * so

            bias = bias_ref[...]                          # (C, 1)
            acc_e = acc_e + bias
            acc_o = acc_o + bias
            ye = jnp.where(acc_e >= 0, acc_e, NEG_SLOPE * acc_e)      # LeakyReLU(0.01)
            yo = jnp.where(acc_o >= 0, acc_o, NEG_SLOPE * acc_o)
            pooled = (ye + yo) * 0.5                      # (C, Ho*Wh); lanes j<Wp valid per row
            # compact: drop the per-row padding lanes -> (C, Ho*Wp) row-major flatten
            return jnp.concatenate(
                [pooled[:, i * Wh: i * Wh + Wp] for i in range(Ho)], axis=1)

        # per-batch pre-BN activation slabs, already flattened+concatenated: (C, L)
        zs = []
        for b in range(B):
            z1 = branch(b, w1_ref, b1_ref, K1, Ho1, Wp1)   # (C, L1)
            z2 = branch(b, w2_ref, b2_ref, K2, Ho2, Wp2)   # (C, L2)
            zs.append(jnp.concatenate([z1, z2], axis=1))   # (C, L)

        # --- BatchNorm2d, training mode: per-channel batch stats over B*L (biased var) ---
        inv_n = 1.0 / N_BN
        mean = sum(jnp.sum(z, axis=1, keepdims=True) for z in zs) * inv_n           # (C,1)
        var = sum(jnp.sum((z - mean) * (z - mean), axis=1, keepdims=True)
                  for z in zs) * inv_n                                               # (C,1)
        scale = jax.lax.rsqrt(var + 1e-5) * g_ref[...]                               # (C,1)
        shift = bt_ref[...] - mean * scale                                           # (C,1)
        for b in range(B):
            o_ref[b] = zs[b] * scale + shift               # lane-dense (C, L) store

    return kernel, L


@jax.jit
def spatial_inception_block(x, params):
    """x: (B, 1, H, W) NCHW float32 -> (B, num_S, 1, L) float32."""
    B, Cin, H, W = x.shape
    assert Cin == 1, "module default in_channels=1"
    C = params["w1"].shape[0]
    kernel, L = _build_fused_kernel(B, H, W, C)

    out = pl.pallas_call(
        kernel,
        out_shape=jax.ShapeDtypeStruct((B, C, L), jnp.float32),
        in_specs=[pl.BlockSpec(memory_space=pltpu.MemorySpace.VMEM)] * 7,
        out_specs=pl.BlockSpec(memory_space=pltpu.MemorySpace.VMEM),
    )(
        x[:, 0],                              # (B, H, W)    — free squeeze
        params["w1"][:, 0].reshape(C, 9),     # (C, 9)       — contiguous reshapes (free)
        params["b1"].reshape(C, 1),
        params["w2"][:, 0].reshape(C, 25),
        params["b2"].reshape(C, 1),
        params["gamma"].reshape(C, 1),
        params["beta"].reshape(C, 1),
    )
    return out.reshape(B, C, 1, L)            # unit-dim insert only (layout-free)


def reference(x, params):
    """Pure-JAX reference of the PyTorch forward (training-mode BN)."""
    def branch(w, b, k):
        y = jax.lax.conv_general_dilated(
            x, w, (1, 1), "VALID",
            dimension_numbers=("NCHW", "OIHW", "NCHW"),
            precision=jax.lax.Precision.HIGHEST)
        y = y + b.reshape(1, -1, 1, 1)
        y = jnp.where(y >= 0, y, 0.01 * y)
        Bq, Cq, Ho, Wo = y.shape
        Wp = Wo // 2
        y = y[..., :2 * Wp].reshape(Bq, Cq, Ho, Wp, 2).mean(-1)
        return y

    y1 = branch(params["w1"], params["b1"], 3)
    y2 = branch(params["w2"], params["b2"], 5)
    B, C = x.shape[0], y1.shape[1]
    out = jnp.concatenate([y1.reshape(B, C, 1, -1), y2.reshape(B, C, 1, -1)], -1)
    mean = out.mean(axis=(0, 2, 3), keepdims=True)
    var = ((out - mean) ** 2).mean(axis=(0, 2, 3), keepdims=True)
    out = (out - mean) / jnp.sqrt(var + 1e-5)
    return out * params["gamma"].reshape(1, -1, 1, 1) + params["beta"].reshape(1, -1, 1, 1)


if __name__ == "__main__":
    B, Cin, H, W = 2, 1, 16, 16
    num_S = 8

    key = jax.random.PRNGKey(0)
    k1, k2, k3, k4, kx = jax.random.split(key, 5)
    # deterministic parameter init (shapes from the module __init__)
    params = {
        "w1": jax.random.uniform(k1, (num_S, Cin, 3, 3), jnp.float32, -1.0 / 3, 1.0 / 3),
        "b1": jax.random.uniform(k2, (num_S,), jnp.float32, -1.0 / 3, 1.0 / 3),
        "w2": jax.random.uniform(k3, (num_S, Cin, 5, 5), jnp.float32, -0.2, 0.2),
        "b2": jax.random.uniform(k4, (num_S,), jnp.float32, -0.2, 0.2),
        "gamma": jnp.ones((num_S,), jnp.float32),   # BatchNorm2d default weight
        "beta": jnp.zeros((num_S,), jnp.float32),   # BatchNorm2d default bias
    }
    x = jax.random.normal(kx, (B, Cin, H, W), jnp.float32)

    out = jax.block_until_ready(spatial_inception_block(x, params))

    # expected output length: (H-2)*((W-2)//2) + (H-4)*((W-4)//2) = 98 + 72 = 170
    assert out.shape == (B, num_S, 1, 170), out.shape

    ref = jax.block_until_ready(reference(x, params))
    assert bool(jnp.allclose(out, ref, rtol=1e-3, atol=1e-3)), "mismatch vs reference"

    print("KERNEL_OK")
</pallas_src>

<mosaic_0001>
module attributes {stable_mosaic.version = 11 : i64} {
  func.func @kernel(%arg0: memref<2x16x16xf32, #tpu.memory_space<vmem>>, %arg1: memref<8x9xf32, #tpu.memory_space<vmem>>, %arg2: memref<8x1xf32, #tpu.memory_space<vmem>>, %arg3: memref<8x25xf32, #tpu.memory_space<vmem>>, %arg4: memref<8x1xf32, #tpu.memory_space<vmem>>, %arg5: memref<8x1xf32, #tpu.memory_space<vmem>>, %arg6: memref<8x1xf32, #tpu.memory_space<vmem>>, %arg7: memref<2x8x170xf32, #tpu.memory_space<vmem>>) attributes {dimension_semantics = [], scalar_prefetch = 0 : i64, scratch_operands = 0 : i64, tpu.core_type = #tpu.core_type<tc>} {
    %c0 = arith.constant 0 : index
    %c0_0 = arith.constant 0 : index
    %c0_1 = arith.constant 0 : index
    %0 = vector.load %arg0[%c0, %c0_0, %c0_1] : memref<2x16x16xf32, #tpu.memory_space<vmem>>, vector<2x16x16xf32>
    %1 = vector.extract_strided_slice %0 {offsets = [0, 0, 0], sizes = [2, 16, 1], strides = [1, 1, 1]} : vector<2x16x16xf32> to vector<2x16x1xf32>
    %2 = vector.extract_strided_slice %0 {offsets = [0, 0, 2], sizes = [2, 16, 1], strides = [1, 1, 1]} : vector<2x16x16xf32> to vector<2x16x1xf32>
    %3 = vector.extract_strided_slice %0 {offsets = [0, 0, 4], sizes = [2, 16, 1], strides = [1, 1, 1]} : vector<2x16x16xf32> to vector<2x16x1xf32>
    %4 = vector.extract_strided_slice %0 {offsets = [0, 0, 6], sizes = [2, 16, 1], strides = [1, 1, 1]} : vector<2x16x16xf32> to vector<2x16x1xf32>
    %5 = vector.extract_strided_slice %0 {offsets = [0, 0, 8], sizes = [2, 16, 1], strides = [1, 1, 1]} : vector<2x16x16xf32> to vector<2x16x1xf32>
    %6 = vector.extract_strided_slice %0 {offsets = [0, 0, 10], sizes = [2, 16, 1], strides = [1, 1, 1]} : vector<2x16x16xf32> to vector<2x16x1xf32>
    %7 = vector.extract_strided_slice %0 {offsets = [0, 0, 12], sizes = [2, 16, 1], strides = [1, 1, 1]} : vector<2x16x16xf32> to vector<2x16x1xf32>
    %8 = vector.extract_strided_slice %0 {offsets = [0, 0, 14], sizes = [2, 16, 1], strides = [1, 1, 1]} : vector<2x16x16xf32> to vector<2x16x1xf32>
    %9 = tpu.concatenate %1, %2, %3, %4, %5, %6, %7, %8 in 2 : vector<2x16x1xf32>, vector<2x16x1xf32>, vector<2x16x1xf32>, vector<2x16x1xf32>, vector<2x16x1xf32>, vector<2x16x1xf32>, vector<2x16x1xf32>, vector<2x16x1xf32> -> vector<2x16x8xf32>
    %10 = vector.extract_strided_slice %0 {offsets = [0, 0, 1], sizes = [2, 16, 1], strides = [1, 1, 1]} : vector<2x16x16xf32> to vector<2x16x1xf32>
    %11 = vector.extract_strided_slice %0 {offsets = [0, 0, 3], sizes = [2, 16, 1], strides = [1, 1, 1]} : vector<2x16x16xf32> to vector<2x16x1xf32>
    %12 = vector.extract_strided_slice %0 {offsets = [0, 0, 5], sizes = [2, 16, 1], strides = [1, 1, 1]} : vector<2x16x16xf32> to vector<2x16x1xf32>
    %13 = vector.extract_strided_slice %0 {offsets = [0, 0, 7], sizes = [2, 16, 1], strides = [1, 1, 1]} : vector<2x16x16xf32> to vector<2x16x1xf32>
    %14 = vector.extract_strided_slice %0 {offsets = [0, 0, 9], sizes = [2, 16, 1], strides = [1, 1, 1]} : vector<2x16x16xf32> to vector<2x16x1xf32>
    %15 = vector.extract_strided_slice %0 {offsets = [0, 0, 11], sizes = [2, 16, 1], strides = [1, 1, 1]} : vector<2x16x16xf32> to vector<2x16x1xf32>
    %16 = vector.extract_strided_slice %0 {offsets = [0, 0, 13], sizes = [2, 16, 1], strides = [1, 1, 1]} : vector<2x16x16xf32> to vector<2x16x1xf32>
    %17 = vector.extract_strided_slice %0 {offsets = [0, 0, 15], sizes = [2, 16, 1], strides = [1, 1, 1]} : vector<2x16x16xf32> to vector<2x16x1xf32>
    %18 = tpu.concatenate %10, %11, %12, %13, %14, %15, %16, %17 in 2 : vector<2x16x1xf32>, vector<2x16x1xf32>, vector<2x16x1xf32>, vector<2x16x1xf32>, vector<2x16x1xf32>, vector<2x16x1xf32>, vector<2x16x1xf32>, vector<2x16x1xf32> -> vector<2x16x8xf32>
    %cst = arith.constant 0.000000e+00 : f32
    %19 = vector.broadcast %cst : f32 to vector<2x1x8xf32>
    %20 = vector.extract_strided_slice %9 {offsets = [0, 0, 0], sizes = [2, 1, 8], strides = [1, 1, 1]} : vector<2x16x8xf32> to vector<2x1x8xf32>
    %21 = vector.extract_strided_slice %9 {offsets = [0, 1, 0], sizes = [2, 1, 8], strides = [1, 1, 1]} : vector<2x16x8xf32> to vector<2x1x8xf32>
    %22 = vector.extract_strided_slice %9 {offsets = [0, 2, 0], sizes = [2, 1, 8], strides = [1, 1, 1]} : vector<2x16x8xf32> to vector<2x1x8xf32>
    %23 = vector.extract_strided_slice %9 {offsets = [0, 3, 0], sizes = [2, 1, 8], strides = [1, 1, 1]} : vector<2x16x8xf32> to vector<2x1x8xf32>
    %24 = vector.extract_strided_slice %9 {offsets = [0, 4, 0], sizes = [2, 1, 8], strides = [1, 1, 1]} : vector<2x16x8xf32> to vector<2x1x8xf32>
    %25 = vector.extract_strided_slice %9 {offsets = [0, 5, 0], sizes = [2, 1, 8], strides = [1, 1, 1]} : vector<2x16x8xf32> to vector<2x1x8xf32>
    %26 = vector.extract_strided_slice %9 {offsets = [0, 6, 0], sizes = [2, 1, 8], strides = [1, 1, 1]} : vector<2x16x8xf32> to vector<2x1x8xf32>
    %27 = vector.extract_strided_slice %9 {offsets = [0, 7, 0], sizes = [2, 1, 8], strides = [1, 1, 1]} : vector<2x16x8xf32> to vector<2x1x8xf32>
    %28 = vector.extract_strided_slice %9 {offsets = [0, 8, 0], sizes = [2, 1, 8], strides = [1, 1, 1]} : vector<2x16x8xf32> to vector<2x1x8xf32>
    %29 = vector.extract_strided_slice %9 {offsets = [0, 9, 0], sizes = [2, 1, 8], strides = [1, 1, 1]} : vector<2x16x8xf32> to vector<2x1x8xf32>
    %30 = vector.extract_strided_slice %9 {offsets = [0, 10, 0], sizes = [2, 1, 8], strides = [1, 1, 1]} : vector<2x16x8xf32> to vector<2x1x8xf32>
    %31 = vector.extract_strided_slice %9 {offsets = [0, 11, 0], sizes = [2, 1, 8], strides = [1, 1, 1]} : vector<2x16x8xf32> to vector<2x1x8xf32>
    %32 = vector.extract_strided_slice %9 {offsets = [0, 12, 0], sizes = [2, 1, 8], strides = [1, 1, 1]} : vector<2x16x8xf32> to vector<2x1x8xf32>
    %33 = vector.extract_strided_slice %9 {offsets = [0, 13, 0], sizes = [2, 1, 8], strides = [1, 1, 1]} : vector<2x16x8xf32> to vector<2x1x8xf32>
    %34 = vector.extract_strided_slice %9 {offsets = [0, 14, 0], sizes = [2, 1, 8], strides = [1, 1, 1]} : vector<2x16x8xf32> to vector<2x1x8xf32>
    %35 = vector.extract_strided_slice %9 {offsets = [0, 15, 0], sizes = [2, 1, 8], strides = [1, 1, 1]} : vector<2x16x8xf32> to vector<2x1x8xf32>
    %36 = tpu.concatenate %20, %21, %22, %23, %24, %25, %26, %27, %28, %29, %30, %31, %32, %33, %34, %35 in 2 : vector<2x1x8xf32>, vector<2x1x8xf32>, vector<2x1x8xf32>, vector<2x1x8xf32>, vector<2x1x8xf32>, vector<2x1x8xf32>, vector<2x1x8xf32>, vector<2x1x8xf32>, vector<2x1x8xf32>, vector<2x1x8xf32>, vector<2x1x8xf32>, vector<2x1x8xf32>, vector<2x1x8xf32>, vector<2x1x8xf32>, vector<2x1x8xf32>, vector<2x1x8xf32> -> vector<2x1x128xf32>
    %37 = tpu.concatenate %36, %19 in 2 : vector<2x1x128xf32>, vector<2x1x8xf32> -> vector<2x1x136xf32>
    %38 = vector.extract_strided_slice %18 {offsets = [0, 0, 0], sizes = [2, 1, 8], strides = [1, 1, 1]} : vector<2x16x8xf32> to vector<2x1x8xf32>
    %39 = vector.extract_strided_slice %18 {offsets = [0, 1, 0], sizes = [2, 1, 8], strides = [1, 1, 1]} : vector<2x16x8xf32> to vector<2x1x8xf32>
    %40 = vector.extract_strided_slice %18 {offsets = [0, 2, 0], sizes = [2, 1, 8], strides = [1, 1, 1]} : vector<2x16x8xf32> to vector<2x1x8xf32>
    %41 = vector.extract_strided_slice %18 {offsets = [0, 3, 0], sizes = [2, 1, 8], strides = [1, 1, 1]} : vector<2x16x8xf32> to vector<2x1x8xf32>
    %42 = vector.extract_strided_slice %18 {offsets = [0, 4, 0], sizes = [2, 1, 8], strides = [1, 1, 1]} : vector<2x16x8xf32> to vector<2x1x8xf32>
    %43 = vector.extract_strided_slice %18 {offsets = [0, 5, 0], sizes = [2, 1, 8], strides = [1, 1, 1]} : vector<2x16x8xf32> to vector<2x1x8xf32>
    %44 = vector.extract_strided_slice %18 {offsets = [0, 6, 0], sizes = [2, 1, 8], strides = [1, 1, 1]} : vector<2x16x8xf32> to vector<2x1x8xf32>
    %45 = vector.extract_strided_slice %18 {offsets = [0, 7, 0], sizes = [2, 1, 8], strides = [1, 1, 1]} : vector<2x16x8xf32> to vector<2x1x8xf32>
    %46 = vector.extract_strided_slice %18 {offsets = [0, 8, 0], sizes = [2, 1, 8], strides = [1, 1, 1]} : vector<2x16x8xf32> to vector<2x1x8xf32>
    %47 = vector.extract_strided_slice %18 {offsets = [0, 9, 0], sizes = [2, 1, 8], strides = [1, 1, 1]} : vector<2x16x8xf32> to vector<2x1x8xf32>
    %48 = vector.extract_strided_slice %18 {offsets = [0, 10, 0], sizes = [2, 1, 8], strides = [1, 1, 1]} : vector<2x16x8xf32> to vector<2x1x8xf32>
    %49 = vector.extract_strided_slice %18 {offsets = [0, 11, 0], sizes = [2, 1, 8], strides = [1, 1, 1]} : vector<2x16x8xf32> to vector<2x1x8xf32>
    %50 = vector.extract_strided_slice %18 {offsets = [0, 12, 0], sizes = [2, 1, 8], strides = [1, 1, 1]} : vector<2x16x8xf32> to vector<2x1x8xf32>
    %51 = vector.extract_strided_slice %18 {offsets = [0, 13, 0], sizes = [2, 1, 8], strides = [1, 1, 1]} : vector<2x16x8xf32> to vector<2x1x8xf32>
    %52 = vector.extract_strided_slice %18 {offsets = [0, 14, 0], sizes = [2, 1, 8], strides = [1, 1, 1]} : vector<2x16x8xf32> to vector<2x1x8xf32>
    %53 = vector.extract_strided_slice %18 {offsets = [0, 15, 0], sizes = [2, 1, 8], strides = [1, 1, 1]} : vector<2x16x8xf32> to vector<2x1x8xf32>
    %54 = tpu.concatenate %38, %39, %40, %41, %42, %43, %44, %45, %46, %47, %48, %49, %50, %51, %52, %53 in 2 : vector<2x1x8xf32>, vector<2x1x8xf32>, vector<2x1x8xf32>, vector<2x1x8xf32>, vector<2x1x8xf32>, vector<2x1x8xf32>, vector<2x1x8xf32>, vector<2x1x8xf32>, vector<2x1x8xf32>, vector<2x1x8xf32>, vector<2x1x8xf32>, vector<2x1x8xf32>, vector<2x1x8xf32>, vector<2x1x8xf32>, vector<2x1x8xf32>, vector<2x1x8xf32> -> vector<2x1x128xf32>
    %55 = tpu.concatenate %54, %19 in 2 : vector<2x1x128xf32>, vector<2x1x8xf32> -> vector<2x1x136xf32>
    %56 = vector.extract_strided_slice %37 {offsets = [0, 0, 0], sizes = [1, 1, 136], strides = [1, 1, 1]} : vector<2x1x136xf32> to vector<1x1x136xf32>
    %57 = vector.shape_cast %56 : vector<1x1x136xf32> to vector<1x136xf32>
    %58 = vector.extract_strided_slice %55 {offsets = [0, 0, 0], sizes = [1, 1, 136], strides = [1, 1, 1]} : vector<2x1x136xf32> to vector<1x1x136xf32>
    %59 = vector.shape_cast %58 : vector<1x1x136xf32> to vector<1x136xf32>
    %c0_2 = arith.constant 0 : index
    %c0_3 = arith.constant 0 : index
    %60 = vector.load %arg1[%c0_2, %c0_3] : memref<8x9xf32, #tpu.memory_space<vmem>>, vector<8x1xf32>
    %c0_4 = arith.constant 0 : index
    %c1 = arith.constant 1 : index
    %61 = vector.load %arg1[%c0_4, %c1] : memref<8x9xf32, #tpu.memory_space<vmem>>, vector<8x1xf32>
    %c0_5 = arith.constant 0 : index
    %c2 = arith.constant 2 : index
    %62 = vector.load %arg1[%c0_5, %c2] : memref<8x9xf32, #tpu.memory_space<vmem>>, vector<8x1xf32>
    %c0_6 = arith.constant 0 : index
    %c3 = arith.constant 3 : index
    %63 = vector.load %arg1[%c0_6, %c3] : memref<8x9xf32, #tpu.memory_space<vmem>>, vector<8x1xf32>
    %c0_7 = arith.constant 0 : index
    %c4 = arith.constant 4 : index
    %64 = vector.load %arg1[%c0_7, %c4] : memref<8x9xf32, #tpu.memory_space<vmem>>, vector<8x1xf32>
    %c0_8 = arith.constant 0 : index
    %c5 = arith.constant 5 : index
    %65 = vector.load %arg1[%c0_8, %c5] : memref<8x9xf32, #tpu.memory_space<vmem>>, vector<8x1xf32>
    %c0_9 = arith.constant 0 : index
    %c6 = arith.constant 6 : index
    %66 = vector.load %arg1[%c0_9, %c6] : memref<8x9xf32, #tpu.memory_space<vmem>>, vector<8x1xf32>
    %c0_10 = arith.constant 0 : index
    %c7 = arith.constant 7 : index
    %67 = vector.load %arg1[%c0_10, %c7] : memref<8x9xf32, #tpu.memory_space<vmem>>, vector<8x1xf32>
    %c0_11 = arith.constant 0 : index
    %c8 = arith.constant 8 : index
    %68 = vector.load %arg1[%c0_11, %c8] : memref<8x9xf32, #tpu.memory_space<vmem>>, vector<8x1xf32>
    %cst_12 = arith.constant 0.000000e+00 : f32
    %69 = vector.broadcast %cst_12 : f32 to vector<8x112xf32>
    %cst_13 = arith.constant 0.000000e+00 : f32
    %70 = vector.broadcast %cst_13 : f32 to vector<8x112xf32>
    %71 = vector.extract_strided_slice %57 {offsets = [0, 0], sizes = [1, 112], strides = [1, 1]} : vector<1x136xf32> to vector<1x112xf32>
    %72 = vector.extract_strided_slice %59 {offsets = [0, 0], sizes = [1, 112], strides = [1, 1]} : vector<1x136xf32> to vector<1x112xf32>
    %73 = vector.broadcast %60 : vector<8x1xf32> to vector<8x112xf32>
    %74 = vector.broadcast %71 : vector<1x112xf32> to vector<8x112xf32>
    %75 = arith.mulf %73, %74 : vector<8x112xf32>
    %76 = arith.addf %69, %75 : vector<8x112xf32>
    %77 = vector.broadcast %60 : vector<8x1xf32> to vector<8x112xf32>
    %78 = vector.broadcast %72 : vector<1x112xf32> to vector<8x112xf32>
    %79 = arith.mulf %77, %78 : vector<8x112xf32>
    %80 = arith.addf %70, %79 : vector<8x112xf32>
    %81 = vector.extract_strided_slice %59 {offsets = [0, 0], sizes = [1, 112], strides = [1, 1]} : vector<1x136xf32> to vector<1x112xf32>
    %82 = vector.extract_strided_slice %57 {offsets = [0, 1], sizes = [1, 112], strides = [1, 1]} : vector<1x136xf32> to vector<1x112xf32>
    %83 = vector.broadcast %61 : vector<8x1xf32> to vector<8x112xf32>
    %84 = vector.broadcast %81 : vector<1x112xf32> to vector<8x112xf32>
    %85 = arith.mulf %83, %84 : vector<8x112xf32>
    %86 = arith.addf %76, %85 : vector<8x112xf32>
    %87 = vector.broadcast %61 : vector<8x1xf32> to vector<8x112xf32>
    %88 = vector.broadcast %82 : vector<1x112xf32> to vector<8x112xf32>
    %89 = arith.mulf %87, %88 : vector<8x112xf32>
    %90 = arith.addf %80, %89 : vector<8x112xf32>
    %91 = vector.extract_strided_slice %57 {offsets = [0, 1], sizes = [1, 112], strides = [1, 1]} : vector<1x136xf32> to vector<1x112xf32>
    %92 = vector.extract_strided_slice %59 {offsets = [0, 1], sizes = [1, 112], strides = [1, 1]} : vector<1x136xf32> to vector<1x112xf32>
    %93 = vector.broadcast %62 : vector<8x1xf32> to vector<8x112xf32>
    %94 = vector.broadcast %91 : vector<1x112xf32> to vector<8x112xf32>
    %95 = arith.mulf %93, %94 : vector<8x112xf32>
    %96 = arith.addf %86, %95 : vector<8x112xf32>
    %97 = vector.broadcast %62 : vector<8x1xf32> to vector<8x112xf32>
    %98 = vector.broadcast %92 : vector<1x112xf32> to vector<8x112xf32>
    %99 = arith.mulf %97, %98 : vector<8x112xf32>
    %100 = arith.addf %90, %99 : vector<8x112xf32>
    %101 = vector.extract_strided_slice %57 {offsets = [0, 8], sizes = [1, 112], strides = [1, 1]} : vector<1x136xf32> to vector<1x112xf32>
    %102 = vector.extract_strided_slice %59 {offsets = [0, 8], sizes = [1, 112], strides = [1, 1]} : vector<1x136xf32> to vector<1x112xf32>
    %103 = vector.broadcast %63 : vector<8x1xf32> to vector<8x112xf32>
    %104 = vector.broadcast %101 : vector<1x112xf32> to vector<8x112xf32>
    %105 = arith.mulf %103, %104 : vector<8x112xf32>
    %106 = arith.addf %96, %105 : vector<8x112xf32>
    %107 = vector.broadcast %63 : vector<8x1xf32> to vector<8x112xf32>
    %108 = vector.broadcast %102 : vector<1x112xf32> to vector<8x112xf32>
    %109 = arith.mulf %107, %108 : vector<8x112xf32>
    %110 = arith.addf %100, %109 : vector<8x112xf32>
    %111 = vector.extract_strided_slice %59 {offsets = [0, 8], sizes = [1, 112], strides = [1, 1]} : vector<1x136xf32> to vector<1x112xf32>
    %112 = vector.extract_strided_slice %57 {offsets = [0, 9], sizes = [1, 112], strides = [1, 1]} : vector<1x136xf32> to vector<1x112xf32>
    %113 = vector.broadcast %64 : vector<8x1xf32> to vector<8x112xf32>
    %114 = vector.broadcast %111 : vector<1x112xf32> to vector<8x112xf32>
    %115 = arith.mulf %113, %114 : vector<8x112xf32>
    %116 = arith.addf %106, %115 : vector<8x112xf32>
    %117 = vector.broadcast %64 : vector<8x1xf32> to vector<8x112xf32>
    %118 = vector.broadcast %112 : vector<1x112xf32> to vector<8x112xf32>
    %119 = arith.mulf %117, %118 : vector<8x112xf32>
    %120 = arith.addf %110, %119 : vector<8x112xf32>
    %121 = vector.extract_strided_slice %57 {offsets = [0, 9], sizes = [1, 112], strides = [1, 1]} : vector<1x136xf32> to vector<1x112xf32>
    %122 = vector.extract_strided_slice %59 {offsets = [0, 9], sizes = [1, 112], strides = [1, 1]} : vector<1x136xf32> to vector<1x112xf32>
    %123 = vector.broadcast %65 : vector<8x1xf32> to vector<8x112xf32>
    %124 = vector.broadcast %121 : vector<1x112xf32> to vector<8x112xf32>
    %125 = arith.mulf %123, %124 : vector<8x112xf32>
    %126 = arith.addf %116, %125 : vector<8x112xf32>
    %127 = vector.broadcast %65 : vector<8x1xf32> to vector<8x112xf32>
    %128 = vector.broadcast %122 : vector<1x112xf32> to vector<8x112xf32>
    %129 = arith.mulf %127, %128 : vector<8x112xf32>
    %130 = arith.addf %120, %129 : vector<8x112xf32>
    %131 = vector.extract_strided_slice %57 {offsets = [0, 16], sizes = [1, 112], strides = [1, 1]} : vector<1x136xf32> to vector<1x112xf32>
    %132 = vector.extract_strided_slice %59 {offsets = [0, 16], sizes = [1, 112], strides = [1, 1]} : vector<1x136xf32> to vector<1x112xf32>
    %133 = vector.broadcast %66 : vector<8x1xf32> to vector<8x112xf32>
    %134 = vector.broadcast %131 : vector<1x112xf32> to vector<8x112xf32>
    %135 = arith.mulf %133, %134 : vector<8x112xf32>
    %136 = arith.addf %126, %135 : vector<8x112xf32>
    %137 = vector.broadcast %66 : vector<8x1xf32> to vector<8x112xf32>
    %138 = vector.broadcast %132 : vector<1x112xf32> to vector<8x112xf32>
    %139 = arith.mulf %137, %138 : vector<8x112xf32>
    %140 = arith.addf %130, %139 : vector<8x112xf32>
    %141 = vector.extract_strided_slice %59 {offsets = [0, 16], sizes = [1, 112], strides = [1, 1]} : vector<1x136xf32> to vector<1x112xf32>
    %142 = vector.extract_strided_slice %57 {offsets = [0, 17], sizes = [1, 112], strides = [1, 1]} : vector<1x136xf32> to vector<1x112xf32>
    %143 = vector.broadcast %67 : vector<8x1xf32> to vector<8x112xf32>
    %144 = vector.broadcast %141 : vector<1x112xf32> to vector<8x112xf32>
    %145 = arith.mulf %143, %144 : vector<8x112xf32>
    %146 = arith.addf %136, %145 : vector<8x112xf32>
    %147 = vector.broadcast %67 : vector<8x1xf32> to vector<8x112xf32>
    %148 = vector.broadcast %142 : vector<1x112xf32> to vector<8x112xf32>
    %149 = arith.mulf %147, %148 : vector<8x112xf32>
    %150 = arith.addf %140, %149 : vector<8x112xf32>
    %151 = vector.extract_strided_slice %57 {offsets = [0, 17], sizes = [1, 112], strides = [1, 1]} : vector<1x136xf32> to vector<1x112xf32>
    %152 = vector.extract_strided_slice %59 {offsets = [0, 17], sizes = [1, 112], strides = [1, 1]} : vector<1x136xf32> to vector<1x112xf32>
    %153 = vector.broadcast %68 : vector<8x1xf32> to vector<8x112xf32>
    %154 = vector.broadcast %151 : vector<1x112xf32> to vector<8x112xf32>
    %155 = arith.mulf %153, %154 : vector<8x112xf32>
    %156 = arith.addf %146, %155 : vector<8x112xf32>
    %157 = vector.broadcast %68 : vector<8x1xf32> to vector<8x112xf32>
    %158 = vector.broadcast %152 : vector<1x112xf32> to vector<8x112xf32>
    %159 = arith.mulf %157, %158 : vector<8x112xf32>
    %160 = arith.addf %150, %159 : vector<8x112xf32>
    %c0_14 = arith.constant 0 : index
    %c0_15 = arith.constant 0 : index
    %161 = vector.load %arg2[%c0_14, %c0_15] : memref<8x1xf32, #tpu.memory_space<vmem>>, vector<8x1xf32>
    %162 = vector.broadcast %161 : vector<8x1xf32> to vector<8x112xf32>
    %163 = arith.addf %156, %162 : vector<8x112xf32>
    %164 = vector.broadcast %161 : vector<8x1xf32> to vector<8x112xf32>
    %165 = arith.addf %160, %164 : vector<8x112xf32>
    %cst_16 = arith.constant 0.000000e+00 : f32
    %166 = vector.broadcast %cst_16 : f32 to vector<8x112xf32>
    %167 = arith.cmpf oge, %163, %166 : vector<8x112xf32>
    %cst_17 = arith.constant 0.00999999977 : f32
    %168 = vector.broadcast %cst_17 : f32 to vector<8x112xf32>
    %169 = arith.mulf %168, %163 : vector<8x112xf32>
    %170 = arith.select %167, %163, %169 : vector<8x112xi1>, vector<8x112xf32>
    %cst_18 = arith.constant 0.000000e+00 : f32
    %171 = vector.broadcast %cst_18 : f32 to vector<8x112xf32>
    %172 = arith.cmpf oge, %165, %171 : vector<8x112xf32>
    %cst_19 = arith.constant 0.00999999977 : f32
    %173 = vector.broadcast %cst_19 : f32 to vector<8x112xf32>
    %174 = arith.mulf %173, %165 : vector<8x112xf32>
    %175 = arith.select %172, %165, %174 : vector<8x112xi1>, vector<8x112xf32>
    %176 = arith.addf %170, %175 : vector<8x112xf32>
    %cst_20 = arith.constant 5.000000e-01 : f32
    %177 = vector.broadcast %cst_20 : f32 to vector<8x112xf32>
    %178 = arith.mulf %176, %177 : vector<8x112xf32>
    %179 = vector.extract_strided_slice %178 {offsets = [0, 0], sizes = [8, 7], strides = [1, 1]} : vector<8x112xf32> to vector<8x7xf32>
    %180 = vector.extract_strided_slice %178 {offsets = [0, 8], sizes = [8, 7], strides = [1, 1]} : vector<8x112xf32> to vector<8x7xf32>
    %181 = vector.extract_strided_slice %178 {offsets = [0, 16], sizes = [8, 7], strides = [1, 1]} : vector<8x112xf32> to vector<8x7xf32>
    %182 = vector.extract_strided_slice %178 {offsets = [0, 24], sizes = [8, 7], strides = [1, 1]} : vector<8x112xf32> to vector<8x7xf32>
    %183 = vector.extract_strided_slice %178 {offsets = [0, 32], sizes = [8, 7], strides = [1, 1]} : vector<8x112xf32> to vector<8x7xf32>
    %184 = vector.extract_strided_slice %178 {offsets = [0, 40], sizes = [8, 7], strides = [1, 1]} : vector<8x112xf32> to vector<8x7xf32>
    %185 = vector.extract_strided_slice %178 {offsets = [0, 48], sizes = [8, 7], strides = [1, 1]} : vector<8x112xf32> to vector<8x7xf32>
    %186 = vector.extract_strided_slice %178 {offsets = [0, 56], sizes = [8, 7], strides = [1, 1]} : vector<8x112xf32> to vector<8x7xf32>
    %187 = vector.extract_strided_slice %178 {offsets = [0, 64], sizes = [8, 7], strides = [1, 1]} : vector<8x112xf32> to vector<8x7xf32>
    %188 = vector.extract_strided_slice %178 {offsets = [0, 72], sizes = [8, 7], strides = [1, 1]} : vector<8x112xf32> to vector<8x7xf32>
    %189 = vector.extract_strided_slice %178 {offsets = [0, 80], sizes = [8, 7], strides = [1, 1]} : vector<8x112xf32> to vector<8x7xf32>
    %190 = vector.extract_strided_slice %178 {offsets = [0, 88], sizes = [8, 7], strides = [1, 1]} : vector<8x112xf32> to vector<8x7xf32>
    %191 = vector.extract_strided_slice %178 {offsets = [0, 96], sizes = [8, 7], strides = [1, 1]} : vector<8x112xf32> to vector<8x7xf32>
    %192 = vector.extract_strided_slice %178 {offsets = [0, 104], sizes = [8, 7], strides = [1, 1]} : vector<8x112xf32> to vector<8x7xf32>
    %193 = tpu.concatenate %179, %180, %181, %182, %183, %184, %185, %186, %187, %188, %189, %190, %191, %192 in 1 : vector<8x7xf32>, vector<8x7xf32>, vector<8x7xf32>, vector<8x7xf32>, vector<8x7xf32>, vector<8x7xf32>, vector<8x7xf32>, vector<8x7xf32>, vector<8x7xf32>, vector<8x7xf32>, vector<8x7xf32>, vector<8x7xf32>, vector<8x7xf32>, vector<8x7xf32> -> vector<8x98xf32>
    %194 = vector.extract_strided_slice %37 {offsets = [0, 0, 0], sizes = [1, 1, 136], strides = [1, 1, 1]} : vector<2x1x136xf32> to vector<1x1x136xf32>
    %195 = vector.shape_cast %194 : vector<1x1x136xf32> to vector<1x136xf32>
    %196 = vector.extract_strided_slice %55 {offsets = [0, 0, 0], sizes = [1, 1, 136], strides = [1, 1, 1]} : vector<2x1x136xf32> to vector<1x1x136xf32>
    %197 = vector.shape_cast %196 : vector<1x1x136xf32> to vector<1x136xf32>
    %c0_21 = arith.constant 0 : index
    %c0_22 = arith.constant 0 : index
    %198 = vector.load %arg3[%c0_21, %c0_22] : memref<8x25xf32, #tpu.memory_space<vmem>>, vector<8x1xf32>
    %c0_23 = arith.constant 0 : index
    %c1_24 = arith.constant 1 : index
    %199 = vector.load %arg3[%c0_23, %c1_24] : memref<8x25xf32, #tpu.memory_space<vmem>>, vector<8x1xf32>
    %c0_25 = arith.constant 0 : index
    %c2_26 = arith.constant 2 : index
    %200 = vector.load %arg3[%c0_25, %c2_26] : memref<8x25xf32, #tpu.memory_space<vmem>>, vector<8x1xf32>
    %c0_27 = arith.constant 0 : index
    %c3_28 = arith.constant 3 : index
    %201 = vector.load %arg3[%c0_27, %c3_28] : memref<8x25xf32, #tpu.memory_space<vmem>>, vector<8x1xf32>
    %c0_29 = arith.constant 0 : index
    %c4_30 = arith.constant 4 : index
    %202 = vector.load %arg3[%c0_29, %c4_30] : memref<8x25xf32, #tpu.memory_space<vmem>>, vector<8x1xf32>
    %c0_31 = arith.constant 0 : index
    %c5_32 = arith.constant 5 : index
    %203 = vector.load %arg3[%c0_31, %c5_32] : memref<8x25xf32, #tpu.memory_space<vmem>>, vector<8x1xf32>
    %c0_33 = arith.constant 0 : index
    %c6_34 = arith.constant 6 : index
    %204 = vector.load %arg3[%c0_33, %c6_34] : memref<8x25xf32, #tpu.memory_space<vmem>>, vector<8x1xf32>
    %c0_35 = arith.constant 0 : index
    %c7_36 = arith.constant 7 : index
    %205 = vector.load %arg3[%c0_35, %c7_36] : memref<8x25xf32, #tpu.memory_space<vmem>>, vector<8x1xf32>
    %c0_37 = arith.constant 0 : index
    %c8_38 = arith.constant 8 : index
    %206 = vector.load %arg3[%c0_37, %c8_38] : memref<8x25xf32, #tpu.memory_space<vmem>>, vector<8x1xf32>
    %c0_39 = arith.constant 0 : index
    %c9 = arith.constant 9 : index
    %207 = vector.load %arg3[%c0_39, %c9] : memref<8x25xf32, #tpu.memory_space<vmem>>, vector<8x1xf32>
    %c0_40 = arith.constant 0 : index
    %c10 = arith.constant 10 : index
    %208 = vector.load %arg3[%c0_40, %c10] : memref<8x25xf32, #tpu.memory_space<vmem>>, vector<8x1xf32>
    %c0_41 = arith.constant 0 : index
    %c11 = arith.constant 11 : index
    %209 = vector.load %arg3[%c0_41, %c11] : memref<8x25xf32, #tpu.memory_space<vmem>>, vector<8x1xf32>
    %c0_42 = arith.constant 0 : index
    %c12 = arith.constant 12 : index
    %210 = vector.load %arg3[%c0_42, %c12] : memref<8x25xf32, #tpu.memory_space<vmem>>, vector<8x1xf32>
    %c0_43 = arith.constant 0 : index
    %c13 = arith.constant 13 : index
    %211 = vector.load %arg3[%c0_43, %c13] : memref<8x25xf32, #tpu.memory_space<vmem>>, vector<8x1xf32>
    %c0_44 = arith.constant 0 : index
    %c14 = arith.constant 14 : index
    %212 = vector.load %arg3[%c0_44, %c14] : memref<8x25xf32, #tpu.memory_space<vmem>>, vector<8x1xf32>
    %c0_45 = arith.constant 0 : index
    %c15 = arith.constant 15 : index
    %213 = vector.load %arg3[%c0_45, %c15] : memref<8x25xf32, #tpu.memory_space<vmem>>, vector<8x1xf32>
    %c0_46 = arith.constant 0 : index
    %c16 = arith.constant 16 : index
    %214 = vector.load %arg3[%c0_46, %c16] : memref<8x25xf32, #tpu.memory_space<vmem>>, vector<8x1xf32>
    %c0_47 = arith.constant 0 : index
    %c17 = arith.constant 17 : index
    %215 = vector.load %arg3[%c0_47, %c17] : memref<8x25xf32, #tpu.memory_space<vmem>>, vector<8x1xf32>
    %c0_48 = arith.constant 0 : index
    %c18 = arith.constant 18 : index
    %216 = vector.load %arg3[%c0_48, %c18] : memref<8x25xf32, #tpu.memory_space<vmem>>, vector<8x1xf32>
    %c0_49 = arith.constant 0 : index
    %c19 = arith.constant 19 : index
    %217 = vector.load %arg3[%c0_49, %c19] : memref<8x25xf32, #tpu.memory_space<vmem>>, vector<8x1xf32>
    %c0_50 = arith.constant 0 : index
    %c20 = arith.constant 20 : index
    %218 = vector.load %arg3[%c0_50, %c20] : memref<8x25xf32, #tpu.memory_space<vmem>>, vector<8x1xf32>
    %c0_51 = arith.constant 0 : index
    %c21 = arith.constant 21 : index
    %219 = vector.load %arg3[%c0_51, %c21] : memref<8x25xf32, #tpu.memory_space<vmem>>, vector<8x1xf32>
    %c0_52 = arith.constant 0 : index
    %c22 = arith.constant 22 : index
    %220 = vector.load %arg3[%c0_52, %c22] : memref<8x25xf32, #tpu.memory_space<vmem>>, vector<8x1xf32>
    %c0_53 = arith.constant 0 : index
    %c23 = arith.constant 23 : index
    %221 = vector.load %arg3[%c0_53, %c23] : memref<8x25xf32, #tpu.memory_space<vmem>>, vector<8x1xf32>
    %c0_54 = arith.constant 0 : index
    %c24 = arith.constant 24 : index
    %222 = vector.load %arg3[%c0_54, %c24] : memref<8x25xf32, #tpu.memory_space<vmem>>, vector<8x1xf32>
    %cst_55 = arith.constant 0.000000e+00 : f32
    %223 = vector.broadcast %cst_55 : f32 to vector<8x96xf32>
    %cst_56 = arith.constant 0.000000e+00 : f32
    %224 = vector.broadcast %cst_56 : f32 to vector<8x96xf32>
    %225 = vector.extract_strided_slice %195 {offsets = [0, 0], sizes = [1, 96], strides = [1, 1]} : vector<1x136xf32> to vector<1x96xf32>
    %226 = vector.extract_strided_slice %197 {offsets = [0, 0], sizes = [1, 96], strides = [1, 1]} : vector<1x136xf32> to vector<1x96xf32>
    %227 = vector.broadcast %198 : vector<8x1xf32> to vector<8x96xf32>
    %228 = vector.broadcast %225 : vector<1x96xf32> to vector<8x96xf32>
    %229 = arith.mulf %227, %228 : vector<8x96xf32>
    %230 = arith.addf %223, %229 : vector<8x96xf32>
    %231 = vector.broadcast %198 : vector<8x1xf32> to vector<8x96xf32>
    %232 = vector.broadcast %226 : vector<1x96xf32> to vector<8x96xf32>
    %233 = arith.mulf %231, %232 : vector<8x96xf32>
    %234 = arith.addf %224, %233 : vector<8x96xf32>
    %235 = vector.extract_strided_slice %197 {offsets = [0, 0], sizes = [1, 96], strides = [1, 1]} : vector<1x136xf32> to vector<1x96xf32>
    %236 = vector.extract_strided_slice %195 {offsets = [0, 1], sizes = [1, 96], strides = [1, 1]} : vector<1x136xf32> to vector<1x96xf32>
    %237 = vector.broadcast %199 : vector<8x1xf32> to vector<8x96xf32>
    %238 = vector.broadcast %235 : vector<1x96xf32> to vector<8x96xf32>
    %239 = arith.mulf %237, %238 : vector<8x96xf32>
    %240 = arith.addf %230, %239 : vector<8x96xf32>
    %241 = vector.broadcast %199 : vector<8x1xf32> to vector<8x96xf32>
    %242 = vector.broadcast %236 : vector<1x96xf32> to vector<8x96xf32>
    %243 = arith.mulf %241, %242 : vector<8x96xf32>
    %244 = arith.addf %234, %243 : vector<8x96xf32>
    %245 = vector.extract_strided_slice %195 {offsets = [0, 1], sizes = [1, 96], strides = [1, 1]} : vector<1x136xf32> to vector<1x96xf32>
    %246 = vector.extract_strided_slice %197 {offsets = [0, 1], sizes = [1, 96], strides = [1, 1]} : vector<1x136xf32> to vector<1x96xf32>
    %247 = vector.broadcast %200 : vector<8x1xf32> to vector<8x96xf32>
    %248 = vector.broadcast %245 : vector<1x96xf32> to vector<8x96xf32>
    %249 = arith.mulf %247, %248 : vector<8x96xf32>
    %250 = arith.addf %240, %249 : vector<8x96xf32>
    %251 = vector.broadcast %200 : vector<8x1xf32> to vector<8x96xf32>
    %252 = vector.broadcast %246 : vector<1x96xf32> to vector<8x96xf32>
    %253 = arith.mulf %251, %252 : vector<8x96xf32>
    %254 = arith.addf %244, %253 : vector<8x96xf32>
    %255 = vector.extract_strided_slice %197 {offsets = [0, 1], sizes = [1, 96], strides = [1, 1]} : vector<1x136xf32> to vector<1x96xf32>
    %256 = vector.extract_strided_slice %195 {offsets = [0, 2], sizes = [1, 96], strides = [1, 1]} : vector<1x136xf32> to vector<1x96xf32>
    %257 = vector.broadcast %201 : vector<8x1xf32> to vector<8x96xf32>
    %258 = vector.broadcast %255 : vector<1x96xf32> to vector<8x96xf32>
    %259 = arith.mulf %257, %258 : vector<8x96xf32>
    %260 = arith.addf %250, %259 : vector<8x96xf32>
    %261 = vector.broadcast %201 : vector<8x1xf32> to vector<8x96xf32>
    %262 = vector.broadcast %256 : vector<1x96xf32> to vector<8x96xf32>
    %263 = arith.mulf %261, %262 : vector<8x96xf32>
    %264 = arith.addf %254, %263 : vector<8x96xf32>
    %265 = vector.extract_strided_slice %195 {offsets = [0, 2], sizes = [1, 96], strides = [1, 1]} : vector<1x136xf32> to vector<1x96xf32>
    %266 = vector.extract_strided_slice %197 {offsets = [0, 2], sizes = [1, 96], strides = [1, 1]} : vector<1x136xf32> to vector<1x96xf32>
    %267 = vector.broadcast %202 : vector<8x1xf32> to vector<8x96xf32>
    %268 = vector.broadcast %265 : vector<1x96xf32> to vector<8x96xf32>
    %269 = arith.mulf %267, %268 : vector<8x96xf32>
    %270 = arith.addf %260, %269 : vector<8x96xf32>
    %271 = vector.broadcast %202 : vector<8x1xf32> to vector<8x96xf32>
    %272 = vector.broadcast %266 : vector<1x96xf32> to vector<8x96xf32>
    %273 = arith.mulf %271, %272 : vector<8x96xf32>
    %274 = arith.addf %264, %273 : vector<8x96xf32>
    %275 = vector.extract_strided_slice %195 {offsets = [0, 8], sizes = [1, 96], strides = [1, 1]} : vector<1x136xf32> to vector<1x96xf32>
    %276 = vector.extract_strided_slice %197 {offsets = [0, 8], sizes = [1, 96], strides = [1, 1]} : vector<1x136xf32> to vector<1x96xf32>
    %277 = vector.broadcast %203 : vector<8x1xf32> to vector<8x96xf32>
    %278 = vector.broadcast %275 : vector<1x96xf32> to vector<8x96xf32>
    %279 = arith.mulf %277, %278 : vector<8x96xf32>
    %280 = arith.addf %270, %279 : vector<8x96xf32>
    %281 = vector.broadcast %203 : vector<8x1xf32> to vector<8x96xf32>
    %282 = vector.broadcast %276 : vector<1x96xf32> to vector<8x96xf32>
    %283 = arith.mulf %281, %282 : vector<8x96xf32>
    %284 = arith.addf %274, %283 : vector<8x96xf32>
    %285 = vector.extract_strided_slice %197 {offsets = [0, 8], sizes = [1, 96], strides = [1, 1]} : vector<1x136xf32> to vector<1x96xf32>
    %286 = vector.extract_strided_slice %195 {offsets = [0, 9], sizes = [1, 96], strides = [1, 1]} : vector<1x136xf32> to vector<1x96xf32>
    %287 = vector.broadcast %204 : vector<8x1xf32> to vector<8x96xf32>
    %288 = vector.broadcast %285 : vector<1x96xf32> to vector<8x96xf32>
    %289 = arith.mulf %287, %288 : vector<8x96xf32>
    %290 = arith.addf %280, %289 : vector<8x96xf32>
    %291 = vector.broadcast %204 : vector<8x1xf32> to vector<8x96xf32>
    %292 = vector.broadcast %286 : vector<1x96xf32> to vector<8x96xf32>
    %293 = arith.mulf %291, %292 : vector<8x96xf32>
    %294 = arith.addf %284, %293 : vector<8x96xf32>
    %295 = vector.extract_strided_slice %195 {offsets = [0, 9], sizes = [1, 96], strides = [1, 1]} : vector<1x136xf32> to vector<1x96xf32>
    %296 = vector.extract_strided_slice %197 {offsets = [0, 9], sizes = [1, 96], strides = [1, 1]} : vector<1x136xf32> to vector<1x96xf32>
    %297 = vector.broadcast %205 : vector<8x1xf32> to vector<8x96xf32>
    %298 = vector.broadcast %295 : vector<1x96xf32> to vector<8x96xf32>
    %299 = arith.mulf %297, %298 : vector<8x96xf32>
    %300 = arith.addf %290, %299 : vector<8x96xf32>
    %301 = vector.broadcast %205 : vector<8x1xf32> to vector<8x96xf32>
    %302 = vector.broadcast %296 : vector<1x96xf32> to vector<8x96xf32>
    %303 = arith.mulf %301, %302 : vector<8x96xf32>
    %304 = arith.addf %294, %303 : vector<8x96xf32>
    %305 = vector.extract_strided_slice %197 {offsets = [0, 9], sizes = [1, 96], strides = [1, 1]} : vector<1x136xf32> to vector<1x96xf32>
    %306 = vector.extract_strided_slice %195 {offsets = [0, 10], sizes = [1, 96], strides = [1, 1]} : vector<1x136xf32> to vector<1x96xf32>
    %307 = vector.broadcast %206 : vector<8x1xf32> to vector<8x96xf32>
    %308 = vector.broadcast %305 : vector<1x96xf32> to vector<8x96xf32>
    %309 = arith.mulf %307, %308 : vector<8x96xf32>
    %310 = arith.addf %300, %309 : vector<8x96xf32>
    %311 = vector.broadcast %206 : vector<8x1xf32> to vector<8x96xf32>
    %312 = vector.broadcast %306 : vector<1x96xf32> to vector<8x96xf32>
    %313 = arith.mulf %311, %312 : vector<8x96xf32>
    %314 = arith.addf %304, %313 : vector<8x96xf32>
    %315 = vector.extract_strided_slice %195 {offsets = [0, 10], sizes = [1, 96], strides = [1, 1]} : vector<1x136xf32> to vector<1x96xf32>
    %316 = vector.extract_strided_slice %197 {offsets = [0, 10], sizes = [1, 96], strides = [1, 1]} : vector<1x136xf32> to vector<1x96xf32>
    %317 = vector.broadcast %207 : vector<8x1xf32> to vector<8x96xf32>
    %318 = vector.broadcast %315 : vector<1x96xf32> to vector<8x96xf32>
    %319 = arith.mulf %317, %318 : vector<8x96xf32>
    %320 = arith.addf %310, %319 : vector<8x96xf32>
    %321 = vector.broadcast %207 : vector<8x1xf32> to vector<8x96xf32>
    %322 = vector.broadcast %316 : vector<1x96xf32> to vector<8x96xf32>
    %323 = arith.mulf %321, %322 : vector<8x96xf32>
    %324 = arith.addf %314, %323 : vector<8x96xf32>
    %325 = vector.extract_strided_slice %195 {offsets = [0, 16], sizes = [1, 96], strides = [1, 1]} : vector<1x136xf32> to vector<1x96xf32>
    %326 = vector.extract_strided_slice %197 {offsets = [0, 16], sizes = [1, 96], strides = [1, 1]} : vector<1x136xf32> to vector<1x96xf32>
    %327 = vector.broadcast %208 : vector<8x1xf32> to vector<8x96xf32>
    %328 = vector.broadcast %325 : vector<1x96xf32> to vector<8x96xf32>
    %329 = arith.mulf %327, %328 : vector<8x96xf32>
    %330 = arith.addf %320, %329 : vector<8x96xf32>
    %331 = vector.broadcast %208 : vector<8x1xf32> to vector<8x96xf32>
    %332 = vector.broadcast %326 : vector<1x96xf32> to vector<8x96xf32>
    %333 = arith.mulf %331, %332 : vector<8x96xf32>
    %334 = arith.addf %324, %333 : vector<8x96xf32>
    %335 = vector.extract_strided_slice %197 {offsets = [0, 16], sizes = [1, 96], strides = [1, 1]} : vector<1x136xf32> to vector<1x96xf32>
    %336 = vector.extract_strided_slice %195 {offsets = [0, 17], sizes = [1, 96], strides = [1, 1]} : vector<1x136xf32> to vector<1x96xf32>
    %337 = vector.broadcast %209 : vector<8x1xf32> to vector<8x96xf32>
    %338 = vector.broadcast %335 : vector<1x96xf32> to vector<8x96xf32>
    %339 = arith.mulf %337, %338 : vector<8x96xf32>
    %340 = arith.addf %330, %339 : vector<8x96xf32>
    %341 = vector.broadcast %209 : vector<8x1xf32> to vector<8x96xf32>
    %342 = vector.broadcast %336 : vector<1x96xf32> to vector<8x96xf32>
    %343 = arith.mulf %341, %342 : vector<8x96xf32>
    %344 = arith.addf %334, %343 : vector<8x96xf32>
    %345 = vector.extract_strided_slice %195 {offsets = [0, 17], sizes = [1, 96], strides = [1, 1]} : vector<1x136xf32> to vector<1x96xf32>
    %346 = vector.extract_strided_slice %197 {offsets = [0, 17], sizes = [1, 96], strides = [1, 1]} : vector<1x136xf32> to vector<1x96xf32>
    %347 = vector.broadcast %210 : vector<8x1xf32> to vector<8x96xf32>
    %348 = vector.broadcast %345 : vector<1x96xf32> to vector<8x96xf32>
    %349 = arith.mulf %347, %348 : vector<8x96xf32>
    %350 = arith.addf %340, %349 : vector<8x96xf32>
    %351 = vector.broadcast %210 : vector<8x1xf32> to vector<8x96xf32>
    %352 = vector.broadcast %346 : vector<1x96xf32> to vector<8x96xf32>
    %353 = arith.mulf %351, %352 : vector<8x96xf32>
    %354 = arith.addf %344, %353 : vector<8x96xf32>
    %355 = vector.extract_strided_slice %197 {offsets = [0, 17], sizes = [1, 96], strides = [1, 1]} : vector<1x136xf32> to vector<1x96xf32>
    %356 = vector.extract_strided_slice %195 {offsets = [0, 18], sizes = [1, 96], strides = [1, 1]} : vector<1x136xf32> to vector<1x96xf32>
    %357 = vector.broadcast %211 : vector<8x1xf32> to vector<8x96xf32>
    %358 = vector.broadcast %355 : vector<1x96xf32> to vector<8x96xf32>
    %359 = arith.mulf %357, %358 : vector<8x96xf32>
    %360 = arith.addf %350, %359 : vector<8x96xf32>
    %361 = vector.broadcast %211 : vector<8x1xf32> to vector<8x96xf32>
    %362 = vector.broadcast %356 : vector<1x96xf32> to vector<8x96xf32>
    %363 = arith.mulf %361, %362 : vector<8x96xf32>
    %364 = arith.addf %354, %363 : vector<8x96xf32>
    %365 = vector.extract_strided_slice %195 {offsets = [0, 18], sizes = [1, 96], strides = [1, 1]} : vector<1x136xf32> to vector<1x96xf32>
    %366 = vector.extract_strided_slice %197 {offsets = [0, 18], sizes = [1, 96], strides = [1, 1]} : vector<1x136xf32> to vector<1x96xf32>
    %367 = vector.broadcast %212 : vector<8x1xf32> to vector<8x96xf32>
    %368 = vector.broadcast %365 : vector<1x96xf32> to vector<8x96xf32>
    %369 = arith.mulf %367, %368 : vector<8x96xf32>
    %370 = arith.addf %360, %369 : vector<8x96xf32>
    %371 = vector.broadcast %212 : vector<8x1xf32> to vector<8x96xf32>
    %372 = vector.broadcast %366 : vector<1x96xf32> to vector<8x96xf32>
    %373 = arith.mulf %371, %372 : vector<8x96xf32>
    %374 = arith.addf %364, %373 : vector<8x96xf32>
    %375 = vector.extract_strided_slice %195 {offsets = [0, 24], sizes = [1, 96], strides = [1, 1]} : vector<1x136xf32> to vector<1x96xf32>
    %376 = vector.extract_strided_slice %197 {offsets = [0, 24], sizes = [1, 96], strides = [1, 1]} : vector<1x136xf32> to vector<1x96xf32>
    %377 = vector.broadcast %213 : vector<8x1xf32> to vector<8x96xf32>
    %378 = vector.broadcast %375 : vector<1x96xf32> to vector<8x96xf32>
    %379 = arith.mulf %377, %378 : vector<8x96xf32>
    %380 = arith.addf %370, %379 : vector<8x96xf32>
    %381 = vector.broadcast %213 : vector<8x1xf32> to vector<8x96xf32>
    %382 = vector.broadcast %376 : vector<1x96xf32> to vector<8x96xf32>
    %383 = arith.mulf %381, %382 : vector<8x96xf32>
    %384 = arith.addf %374, %383 : vector<8x96xf32>
    %385 = vector.extract_strided_slice %197 {offsets = [0, 24], sizes = [1, 96], strides = [1, 1]} : vector<1x136xf32> to vector<1x96xf32>
    %386 = vector.extract_strided_slice %195 {offsets = [0, 25], sizes = [1, 96], strides = [1, 1]} : vector<1x136xf32> to vector<1x96xf32>
    %387 = vector.broadcast %214 : vector<8x1xf32> to vector<8x96xf32>
    %388 = vector.broadcast %385 : vector<1x96xf32> to vector<8x96xf32>
    %389 = arith.mulf %387, %388 : vector<8x96xf32>
    %390 = arith.addf %380, %389 : vector<8x96xf32>
    %391 = vector.broadcast %214 : vector<8x1xf32> to vector<8x96xf32>
    %392 = vector.broadcast %386 : vector<1x96xf32> to vector<8x96xf32>
    %393 = arith.mulf %391, %392 : vector<8x96xf32>
    %394 = arith.addf %384, %393 : vector<8x96xf32>
    %395 = vector.extract_strided_slice %195 {offsets = [0, 25], sizes = [1, 96], strides = [1, 1]} : vector<1x136xf32> to vector<1x96xf32>
    %396 = vector.extract_strided_slice %197 {offsets = [0, 25], sizes = [1, 96], strides = [1, 1]} : vector<1x136xf32> to vector<1x96xf32>
    %397 = vector.broadcast %215 : vector<8x1xf32> to vector<8x96xf32>
    %398 = vector.broadcast %395 : vector<1x96xf32> to vector<8x96xf32>
    %399 = arith.mulf %397, %398 : vector<8x96xf32>
    %400 = arith.addf %390, %399 : vector<8x96xf32>
    %401 = vector.broadcast %215 : vector<8x1xf32> to vector<8x96xf32>
    %402 = vector.broadcast %396 : vector<1x96xf32> to vector<8x96xf32>
    %403 = arith.mulf %401, %402 : vector<8x96xf32>
    %404 = arith.addf %394, %403 : vector<8x96xf32>
    %405 = vector.extract_strided_slice %197 {offsets = [0, 25], sizes = [1, 96], strides = [1, 1]} : vector<1x136xf32> to vector<1x96xf32>
    %406 = vector.extract_strided_slice %195 {offsets = [0, 26], sizes = [1, 96], strides = [1, 1]} : vector<1x136xf32> to vector<1x96xf32>
    %407 = vector.broadcast %216 : vector<8x1xf32> to vector<8x96xf32>
    %408 = vector.broadcast %405 : vector<1x96xf32> to vector<8x96xf32>
    %409 = arith.mulf %407, %408 : vector<8x96xf32>
    %410 = arith.addf %400, %409 : vector<8x96xf32>
    %411 = vector.broadcast %216 : vector<8x1xf32> to vector<8x96xf32>
    %412 = vector.broadcast %406 : vector<1x96xf32> to vector<8x96xf32>
    %413 = arith.mulf %411, %412 : vector<8x96xf32>
    %414 = arith.addf %404, %413 : vector<8x96xf32>
    %415 = vector.extract_strided_slice %195 {offsets = [0, 26], sizes = [1, 96], strides = [1, 1]} : vector<1x136xf32> to vector<1x96xf32>
    %416 = vector.extract_strided_slice %197 {offsets = [0, 26], sizes = [1, 96], strides = [1, 1]} : vector<1x136xf32> to vector<1x96xf32>
    %417 = vector.broadcast %217 : vector<8x1xf32> to vector<8x96xf32>
    %418 = vector.broadcast %415 : vector<1x96xf32> to vector<8x96xf32>
    %419 = arith.mulf %417, %418 : vector<8x96xf32>
    %420 = arith.addf %410, %419 : vector<8x96xf32>
    %421 = vector.broadcast %217 : vector<8x1xf32> to vector<8x96xf32>
    %422 = vector.broadcast %416 : vector<1x96xf32> to vector<8x96xf32>
    %423 = arith.mulf %421, %422 : vector<8x96xf32>
    %424 = arith.addf %414, %423 : vector<8x96xf32>
    %425 = vector.extract_strided_slice %195 {offsets = [0, 32], sizes = [1, 96], strides = [1, 1]} : vector<1x136xf32> to vector<1x96xf32>
    %426 = vector.extract_strided_slice %197 {offsets = [0, 32], sizes = [1, 96], strides = [1, 1]} : vector<1x136xf32> to vector<1x96xf32>
    %427 = vector.broadcast %218 : vector<8x1xf32> to vector<8x96xf32>
    %428 = vector.broadcast %425 : vector<1x96xf32> to vector<8x96xf32>
    %429 = arith.mulf %427, %428 : vector<8x96xf32>
    %430 = arith.addf %420, %429 : vector<8x96xf32>
    %431 = vector.broadcast %218 : vector<8x1xf32> to vector<8x96xf32>
    %432 = vector.broadcast %426 : vector<1x96xf32> to vector<8x96xf32>
    %433 = arith.mulf %431, %432 : vector<8x96xf32>
    %434 = arith.addf %424, %433 : vector<8x96xf32>
    %435 = vector.extract_strided_slice %197 {offsets = [0, 32], sizes = [1, 96], strides = [1, 1]} : vector<1x136xf32> to vector<1x96xf32>
    %436 = vector.extract_strided_slice %195 {offsets = [0, 33], sizes = [1, 96], strides = [1, 1]} : vector<1x136xf32> to vector<1x96xf32>
    %437 = vector.broadcast %219 : vector<8x1xf32> to vector<8x96xf32>
    %438 = vector.broadcast %435 : vector<1x96xf32> to vector<8x96xf32>
    %439 = arith.mulf %437, %438 : vector<8x96xf32>
    %440 = arith.addf %430, %439 : vector<8x96xf32>
    %441 = vector.broadcast %219 : vector<8x1xf32> to vector<8x96xf32>
    %442 = vector.broadcast %436 : vector<1x96xf32> to vector<8x96xf32>
    %443 = arith.mulf %441, %442 : vector<8x96xf32>
    %444 = arith.addf %434, %443 : vector<8x96xf32>
    %445 = vector.extract_strided_slice %195 {offsets = [0, 33], sizes = [1, 96], strides = [1, 1]} : vector<1x136xf32> to vector<1x96xf32>
    %446 = vector.extract_strided_slice %197 {offsets = [0, 33], sizes = [1, 96], strides = [1, 1]} : vector<1x136xf32> to vector<1x96xf32>
    %447 = vector.broadcast %220 : vector<8x1xf32> to vector<8x96xf32>
    %448 = vector.broadcast %445 : vector<1x96xf32> to vector<8x96xf32>
    %449 = arith.mulf %447, %448 : vector<8x96xf32>
    %450 = arith.addf %440, %449 : vector<8x96xf32>
    %451 = vector.broadcast %220 : vector<8x1xf32> to vector<8x96xf32>
    %452 = vector.broadcast %446 : vector<1x96xf32> to vector<8x96xf32>
    %453 = arith.mulf %451, %452 : vector<8x96xf32>
    %454 = arith.addf %444, %453 : vector<8x96xf32>
    %455 = vector.extract_strided_slice %197 {offsets = [0, 33], sizes = [1, 96], strides = [1, 1]} : vector<1x136xf32> to vector<1x96xf32>
    %456 = vector.extract_strided_slice %195 {offsets = [0, 34], sizes = [1, 96], strides = [1, 1]} : vector<1x136xf32> to vector<1x96xf32>
    %457 = vector.broadcast %221 : vector<8x1xf32> to vector<8x96xf32>
    %458 = vector.broadcast %455 : vector<1x96xf32> to vector<8x96xf32>
    %459 = arith.mulf %457, %458 : vector<8x96xf32>
    %460 = arith.addf %450, %459 : vector<8x96xf32>
    %461 = vector.broadcast %221 : vector<8x1xf32> to vector<8x96xf32>
    %462 = vector.broadcast %456 : vector<1x96xf32> to vector<8x96xf32>
    %463 = arith.mulf %461, %462 : vector<8x96xf32>
    %464 = arith.addf %454, %463 : vector<8x96xf32>
    %465 = vector.extract_strided_slice %195 {offsets = [0, 34], sizes = [1, 96], strides = [1, 1]} : vector<1x136xf32> to vector<1x96xf32>
    %466 = vector.extract_strided_slice %197 {offsets = [0, 34], sizes = [1, 96], strides = [1, 1]} : vector<1x136xf32> to vector<1x96xf32>
    %467 = vector.broadcast %222 : vector<8x1xf32> to vector<8x96xf32>
    %468 = vector.broadcast %465 : vector<1x96xf32> to vector<8x96xf32>
    %469 = arith.mulf %467, %468 : vector<8x96xf32>
    %470 = arith.addf %460, %469 : vector<8x96xf32>
    %471 = vector.broadcast %222 : vector<8x1xf32> to vector<8x96xf32>
    %472 = vector.broadcast %466 : vector<1x96xf32> to vector<8x96xf32>
    %473 = arith.mulf %471, %472 : vector<8x96xf32>
    %474 = arith.addf %464, %473 : vector<8x96xf32>
    %c0_57 = arith.constant 0 : index
    %c0_58 = arith.constant 0 : index
    %475 = vector.load %arg4[%c0_57, %c0_58] : memref<8x1xf32, #tpu.memory_space<vmem>>, vector<8x1xf32>
    %476 = vector.broadcast %475 : vector<8x1xf32> to vector<8x96xf32>
    %477 = arith.addf %470, %476 : vector<8x96xf32>
    %478 = vector.broadcast %475 : vector<8x1xf32> to vector<8x96xf32>
    %479 = arith.addf %474, %478 : vector<8x96xf32>
    %cst_59 = arith.constant 0.000000e+00 : f32
    %480 = vector.broadcast %cst_59 : f32 to vector<8x96xf32>
    %481 = arith.cmpf oge, %477, %480 : vector<8x96xf32>
    %cst_60 = arith.constant 0.00999999977 : f32
    %482 = vector.broadcast %cst_60 : f32 to vector<8x96xf32>
    %483 = arith.mulf %482, %477 : vector<8x96xf32>
    %484 = arith.select %481, %477, %483 : vector<8x96xi1>, vector<8x96xf32>
    %cst_61 = arith.constant 0.000000e+00 : f32
    %485 = vector.broadcast %cst_61 : f32 to vector<8x96xf32>
    %486 = arith.cmpf oge, %479, %485 : vector<8x96xf32>
    %cst_62 = arith.constant 0.00999999977 : f32
    %487 = vector.broadcast %cst_62 : f32 to vector<8x96xf32>
    %488 = arith.mulf %487, %479 : vector<8x96xf32>
    %489 = arith.select %486, %479, %488 : vector<8x96xi1>, vector<8x96xf32>
    %490 = arith.addf %484, %489 : vector<8x96xf32>
    %cst_63 = arith.constant 5.000000e-01 : f32
    %491 = vector.broadcast %cst_63 : f32 to vector<8x96xf32>
    %492 = arith.mulf %490, %491 : vector<8x96xf32>
    %493 = vector.extract_strided_slice %492 {offsets = [0, 0], sizes = [8, 6], strides = [1, 1]} : vector<8x96xf32> to vector<8x6xf32>
    %494 = vector.extract_strided_slice %492 {offsets = [0, 8], sizes = [8, 6], strides = [1, 1]} : vector<8x96xf32> to vector<8x6xf32>
    %495 = vector.extract_strided_slice %492 {offsets = [0, 16], sizes = [8, 6], strides = [1, 1]} : vector<8x96xf32> to vector<8x6xf32>
    %496 = vector.extract_strided_slice %492 {offsets = [0, 24], sizes = [8, 6], strides = [1, 1]} : vector<8x96xf32> to vector<8x6xf32>
    %497 = vector.extract_strided_slice %492 {offsets = [0, 32], sizes = [8, 6], strides = [1, 1]} : vector<8x96xf32> to vector<8x6xf32>
    %498 = vector.extract_strided_slice %492 {offsets = [0, 40], sizes = [8, 6], strides = [1, 1]} : vector<8x96xf32> to vector<8x6xf32>
    %499 = vector.extract_strided_slice %492 {offsets = [0, 48], sizes = [8, 6], strides = [1, 1]} : vector<8x96xf32> to vector<8x6xf32>
    %500 = vector.extract_strided_slice %492 {offsets = [0, 56], sizes = [8, 6], strides = [1, 1]} : vector<8x96xf32> to vector<8x6xf32>
    %501 = vector.extract_strided_slice %492 {offsets = [0, 64], sizes = [8, 6], strides = [1, 1]} : vector<8x96xf32> to vector<8x6xf32>
    %502 = vector.extract_strided_slice %492 {offsets = [0, 72], sizes = [8, 6], strides = [1, 1]} : vector<8x96xf32> to vector<8x6xf32>
    %503 = vector.extract_strided_slice %492 {offsets = [0, 80], sizes = [8, 6], strides = [1, 1]} : vector<8x96xf32> to vector<8x6xf32>
    %504 = vector.extract_strided_slice %492 {offsets = [0, 88], sizes = [8, 6], strides = [1, 1]} : vector<8x96xf32> to vector<8x6xf32>
    %505 = tpu.concatenate %493, %494, %495, %496, %497, %498, %499, %500, %501, %502, %503, %504 in 1 : vector<8x6xf32>, vector<8x6xf32>, vector<8x6xf32>, vector<8x6xf32>, vector<8x6xf32>, vector<8x6xf32>, vector<8x6xf32>, vector<8x6xf32>, vector<8x6xf32>, vector<8x6xf32>, vector<8x6xf32>, vector<8x6xf32> -> vector<8x72xf32>
    %506 = tpu.concatenate %193, %505 in 1 : vector<8x98xf32>, vector<8x72xf32> -> vector<8x170xf32>
    %507 = vector.extract_strided_slice %37 {offsets = [1, 0, 0], sizes = [1, 1, 136], strides = [1, 1, 1]} : vector<2x1x136xf32> to vector<1x1x136xf32>
    %508 = vector.shape_cast %507 : vector<1x1x136xf32> to vector<1x136xf32>
    %509 = vector.extract_strided_slice %55 {offsets = [1, 0, 0], sizes = [1, 1, 136], strides = [1, 1, 1]} : vector<2x1x136xf32> to vector<1x1x136xf32>
    %510 = vector.shape_cast %509 : vector<1x1x136xf32> to vector<1x136xf32>
    %c0_64 = arith.constant 0 : index
    %c0_65 = arith.constant 0 : index
    %511 = vector.load %arg1[%c0_64, %c0_65] : memref<8x9xf32, #tpu.memory_space<vmem>>, vector<8x1xf32>
    %c0_66 = arith.constant 0 : index
    %c1_67 = arith.constant 1 : index
    %512 = vector.load %arg1[%c0_66, %c1_67] : memref<8x9xf32, #tpu.memory_space<vmem>>, vector<8x1xf32>
    %c0_68 = arith.constant 0 : index
    %c2_69 = arith.constant 2 : index
    %513 = vector.load %arg1[%c0_68, %c2_69] : memref<8x9xf32, #tpu.memory_space<vmem>>, vector<8x1xf32>
    %c0_70 = arith.constant 0 : index
    %c3_71 = arith.constant 3 : index
    %514 = vector.load %arg1[%c0_70, %c3_71] : memref<8x9xf32, #tpu.memory_space<vmem>>, vector<8x1xf32>
    %c0_72 = arith.constant 0 : index
    %c4_73 = arith.constant 4 : index
    %515 = vector.load %arg1[%c0_72, %c4_73] : memref<8x9xf32, #tpu.memory_space<vmem>>, vector<8x1xf32>
    %c0_74 = arith.constant 0 : index
    %c5_75 = arith.constant 5 : index
    %516 = vector.load %arg1[%c0_74, %c5_75] : memref<8x9xf32, #tpu.memory_space<vmem>>, vector<8x1xf32>
    %c0_76 = arith.constant 0 : index
    %c6_77 = arith.constant 6 : index
    %517 = vector.load %arg1[%c0_76, %c6_77] : memref<8x9xf32, #tpu.memory_space<vmem>>, vector<8x1xf32>
    %c0_78 = arith.constant 0 : index
    %c7_79 = arith.constant 7 : index
    %518 = vector.load %arg1[%c0_78, %c7_79] : memref<8x9xf32, #tpu.memory_space<vmem>>, vector<8x1xf32>
    %c0_80 = arith.constant 0 : index
    %c8_81 = arith.constant 8 : index
    %519 = vector.load %arg1[%c0_80, %c8_81] : memref<8x9xf32, #tpu.memory_space<vmem>>, vector<8x1xf32>
    %cst_82 = arith.constant 0.000000e+00 : f32
    %520 = vector.broadcast %cst_82 : f32 to vector<8x112xf32>
    %cst_83 = arith.constant 0.000000e+00 : f32
    %521 = vector.broadcast %cst_83 : f32 to vector<8x112xf32>
    %522 = vector.extract_strided_slice %508 {offsets = [0, 0], sizes = [1, 112], strides = [1, 1]} : vector<1x136xf32> to vector<1x112xf32>
    %523 = vector.extract_strided_slice %510 {offsets = [0, 0], sizes = [1, 112], strides = [1, 1]} : vector<1x136xf32> to vector<1x112xf32>
    %524 = vector.broadcast %511 : vector<8x1xf32> to vector<8x112xf32>
    %525 = vector.broadcast %522 : vector<1x112xf32> to vector<8x112xf32>
    %526 = arith.mulf %524, %525 : vector<8x112xf32>
    %527 = arith.addf %520, %526 : vector<8x112xf32>
    %528 = vector.broadcast %511 : vector<8x1xf32> to vector<8x112xf32>
    %529 = vector.broadcast %523 : vector<1x112xf32> to vector<8x112xf32>
    %530 = arith.mulf %528, %529 : vector<8x112xf32>
    %531 = arith.addf %521, %530 : vector<8x112xf32>
    %532 = vector.extract_strided_slice %510 {offsets = [0, 0], sizes = [1, 112], strides = [1, 1]} : vector<1x136xf32> to vector<1x112xf32>
    %533 = vector.extract_strided_slice %508 {offsets = [0, 1], sizes = [1, 112], strides = [1, 1]} : vector<1x136xf32> to vector<1x112xf32>
    %534 = vector.broadcast %512 : vector<8x1xf32> to vector<8x112xf32>
    %535 = vector.broadcast %532 : vector<1x112xf32> to vector<8x112xf32>
    %536 = arith.mulf %534, %535 : vector<8x112xf32>
    %537 = arith.addf %527, %536 : vector<8x112xf32>
    %538 = vector.broadcast %512 : vector<8x1xf32> to vector<8x112xf32>
    %539 = vector.broadcast %533 : vector<1x112xf32> to vector<8x112xf32>
    %540 = arith.mulf %538, %539 : vector<8x112xf32>
    %541 = arith.addf %531, %540 : vector<8x112xf32>
    %542 = vector.extract_strided_slice %508 {offsets = [0, 1], sizes = [1, 112], strides = [1, 1]} : vector<1x136xf32> to vector<1x112xf32>
    %543 = vector.extract_strided_slice %510 {offsets = [0, 1], sizes = [1, 112], strides = [1, 1]} : vector<1x136xf32> to vector<1x112xf32>
    %544 = vector.broadcast %513 : vector<8x1xf32> to vector<8x112xf32>
    %545 = vector.broadcast %542 : vector<1x112xf32> to vector<8x112xf32>
    %546 = arith.mulf %544, %545 : vector<8x112xf32>
    %547 = arith.addf %537, %546 : vector<8x112xf32>
    %548 = vector.broadcast %513 : vector<8x1xf32> to vector<8x112xf32>
    %549 = vector.broadcast %543 : vector<1x112xf32> to vector<8x112xf32>
    %550 = arith.mulf %548, %549 : vector<8x112xf32>
    %551 = arith.addf %541, %550 : vector<8x112xf32>
    %552 = vector.extract_strided_slice %508 {offsets = [0, 8], sizes = [1, 112], strides = [1, 1]} : vector<1x136xf32> to vector<1x112xf32>
    %553 = vector.extract_strided_slice %510 {offsets = [0, 8], sizes = [1, 112], strides = [1, 1]} : vector<1x136xf32> to vector<1x112xf32>
    %554 = vector.broadcast %514 : vector<8x1xf32> to vector<8x112xf32>
    %555 = vector.broadcast %552 : vector<1x112xf32> to vector<8x112xf32>
    %556 = arith.mulf %554, %555 : vector<8x112xf32>
    %557 = arith.addf %547, %556 : vector<8x112xf32>
    %558 = vector.broadcast %514 : vector<8x1xf32> to vector<8x112xf32>
    %559 = vector.broadcast %553 : vector<1x112xf32> to vector<8x112xf32>
    %560 = arith.mulf %558, %559 : vector<8x112xf32>
    %561 = arith.addf %551, %560 : vector<8x112xf32>
    %562 = vector.extract_strided_slice %510 {offsets = [0, 8], sizes = [1, 112], strides = [1, 1]} : vector<1x136xf32> to vector<1x112xf32>
    %563 = vector.extract_strided_slice %508 {offsets = [0, 9], sizes = [1, 112], strides = [1, 1]} : vector<1x136xf32> to vector<1x112xf32>
    %564 = vector.broadcast %515 : vector<8x1xf32> to vector<8x112xf32>
    %565 = vector.broadcast %562 : vector<1x112xf32> to vector<8x112xf32>
    %566 = arith.mulf %564, %565 : vector<8x112xf32>
    %567 = arith.addf %557, %566 : vector<8x112xf32>
    %568 = vector.broadcast %515 : vector<8x1xf32> to vector<8x112xf32>
    %569 = vector.broadcast %563 : vector<1x112xf32> to vector<8x112xf32>
    %570 = arith.mulf %568, %569 : vector<8x112xf32>
    %571 = arith.addf %561, %570 : vector<8x112xf32>
    %572 = vector.extract_strided_slice %508 {offsets = [0, 9], sizes = [1, 112], strides = [1, 1]} : vector<1x136xf32> to vector<1x112xf32>
    %573 = vector.extract_strided_slice %510 {offsets = [0, 9], sizes = [1, 112], strides = [1, 1]} : vector<1x136xf32> to vector<1x112xf32>
    %574 = vector.broadcast %516 : vector<8x1xf32> to vector<8x112xf32>
    %575 = vector.broadcast %572 : vector<1x112xf32> to vector<8x112xf32>
    %576 = arith.mulf %574, %575 : vector<8x112xf32>
    %577 = arith.addf %567, %576 : vector<8x112xf32>
    %578 = vector.broadcast %516 : vector<8x1xf32> to vector<8x112xf32>
    %579 = vector.broadcast %573 : vector<1x112xf32> to vector<8x112xf32>
    %580 = arith.mulf %578, %579 : vector<8x112xf32>
    %581 = arith.addf %571, %580 : vector<8x112xf32>
    %582 = vector.extract_strided_slice %508 {offsets = [0, 16], sizes = [1, 112], strides = [1, 1]} : vector<1x136xf32> to vector<1x112xf32>
    %583 = vector.extract_strided_slice %510 {offsets = [0, 16], sizes = [1, 112], strides = [1, 1]} : vector<1x136xf32> to vector<1x112xf32>
    %584 = vector.broadcast %517 : vector<8x1xf32> to vector<8x112xf32>
    %585 = vector.broadcast %582 : vector<1x112xf32> to vector<8x112xf32>
    %586 = arith.mulf %584, %585 : vector<8x112xf32>
    %587 = arith.addf %577, %586 : vector<8x112xf32>
    %588 = vector.broadcast %517 : vector<8x1xf32> to vector<8x112xf32>
    %589 = vector.broadcast %583 : vector<1x112xf32> to vector<8x112xf32>
    %590 = arith.mulf %588, %589 : vector<8x112xf32>
    %591 = arith.addf %581, %590 : vector<8x112xf32>
    %592 = vector.extract_strided_slice %510 {offsets = [0, 16], sizes = [1, 112], strides = [1, 1]} : vector<1x136xf32> to vector<1x112xf32>
    %593 = vector.extract_strided_slice %508 {offsets = [0, 17], sizes = [1, 112], strides = [1, 1]} : vector<1x136xf32> to vector<1x112xf32>
    %594 = vector.broadcast %518 : vector<8x1xf32> to vector<8x112xf32>
    %595 = vector.broadcast %592 : vector<1x112xf32> to vector<8x112xf32>
    %596 = arith.mulf %594, %595 : vector<8x112xf32>
    %597 = arith.addf %587, %596 : vector<8x112xf32>
    %598 = vector.broadcast %518 : vector<8x1xf32> to vector<8x112xf32>
    %599 = vector.broadcast %593 : vector<1x112xf32> to vector<8x112xf32>
    %600 = arith.mulf %598, %599 : vector<8x112xf32>
    %601 = arith.addf %591, %600 : vector<8x112xf32>
    %602 = vector.extract_strided_slice %508 {offsets = [0, 17], sizes = [1, 112], strides = [1, 1]} : vector<1x136xf32> to vector<1x112xf32>
    %603 = vector.extract_strided_slice %510 {offsets = [0, 17], sizes = [1, 112], strides = [1, 1]} : vector<1x136xf32> to vector<1x112xf32>
    %604 = vector.broadcast %519 : vector<8x1xf32> to vector<8x112xf32>
    %605 = vector.broadcast %602 : vector<1x112xf32> to vector<8x112xf32>
    %606 = arith.mulf %604, %605 : vector<8x112xf32>
    %607 = arith.addf %597, %606 : vector<8x112xf32>
    %608 = vector.broadcast %519 : vector<8x1xf32> to vector<8x112xf32>
    %609 = vector.broadcast %603 : vector<1x112xf32> to vector<8x112xf32>
    %610 = arith.mulf %608, %609 : vector<8x112xf32>
    %611 = arith.addf %601, %610 : vector<8x112xf32>
    %c0_84 = arith.constant 0 : index
    %c0_85 = arith.constant 0 : index
    %612 = vector.load %arg2[%c0_84, %c0_85] : memref<8x1xf32, #tpu.memory_space<vmem>>, vector<8x1xf32>
    %613 = vector.broadcast %612 : vector<8x1xf32> to vector<8x112xf32>
    %614 = arith.addf %607, %613 : vector<8x112xf32>
    %615 = vector.broadcast %612 : vector<8x1xf32> to vector<8x112xf32>
    %616 = arith.addf %611, %615 : vector<8x112xf32>
    %cst_86 = arith.constant 0.000000e+00 : f32
    %617 = vector.broadcast %cst_86 : f32 to vector<8x112xf32>
    %618 = arith.cmpf oge, %614, %617 : vector<8x112xf32>
    %cst_87 = arith.constant 0.00999999977 : f32
    %619 = vector.broadcast %cst_87 : f32 to vector<8x112xf32>
    %620 = arith.mulf %619, %614 : vector<8x112xf32>
    %621 = arith.select %618, %614, %620 : vector<8x112xi1>, vector<8x112xf32>
    %cst_88 = arith.constant 0.000000e+00 : f32
    %622 = vector.broadcast %cst_88 : f32 to vector<8x112xf32>
    %623 = arith.cmpf oge, %616, %622 : vector<8x112xf32>
    %cst_89 = arith.constant 0.00999999977 : f32
    %624 = vector.broadcast %cst_89 : f32 to vector<8x112xf32>
    %625 = arith.mulf %624, %616 : vector<8x112xf32>
    %626 = arith.select %623, %616, %625 : vector<8x112xi1>, vector<8x112xf32>
    %627 = arith.addf %621, %626 : vector<8x112xf32>
    %cst_90 = arith.constant 5.000000e-01 : f32
    %628 = vector.broadcast %cst_90 : f32 to vector<8x112xf32>
    %629 = arith.mulf %627, %628 : vector<8x112xf32>
    %630 = vector.extract_strided_slice %629 {offsets = [0, 0], sizes = [8, 7], strides = [1, 1]} : vector<8x112xf32> to vector<8x7xf32>
    %631 = vector.extract_strided_slice %629 {offsets = [0, 8], sizes = [8, 7], strides = [1, 1]} : vector<8x112xf32> to vector<8x7xf32>
    %632 = vector.extract_strided_slice %629 {offsets = [0, 16], sizes = [8, 7], strides = [1, 1]} : vector<8x112xf32> to vector<8x7xf32>
    %633 = vector.extract_strided_slice %629 {offsets = [0, 24], sizes = [8, 7], strides = [1, 1]} : vector<8x112xf32> to vector<8x7xf32>
    %634 = vector.extract_strided_slice %629 {offsets = [0, 32], sizes = [8, 7], strides = [1, 1]} : vector<8x112xf32> to vector<8x7xf32>
    %635 = vector.extract_strided_slice %629 {offsets = [0, 40], sizes = [8, 7], strides = [1, 1]} : vector<8x112xf32> to vector<8x7xf32>
    %636 = vector.extract_strided_slice %629 {offsets = [0, 48], sizes = [8, 7], strides = [1, 1]} : vector<8x112xf32> to vector<8x7xf32>
    %637 = vector.extract_strided_slice %629 {offsets = [0, 56], sizes = [8, 7], strides = [1, 1]} : vector<8x112xf32> to vector<8x7xf32>
    %638 = vector.extract_strided_slice %629 {offsets = [0, 64], sizes = [8, 7], strides = [1, 1]} : vector<8x112xf32> to vector<8x7xf32>
    %639 = vector.extract_strided_slice %629 {offsets = [0, 72], sizes = [8, 7], strides = [1, 1]} : vector<8x112xf32> to vector<8x7xf32>
    %640 = vector.extract_strided_slice %629 {offsets = [0, 80], sizes = [8, 7], strides = [1, 1]} : vector<8x112xf32> to vector<8x7xf32>
    %641 = vector.extract_strided_slice %629 {offsets = [0, 88], sizes = [8, 7], strides = [1, 1]} : vector<8x112xf32> to vector<8x7xf32>
    %642 = vector.extract_strided_slice %629 {offsets = [0, 96], sizes = [8, 7], strides = [1, 1]} : vector<8x112xf32> to vector<8x7xf32>
    %643 = vector.extract_strided_slice %629 {offsets = [0, 104], sizes = [8, 7], strides = [1, 1]} : vector<8x112xf32> to vector<8x7xf32>
    %644 = tpu.concatenate %630, %631, %632, %633, %634, %635, %636, %637, %638, %639, %640, %641, %642, %643 in 1 : vector<8x7xf32>, vector<8x7xf32>, vector<8x7xf32>, vector<8x7xf32>, vector<8x7xf32>, vector<8x7xf32>, vector<8x7xf32>, vector<8x7xf32>, vector<8x7xf32>, vector<8x7xf32>, vector<8x7xf32>, vector<8x7xf32>, vector<8x7xf32>, vector<8x7xf32> -> vector<8x98xf32>
    %645 = vector.extract_strided_slice %37 {offsets = [1, 0, 0], sizes = [1, 1, 136], strides = [1, 1, 1]} : vector<2x1x136xf32> to vector<1x1x136xf32>
    %646 = vector.shape_cast %645 : vector<1x1x136xf32> to vector<1x136xf32>
    %647 = vector.extract_strided_slice %55 {offsets = [1, 0, 0], sizes = [1, 1, 136], strides = [1, 1, 1]} : vector<2x1x136xf32> to vector<1x1x136xf32>
    %648 = vector.shape_cast %647 : vector<1x1x136xf32> to vector<1x136xf32>
    %c0_91 = arith.constant 0 : index
    %c0_92 = arith.constant 0 : index
    %649 = vector.load %arg3[%c0_91, %c0_92] : memref<8x25xf32, #tpu.memory_space<vmem>>, vector<8x1xf32>
    %c0_93 = arith.constant 0 : index
    %c1_94 = arith.constant 1 : index
    %650 = vector.load %arg3[%c0_93, %c1_94] : memref<8x25xf32, #tpu.memory_space<vmem>>, vector<8x1xf32>
    %c0_95 = arith.constant 0 : index
    %c2_96 = arith.constant 2 : index
    %651 = vector.load %arg3[%c0_95, %c2_96] : memref<8x25xf32, #tpu.memory_space<vmem>>, vector<8x1xf32>
    %c0_97 = arith.constant 0 : index
    %c3_98 = arith.constant 3 : index
    %652 = vector.load %arg3[%c0_97, %c3_98] : memref<8x25xf32, #tpu.memory_space<vmem>>, vector<8x1xf32>
    %c0_99 = arith.constant 0 : index
    %c4_100 = arith.constant 4 : index
    %653 = vector.load %arg3[%c0_99, %c4_100] : memref<8x25xf32, #tpu.memory_space<vmem>>, vector<8x1xf32>
    %c0_101 = arith.constant 0 : index
    %c5_102 = arith.constant 5 : index
    %654 = vector.load %arg3[%c0_101, %c5_102] : memref<8x25xf32, #tpu.memory_space<vmem>>, vector<8x1xf32>
    %c0_103 = arith.constant 0 : index
    %c6_104 = arith.constant 6 : index
    %655 = vector.load %arg3[%c0_103, %c6_104] : memref<8x25xf32, #tpu.memory_space<vmem>>, vector<8x1xf32>
    %c0_105 = arith.constant 0 : index
    %c7_106 = arith.constant 7 : index
    %656 = vector.load %arg3[%c0_105, %c7_106] : memref<8x25xf32, #tpu.memory_space<vmem>>, vector<8x1xf32>
    %c0_107 = arith.constant 0 : index
    %c8_108 = arith.constant 8 : index
    %657 = vector.load %arg3[%c0_107, %c8_108] : memref<8x25xf32, #tpu.memory_space<vmem>>, vector<8x1xf32>
    %c0_109 = arith.constant 0 : index
    %c9_110 = arith.constant 9 : index
    %658 = vector.load %arg3[%c0_109, %c9_110] : memref<8x25xf32, #tpu.memory_space<vmem>>, vector<8x1xf32>
    %c0_111 = arith.constant 0 : index
    %c10_112 = arith.constant 10 : index
    %659 = vector.load %arg3[%c0_111, %c10_112] : memref<8x25xf32, #tpu.memory_space<vmem>>, vector<8x1xf32>
    %c0_113 = arith.constant 0 : index
    %c11_114 = arith.constant 11 : index
    %660 = vector.load %arg3[%c0_113, %c11_114] : memref<8x25xf32, #tpu.memory_space<vmem>>, vector<8x1xf32>
    %c0_115 = arith.constant 0 : index
    %c12_116 = arith.constant 12 : index
    %661 = vector.load %arg3[%c0_115, %c12_116] : memref<8x25xf32, #tpu.memory_space<vmem>>, vector<8x1xf32>
    %c0_117 = arith.constant 0 : index
    %c13_118 = arith.constant 13 : index
    %662 = vector.load %arg3[%c0_117, %c13_118] : memref<8x25xf32, #tpu.memory_space<vmem>>, vector<8x1xf32>
    %c0_119 = arith.constant 0 : index
    %c14_120 = arith.constant 14 : index
    %663 = vector.load %arg3[%c0_119, %c14_120] : memref<8x25xf32, #tpu.memory_space<vmem>>, vector<8x1xf32>
    %c0_121 = arith.constant 0 : index
    %c15_122 = arith.constant 15 : index
    %664 = vector.load %arg3[%c0_121, %c15_122] : memref<8x25xf32, #tpu.memory_space<vmem>>, vector<8x1xf32>
    %c0_123 = arith.constant 0 : index
    %c16_124 = arith.constant 16 : index
    %665 = vector.load %arg3[%c0_123, %c16_124] : memref<8x25xf32, #tpu.memory_space<vmem>>, vector<8x1xf32>
    %c0_125 = arith.constant 0 : index
    %c17_126 = arith.constant 17 : index
    %666 = vector.load %arg3[%c0_125, %c17_126] : memref<8x25xf32, #tpu.memory_space<vmem>>, vector<8x1xf32>
    %c0_127 = arith.constant 0 : index
    %c18_128 = arith.constant 18 : index
    %667 = vector.load %arg3[%c0_127, %c18_128] : memref<8x25xf32, #tpu.memory_space<vmem>>, vector<8x1xf32>
    %c0_129 = arith.constant 0 : index
    %c19_130 = arith.constant 19 : index
    %668 = vector.load %arg3[%c0_129, %c19_130] : memref<8x25xf32, #tpu.memory_space<vmem>>, vector<8x1xf32>
    %c0_131 = arith.constant 0 : index
    %c20_132 = arith.constant 20 : index
    %669 = vector.load %arg3[%c0_131, %c20_132] : memref<8x25xf32, #tpu.memory_space<vmem>>, vector<8x1xf32>
    %c0_133 = arith.constant 0 : index
    %c21_134 = arith.constant 21 : index
    %670 = vector.load %arg3[%c0_133, %c21_134] : memref<8x25xf32, #tpu.memory_space<vmem>>, vector<8x1xf32>
    %c0_135 = arith.constant 0 : index
    %c22_136 = arith.constant 22 : index
    %671 = vector.load %arg3[%c0_135, %c22_136] : memref<8x25xf32, #tpu.memory_space<vmem>>, vector<8x1xf32>
    %c0_137 = arith.constant 0 : index
    %c23_138 = arith.constant 23 : index
    %672 = vector.load %arg3[%c0_137, %c23_138] : memref<8x25xf32, #tpu.memory_space<vmem>>, vector<8x1xf32>
    %c0_139 = arith.constant 0 : index
    %c24_140 = arith.constant 24 : index
    %673 = vector.load %arg3[%c0_139, %c24_140] : memref<8x25xf32, #tpu.memory_space<vmem>>, vector<8x1xf32>
    %cst_141 = arith.constant 0.000000e+00 : f32
    %674 = vector.broadcast %cst_141 : f32 to vector<8x96xf32>
    %cst_142 = arith.constant 0.000000e+00 : f32
    %675 = vector.broadcast %cst_142 : f32 to vector<8x96xf32>
    %676 = vector.extract_strided_slice %646 {offsets = [0, 0], sizes = [1, 96], strides = [1, 1]} : vector<1x136xf32> to vector<1x96xf32>
    %677 = vector.extract_strided_slice %648 {offsets = [0, 0], sizes = [1, 96], strides = [1, 1]} : vector<1x136xf32> to vector<1x96xf32>
    %678 = vector.broadcast %649 : vector<8x1xf32> to vector<8x96xf32>
    %679 = vector.broadcast %676 : vector<1x96xf32> to vector<8x96xf32>
    %680 = arith.mulf %678, %679 : vector<8x96xf32>
    %681 = arith.addf %674, %680 : vector<8x96xf32>
    %682 = vector.broadcast %649 : vector<8x1xf32> to vector<8x96xf32>
    %683 = vector.broadcast %677 : vector<1x96xf32> to vector<8x96xf32>
    %684 = arith.mulf %682, %683 : vector<8x96xf32>
    %685 = arith.addf %675, %684 : vector<8x96xf32>
    %686 = vector.extract_strided_slice %648 {offsets = [0, 0], sizes = [1, 96], strides = [1, 1]} : vector<1x136xf32> to vector<1x96xf32>
    %687 = vector.extract_strided_slice %646 {offsets = [0, 1], sizes = [1, 96], strides = [1, 1]} : vector<1x136xf32> to vector<1x96xf32>
    %688 = vector.broadcast %650 : vector<8x1xf32> to vector<8x96xf32>
    %689 = vector.broadcast %686 : vector<1x96xf32> to vector<8x96xf32>
    %690 = arith.mulf %688, %689 : vector<8x96xf32>
    %691 = arith.addf %681, %690 : vector<8x96xf32>
    %692 = vector.broadcast %650 : vector<8x1xf32> to vector<8x96xf32>
    %693 = vector.broadcast %687 : vector<1x96xf32> to vector<8x96xf32>
    %694 = arith.mulf %692, %693 : vector<8x96xf32>
    %695 = arith.addf %685, %694 : vector<8x96xf32>
    %696 = vector.extract_strided_slice %646 {offsets = [0, 1], sizes = [1, 96], strides = [1, 1]} : vector<1x136xf32> to vector<1x96xf32>
    %697 = vector.extract_strided_slice %648 {offsets = [0, 1], sizes = [1, 96], strides = [1, 1]} : vector<1x136xf32> to vector<1x96xf32>
    %698 = vector.broadcast %651 : vector<8x1xf32> to vector<8x96xf32>
    %699 = vector.broadcast %696 : vector<1x96xf32> to vector<8x96xf32>
    %700 = arith.mulf %698, %699 : vector<8x96xf32>
    %701 = arith.addf %691, %700 : vector<8x96xf32>
    %702 = vector.broadcast %651 : vector<8x1xf32> to vector<8x96xf32>
    %703 = vector.broadcast %697 : vector<1x96xf32> to vector<8x96xf32>
    %704 = arith.mulf %702, %703 : vector<8x96xf32>
    %705 = arith.addf %695, %704 : vector<8x96xf32>
    %706 = vector.extract_strided_slice %648 {offsets = [0, 1], sizes = [1, 96], strides = [1, 1]} : vector<1x136xf32> to vector<1x96xf32>
    %707 = vector.extract_strided_slice %646 {offsets = [0, 2], sizes = [1, 96], strides = [1, 1]} : vector<1x136xf32> to vector<1x96xf32>
    %708 = vector.broadcast %652 : vector<8x1xf32> to vector<8x96xf32>
    %709 = vector.broadcast %706 : vector<1x96xf32> to vector<8x96xf32>
    %710 = arith.mulf %708, %709 : vector<8x96xf32>
    %711 = arith.addf %701, %710 : vector<8x96xf32>
    %712 = vector.broadcast %652 : vector<8x1xf32> to vector<8x96xf32>
    %713 = vector.broadcast %707 : vector<1x96xf32> to vector<8x96xf32>
    %714 = arith.mulf %712, %713 : vector<8x96xf32>
    %715 = arith.addf %705, %714 : vector<8x96xf32>
    %716 = vector.extract_strided_slice %646 {offsets = [0, 2], sizes = [1, 96], strides = [1, 1]} : vector<1x136xf32> to vector<1x96xf32>
    %717 = vector.extract_strided_slice %648 {offsets = [0, 2], sizes = [1, 96], strides = [1, 1]} : vector<1x136xf32> to vector<1x96xf32>
    %718 = vector.broadcast %653 : vector<8x1xf32> to vector<8x96xf32>
    %719 = vector.broadcast %716 : vector<1x96xf32> to vector<8x96xf32>
    %720 = arith.mulf %718, %719 : vector<8x96xf32>
    %721 = arith.addf %711, %720 : vector<8x96xf32>
    %722 = vector.broadcast %653 : vector<8x1xf32> to vector<8x96xf32>
    %723 = vector.broadcast %717 : vector<1x96xf32> to vector<8x96xf32>
    %724 = arith.mulf %722, %723 : vector<8x96xf32>
    %725 = arith.addf %715, %724 : vector<8x96xf32>
    %726 = vector.extract_strided_slice %646 {offsets = [0, 8], sizes = [1, 96], strides = [1, 1]} : vector<1x136xf32> to vector<1x96xf32>
    %727 = vector.extract_strided_slice %648 {offsets = [0, 8], sizes = [1, 96], strides = [1, 1]} : vector<1x136xf32> to vector<1x96xf32>
    %728 = vector.broadcast %654 : vector<8x1xf32> to vector<8x96xf32>
    %729 = vector.broadcast %726 : vector<1x96xf32> to vector<8x96xf32>
    %730 = arith.mulf %728, %729 : vector<8x96xf32>
    %731 = arith.addf %721, %730 : vector<8x96xf32>
    %732 = vector.broadcast %654 : vector<8x1xf32> to vector<8x96xf32>
    %733 = vector.broadcast %727 : vector<1x96xf32> to vector<8x96xf32>
    %734 = arith.mulf %732, %733 : vector<8x96xf32>
    %735 = arith.addf %725, %734 : vector<8x96xf32>
    %736 = vector.extract_strided_slice %648 {offsets = [0, 8], sizes = [1, 96], strides = [1, 1]} : vector<1x136xf32> to vector<1x96xf32>
    %737 = vector.extract_strided_slice %646 {offsets = [0, 9], sizes = [1, 96], strides = [1, 1]} : vector<1x136xf32> to vector<1x96xf32>
    %738 = vector.broadcast %655 : vector<8x1xf32> to vector<8x96xf32>
    %739 = vector.broadcast %736 : vector<1x96xf32> to vector<8x96xf32>
    %740 = arith.mulf %738, %739 : vector<8x96xf32>
    %741 = arith.addf %731, %740 : vector<8x96xf32>
    %742 = vector.broadcast %655 : vector<8x1xf32> to vector<8x96xf32>
    %743 = vector.broadcast %737 : vector<1x96xf32> to vector<8x96xf32>
    %744 = arith.mulf %742, %743 : vector<8x96xf32>
    %745 = arith.addf %735, %744 : vector<8x96xf32>
    %746 = vector.extract_strided_slice %646 {offsets = [0, 9], sizes = [1, 96], strides = [1, 1]} : vector<1x136xf32> to vector<1x96xf32>
    %747 = vector.extract_strided_slice %648 {offsets = [0, 9], sizes = [1, 96], strides = [1, 1]} : vector<1x136xf32> to vector<1x96xf32>
    %748 = vector.broadcast %656 : vector<8x1xf32> to vector<8x96xf32>
    %749 = vector.broadcast %746 : vector<1x96xf32> to vector<8x96xf32>
    %750 = arith.mulf %748, %749 : vector<8x96xf32>
    %751 = arith.addf %741, %750 : vector<8x96xf32>
    %752 = vector.broadcast %656 : vector<8x1xf32> to vector<8x96xf32>
    %753 = vector.broadcast %747 : vector<1x96xf32> to vector<8x96xf32>
    %754 = arith.mulf %752, %753 : vector<8x96xf32>
    %755 = arith.addf %745, %754 : vector<8x96xf32>
    %756 = vector.extract_strided_slice %648 {offsets = [0, 9], sizes = [1, 96], strides = [1, 1]} : vector<1x136xf32> to vector<1x96xf32>
    %757 = vector.extract_strided_slice %646 {offsets = [0, 10], sizes = [1, 96], strides = [1, 1]} : vector<1x136xf32> to vector<1x96xf32>
    %758 = vector.broadcast %657 : vector<8x1xf32> to vector<8x96xf32>
    %759 = vector.broadcast %756 : vector<1x96xf32> to vector<8x96xf32>
    %760 = arith.mulf %758, %759 : vector<8x96xf32>
    %761 = arith.addf %751, %760 : vector<8x96xf32>
    %762 = vector.broadcast %657 : vector<8x1xf32> to vector<8x96xf32>
    %763 = vector.broadcast %757 : vector<1x96xf32> to vector<8x96xf32>
    %764 = arith.mulf %762, %763 : vector<8x96xf32>
    %765 = arith.addf %755, %764 : vector<8x96xf32>
    %766 = vector.extract_strided_slice %646 {offsets = [0, 10], sizes = [1, 96], strides = [1, 1]} : vector<1x136xf32> to vector<1x96xf32>
    %767 = vector.extract_strided_slice %648 {offsets = [0, 10], sizes = [1, 96], strides = [1, 1]} : vector<1x136xf32> to vector<1x96xf32>
    %768 = vector.broadcast %658 : vector<8x1xf32> to vector<8x96xf32>
    %769 = vector.broadcast %766 : vector<1x96xf32> to vector<8x96xf32>
    %770 = arith.mulf %768, %769 : vector<8x96xf32>
    %771 = arith.addf %761, %770 : vector<8x96xf32>
    %772 = vector.broadcast %658 : vector<8x1xf32> to vector<8x96xf32>
    %773 = vector.broadcast %767 : vector<1x96xf32> to vector<8x96xf32>
    %774 = arith.mulf %772, %773 : vector<8x96xf32>
    %775 = arith.addf %765, %774 : vector<8x96xf32>
    %776 = vector.extract_strided_slice %646 {offsets = [0, 16], sizes = [1, 96], strides = [1, 1]} : vector<1x136xf32> to vector<1x96xf32>
    %777 = vector.extract_strided_slice %648 {offsets = [0, 16], sizes = [1, 96], strides = [1, 1]} : vector<1x136xf32> to vector<1x96xf32>
    %778 = vector.broadcast %659 : vector<8x1xf32> to vector<8x96xf32>
    %779 = vector.broadcast %776 : vector<1x96xf32> to vector<8x96xf32>
    %780 = arith.mulf %778, %779 : vector<8x96xf32>
    %781 = arith.addf %771, %780 : vector<8x96xf32>
    %782 = vector.broadcast %659 : vector<8x1xf32> to vector<8x96xf32>
    %783 = vector.broadcast %777 : vector<1x96xf32> to vector<8x96xf32>
    %784 = arith.mulf %782, %783 : vector<8x96xf32>
    %785 = arith.addf %775, %784 : vector<8x96xf32>
    %786 = vector.extract_strided_slice %648 {offsets = [0, 16], sizes = [1, 96], strides = [1, 1]} : vector<1x136xf32> to vector<1x96xf32>
    %787 = vector.extract_strided_slice %646 {offsets = [0, 17], sizes = [1, 96], strides = [1, 1]} : vector<1x136xf32> to vector<1x96xf32>
    %788 = vector.broadcast %660 : vector<8x1xf32> to vector<8x96xf32>
    %789 = vector.broadcast %786 : vector<1x96xf32> to vector<8x96xf32>
    %790 = arith.mulf %788, %789 : vector<8x96xf32>
    %791 = arith.addf %781, %790 : vector<8x96xf32>
    %792 = vector.broadcast %660 : vector<8x1xf32> to vector<8x96xf32>
    %793 = vector.broadcast %787 : vector<1x96xf32> to vector<8x96xf32>
    %794 = arith.mulf %792, %793 : vector<8x96xf32>
    %795 = arith.addf %785, %794 : vector<8x96xf32>
    %796 = vector.extract_strided_slice %646 {offsets = [0, 17], sizes = [1, 96], strides = [1, 1]} : vector<1x136xf32> to vector<1x96xf32>
    %797 = vector.extract_strided_slice %648 {offsets = [0, 17], sizes = [1, 96], strides = [1, 1]} : vector<1x136xf32> to vector<1x96xf32>
    %798 = vector.broadcast %661 : vector<8x1xf32> to vector<8x96xf32>
    %799 = vector.broadcast %796 : vector<1x96xf32> to vector<8x96xf32>
    %800 = arith.mulf %798, %799 : vector<8x96xf32>
    %801 = arith.addf %791, %800 : vector<8x96xf32>
    %802 = vector.broadcast %661 : vector<8x1xf32> to vector<8x96xf32>
    %803 = vector.broadcast %797 : vector<1x96xf32> to vector<8x96xf32>
    %804 = arith.mulf %802, %803 : vector<8x96xf32>
    %805 = arith.addf %795, %804 : vector<8x96xf32>
    %806 = vector.extract_strided_slice %648 {offsets = [0, 17], sizes = [1, 96], strides = [1, 1]} : vector<1x136xf32> to vector<1x96xf32>
    %807 = vector.extract_strided_slice %646 {offsets = [0, 18], sizes = [1, 96], strides = [1, 1]} : vector<1x136xf32> to vector<1x96xf32>
    %808 = vector.broadcast %662 : vector<8x1xf32> to vector<8x96xf32>
    %809 = vector.broadcast %806 : vector<1x96xf32> to vector<8x96xf32>
    %810 = arith.mulf %808, %809 : vector<8x96xf32>
    %811 = arith.addf %801, %810 : vector<8x96xf32>
    %812 = vector.broadcast %662 : vector<8x1xf32> to vector<8x96xf32>
    %813 = vector.broadcast %807 : vector<1x96xf32> to vector<8x96xf32>
    %814 = arith.mulf %812, %813 : vector<8x96xf32>
    %815 = arith.addf %805, %814 : vector<8x96xf32>
    %816 = vector.extract_strided_slice %646 {offsets = [0, 18], sizes = [1, 96], strides = [1, 1]} : vector<1x136xf32> to vector<1x96xf32>
    %817 = vector.extract_strided_slice %648 {offsets = [0, 18], sizes = [1, 96], strides = [1, 1]} : vector<1x136xf32> to vector<1x96xf32>
    %818 = vector.broadcast %663 : vector<8x1xf32> to vector<8x96xf32>
    %819 = vector.broadcast %816 : vector<1x96xf32> to vector<8x96xf32>
    %820 = arith.mulf %818, %819 : vector<8x96xf32>
    %821 = arith.addf %811, %820 : vector<8x96xf32>
    %822 = vector.broadcast %663 : vector<8x1xf32> to vector<8x96xf32>
    %823 = vector.broadcast %817 : vector<1x96xf32> to vector<8x96xf32>
    %824 = arith.mulf %822, %823 : vector<8x96xf32>
    %825 = arith.addf %815, %824 : vector<8x96xf32>
    %826 = vector.extract_strided_slice %646 {offsets = [0, 24], sizes = [1, 96], strides = [1, 1]} : vector<1x136xf32> to vector<1x96xf32>
    %827 = vector.extract_strided_slice %648 {offsets = [0, 24], sizes = [1, 96], strides = [1, 1]} : vector<1x136xf32> to vector<1x96xf32>
    %828 = vector.broadcast %664 : vector<8x1xf32> to vector<8x96xf32>
    %829 = vector.broadcast %826 : vector<1x96xf32> to vector<8x96xf32>
    %830 = arith.mulf %828, %829 : vector<8x96xf32>
    %831 = arith.addf %821, %830 : vector<8x96xf32>
    %832 = vector.broadcast %664 : vector<8x1xf32> to vector<8x96xf32>
    %833 = vector.broadcast %827 : vector<1x96xf32> to vector<8x96xf32>
    %834 = arith.mulf %832, %833 : vector<8x96xf32>
    %835 = arith.addf %825, %834 : vector<8x96xf32>
    %836 = vector.extract_strided_slice %648 {offsets = [0, 24], sizes = [1, 96], strides = [1, 1]} : vector<1x136xf32> to vector<1x96xf32>
    %837 = vector.extract_strided_slice %646 {offsets = [0, 25], sizes = [1, 96], strides = [1, 1]} : vector<1x136xf32> to vector<1x96xf32>
    %838 = vector.broadcast %665 : vector<8x1xf32> to vector<8x96xf32>
    %839 = vector.broadcast %836 : vector<1x96xf32> to vector<8x96xf32>
    %840 = arith.mulf %838, %839 : vector<8x96xf32>
    %841 = arith.addf %831, %840 : vector<8x96xf32>
    %842 = vector.broadcast %665 : vector<8x1xf32> to vector<8x96xf32>
    %843 = vector.broadcast %837 : vector<1x96xf32> to vector<8x96xf32>
    %844 = arith.mulf %842, %843 : vector<8x96xf32>
    %845 = arith.addf %835, %844 : vector<8x96xf32>
    %846 = vector.extract_strided_slice %646 {offsets = [0, 25], sizes = [1, 96], strides = [1, 1]} : vector<1x136xf32> to vector<1x96xf32>
    %847 = vector.extract_strided_slice %648 {offsets = [0, 25], sizes = [1, 96], strides = [1, 1]} : vector<1x136xf32> to vector<1x96xf32>
    %848 = vector.broadcast %666 : vector<8x1xf32> to vector<8x96xf32>
    %849 = vector.broadcast %846 : vector<1x96xf32> to vector<8x96xf32>
    %850 = arith.mulf %848, %849 : vector<8x96xf32>
    %851 = arith.addf %841, %850 : vector<8x96xf32>
    %852 = vector.broadcast %666 : vector<8x1xf32> to vector<8x96xf32>
    %853 = vector.broadcast %847 : vector<1x96xf32> to vector<8x96xf32>
    %854 = arith.mulf %852, %853 : vector<8x96xf32>
    %855 = arith.addf %845, %854 : vector<8x96xf32>
    %856 = vector.extract_strided_slice %648 {offsets = [0, 25], sizes = [1, 96], strides = [1, 1]} : vector<1x136xf32> to vector<1x96xf32>
    %857 = vector.extract_strided_slice %646 {offsets = [0, 26], sizes = [1, 96], strides = [1, 1]} : vector<1x136xf32> to vector<1x96xf32>
    %858 = vector.broadcast %667 : vector<8x1xf32> to vector<8x96xf32>
    %859 = vector.broadcast %856 : vector<1x96xf32> to vector<8x96xf32>
    %860 = arith.mulf %858, %859 : vector<8x96xf32>
    %861 = arith.addf %851, %860 : vector<8x96xf32>
    %862 = vector.broadcast %667 : vector<8x1xf32> to vector<8x96xf32>
    %863 = vector.broadcast %857 : vector<1x96xf32> to vector<8x96xf32>
    %864 = arith.mulf %862, %863 : vector<8x96xf32>
    %865 = arith.addf %855, %864 : vector<8x96xf32>
    %866 = vector.extract_strided_slice %646 {offsets = [0, 26], sizes = [1, 96], strides = [1, 1]} : vector<1x136xf32> to vector<1x96xf32>
    %867 = vector.extract_strided_slice %648 {offsets = [0, 26], sizes = [1, 96], strides = [1, 1]} : vector<1x136xf32> to vector<1x96xf32>
    %868 = vector.broadcast %668 : vector<8x1xf32> to vector<8x96xf32>
    %869 = vector.broadcast %866 : vector<1x96xf32> to vector<8x96xf32>
    %870 = arith.mulf %868, %869 : vector<8x96xf32>
    %871 = arith.addf %861, %870 : vector<8x96xf32>
    %872 = vector.broadcast %668 : vector<8x1xf32> to vector<8x96xf32>
    %873 = vector.broadcast %867 : vector<1x96xf32> to vector<8x96xf32>
    %874 = arith.mulf %872, %873 : vector<8x96xf32>
    %875 = arith.addf %865, %874 : vector<8x96xf32>
    %876 = vector.extract_strided_slice %646 {offsets = [0, 32], sizes = [1, 96], strides = [1, 1]} : vector<1x136xf32> to vector<1x96xf32>
    %877 = vector.extract_strided_slice %648 {offsets = [0, 32], sizes = [1, 96], strides = [1, 1]} : vector<1x136xf32> to vector<1x96xf32>
    %878 = vector.broadcast %669 : vector<8x1xf32> to vector<8x96xf32>
    %879 = vector.broadcast %876 : vector<1x96xf32> to vector<8x96xf32>
    %880 = arith.mulf %878, %879 : vector<8x96xf32>
    %881 = arith.addf %871, %880 : vector<8x96xf32>
    %882 = vector.broadcast %669 : vector<8x1xf32> to vector<8x96xf32>
    %883 = vector.broadcast %877 : vector<1x96xf32> to vector<8x96xf32>
    %884 = arith.mulf %882, %883 : vector<8x96xf32>
    %885 = arith.addf %875, %884 : vector<8x96xf32>
    %886 = vector.extract_strided_slice %648 {offsets = [0, 32], sizes = [1, 96], strides = [1, 1]} : vector<1x136xf32> to vector<1x96xf32>
    %887 = vector.extract_strided_slice %646 {offsets = [0, 33], sizes = [1, 96], strides = [1, 1]} : vector<1x136xf32> to vector<1x96xf32>
    %888 = vector.broadcast %670 : vector<8x1xf32> to vector<8x96xf32>
    %889 = vector.broadcast %886 : vector<1x96xf32> to vector<8x96xf32>
    %890 = arith.mulf %888, %889 : vector<8x96xf32>
    %891 = arith.addf %881, %890 : vector<8x96xf32>
    %892 = vector.broadcast %670 : vector<8x1xf32> to vector<8x96xf32>
    %893 = vector.broadcast %887 : vector<1x96xf32> to vector<8x96xf32>
    %894 = arith.mulf %892, %893 : vector<8x96xf32>
    %895 = arith.addf %885, %894 : vector<8x96xf32>
    %896 = vector.extract_strided_slice %646 {offsets = [0, 33], sizes = [1, 96], strides = [1, 1]} : vector<1x136xf32> to vector<1x96xf32>
    %897 = vector.extract_strided_slice %648 {offsets = [0, 33], sizes = [1, 96], strides = [1, 1]} : vector<1x136xf32> to vector<1x96xf32>
    %898 = vector.broadcast %671 : vector<8x1xf32> to vector<8x96xf32>
    %899 = vector.broadcast %896 : vector<1x96xf32> to vector<8x96xf32>
    %900 = arith.mulf %898, %899 : vector<8x96xf32>
    %901 = arith.addf %891, %900 : vector<8x96xf32>
    %902 = vector.broadcast %671 : vector<8x1xf32> to vector<8x96xf32>
    %903 = vector.broadcast %897 : vector<1x96xf32> to vector<8x96xf32>
    %904 = arith.mulf %902, %903 : vector<8x96xf32>
    %905 = arith.addf %895, %904 : vector<8x96xf32>
    %906 = vector.extract_strided_slice %648 {offsets = [0, 33], sizes = [1, 96], strides = [1, 1]} : vector<1x136xf32> to vector<1x96xf32>
    %907 = vector.extract_strided_slice %646 {offsets = [0, 34], sizes = [1, 96], strides = [1, 1]} : vector<1x136xf32> to vector<1x96xf32>
    %908 = vector.broadcast %672 : vector<8x1xf32> to vector<8x96xf32>
    %909 = vector.broadcast %906 : vector<1x96xf32> to vector<8x96xf32>
    %910 = arith.mulf %908, %909 : vector<8x96xf32>
    %911 = arith.addf %901, %910 : vector<8x96xf32>
    %912 = vector.broadcast %672 : vector<8x1xf32> to vector<8x96xf32>
    %913 = vector.broadcast %907 : vector<1x96xf32> to vector<8x96xf32>
    %914 = arith.mulf %912, %913 : vector<8x96xf32>
    %915 = arith.addf %905, %914 : vector<8x96xf32>
    %916 = vector.extract_strided_slice %646 {offsets = [0, 34], sizes = [1, 96], strides = [1, 1]} : vector<1x136xf32> to vector<1x96xf32>
    %917 = vector.extract_strided_slice %648 {offsets = [0, 34], sizes = [1, 96], strides = [1, 1]} : vector<1x136xf32> to vector<1x96xf32>
    %918 = vector.broadcast %673 : vector<8x1xf32> to vector<8x96xf32>
    %919 = vector.broadcast %916 : vector<1x96xf32> to vector<8x96xf32>
    %920 = arith.mulf %918, %919 : vector<8x96xf32>
    %921 = arith.addf %911, %920 : vector<8x96xf32>
    %922 = vector.broadcast %673 : vector<8x1xf32> to vector<8x96xf32>
    %923 = vector.broadcast %917 : vector<1x96xf32> to vector<8x96xf32>
    %924 = arith.mulf %922, %923 : vector<8x96xf32>
    %925 = arith.addf %915, %924 : vector<8x96xf32>
    %c0_143 = arith.constant 0 : index
    %c0_144 = arith.constant 0 : index
    %926 = vector.load %arg4[%c0_143, %c0_144] : memref<8x1xf32, #tpu.memory_space<vmem>>, vector<8x1xf32>
    %927 = vector.broadcast %926 : vector<8x1xf32> to vector<8x96xf32>
    %928 = arith.addf %921, %927 : vector<8x96xf32>
    %929 = vector.broadcast %926 : vector<8x1xf32> to vector<8x96xf32>
    %930 = arith.addf %925, %929 : vector<8x96xf32>
    %cst_145 = arith.constant 0.000000e+00 : f32
    %931 = vector.broadcast %cst_145 : f32 to vector<8x96xf32>
    %932 = arith.cmpf oge, %928, %931 : vector<8x96xf32>
    %cst_146 = arith.constant 0.00999999977 : f32
    %933 = vector.broadcast %cst_146 : f32 to vector<8x96xf32>
    %934 = arith.mulf %933, %928 : vector<8x96xf32>
    %935 = arith.select %932, %928, %934 : vector<8x96xi1>, vector<8x96xf32>
    %cst_147 = arith.constant 0.000000e+00 : f32
    %936 = vector.broadcast %cst_147 : f32 to vector<8x96xf32>
    %937 = arith.cmpf oge, %930, %936 : vector<8x96xf32>
    %cst_148 = arith.constant 0.00999999977 : f32
    %938 = vector.broadcast %cst_148 : f32 to vector<8x96xf32>
    %939 = arith.mulf %938, %930 : vector<8x96xf32>
    %940 = arith.select %937, %930, %939 : vector<8x96xi1>, vector<8x96xf32>
    %941 = arith.addf %935, %940 : vector<8x96xf32>
    %cst_149 = arith.constant 5.000000e-01 : f32
    %942 = vector.broadcast %cst_149 : f32 to vector<8x96xf32>
    %943 = arith.mulf %941, %942 : vector<8x96xf32>
    %944 = vector.extract_strided_slice %943 {offsets = [0, 0], sizes = [8, 6], strides = [1, 1]} : vector<8x96xf32> to vector<8x6xf32>
    %945 = vector.extract_strided_slice %943 {offsets = [0, 8], sizes = [8, 6], strides = [1, 1]} : vector<8x96xf32> to vector<8x6xf32>
    %946 = vector.extract_strided_slice %943 {offsets = [0, 16], sizes = [8, 6], strides = [1, 1]} : vector<8x96xf32> to vector<8x6xf32>
    %947 = vector.extract_strided_slice %943 {offsets = [0, 24], sizes = [8, 6], strides = [1, 1]} : vector<8x96xf32> to vector<8x6xf32>
    %948 = vector.extract_strided_slice %943 {offsets = [0, 32], sizes = [8, 6], strides = [1, 1]} : vector<8x96xf32> to vector<8x6xf32>
    %949 = vector.extract_strided_slice %943 {offsets = [0, 40], sizes = [8, 6], strides = [1, 1]} : vector<8x96xf32> to vector<8x6xf32>
    %950 = vector.extract_strided_slice %943 {offsets = [0, 48], sizes = [8, 6], strides = [1, 1]} : vector<8x96xf32> to vector<8x6xf32>
    %951 = vector.extract_strided_slice %943 {offsets = [0, 56], sizes = [8, 6], strides = [1, 1]} : vector<8x96xf32> to vector<8x6xf32>
    %952 = vector.extract_strided_slice %943 {offsets = [0, 64], sizes = [8, 6], strides = [1, 1]} : vector<8x96xf32> to vector<8x6xf32>
    %953 = vector.extract_strided_slice %943 {offsets = [0, 72], sizes = [8, 6], strides = [1, 1]} : vector<8x96xf32> to vector<8x6xf32>
    %954 = vector.extract_strided_slice %943 {offsets = [0, 80], sizes = [8, 6], strides = [1, 1]} : vector<8x96xf32> to vector<8x6xf32>
    %955 = vector.extract_strided_slice %943 {offsets = [0, 88], sizes = [8, 6], strides = [1, 1]} : vector<8x96xf32> to vector<8x6xf32>
    %956 = tpu.concatenate %944, %945, %946, %947, %948, %949, %950, %951, %952, %953, %954, %955 in 1 : vector<8x6xf32>, vector<8x6xf32>, vector<8x6xf32>, vector<8x6xf32>, vector<8x6xf32>, vector<8x6xf32>, vector<8x6xf32>, vector<8x6xf32>, vector<8x6xf32>, vector<8x6xf32>, vector<8x6xf32>, vector<8x6xf32> -> vector<8x72xf32>
    %957 = tpu.concatenate %644, %956 in 1 : vector<8x98xf32>, vector<8x72xf32> -> vector<8x170xf32>
    %cst_150 = arith.constant dense<0.000000e+00> : vector<8xf32>
    %958 = vector.multi_reduction <add>, %506, %cst_150 [1] : vector<8x170xf32> to vector<8xf32>
    %959 = vector.shape_cast %958 : vector<8xf32> to vector<8x1xf32>
    %cst_151 = arith.constant 0.000000e+00 : f32
    %960 = vector.broadcast %cst_151 : f32 to vector<8x1xf32>
    %961 = arith.addf %960, %959 : vector<8x1xf32>
    %cst_152 = arith.constant dense<0.000000e+00> : vector<8xf32>
    %962 = vector.multi_reduction <add>, %957, %cst_152 [1] : vector<8x170xf32> to vector<8xf32>
    %963 = vector.shape_cast %962 : vector<8xf32> to vector<8x1xf32>
    %964 = arith.addf %961, %963 : vector<8x1xf32>
    %cst_153 = arith.constant 0.00294117653 : f32
    %965 = vector.broadcast %cst_153 : f32 to vector<8x1xf32>
    %966 = arith.mulf %964, %965 : vector<8x1xf32>
    %967 = vector.broadcast %966 : vector<8x1xf32> to vector<8x170xf32>
    %968 = arith.subf %506, %967 : vector<8x170xf32>
    %969 = vector.broadcast %966 : vector<8x1xf32> to vector<8x170xf32>
    %970 = arith.subf %506, %969 : vector<8x170xf32>
    %971 = arith.mulf %968, %970 : vector<8x170xf32>
    %cst_154 = arith.constant dense<0.000000e+00> : vector<8xf32>
    %972 = vector.multi_reduction <add>, %971, %cst_154 [1] : vector<8x170xf32> to vector<8xf32>
    %973 = vector.shape_cast %972 : vector<8xf32> to vector<8x1xf32>
    %cst_155 = arith.constant 0.000000e+00 : f32
    %974 = vector.broadcast %cst_155 : f32 to vector<8x1xf32>
    %975 = arith.addf %974, %973 : vector<8x1xf32>
    %976 = vector.broadcast %966 : vector<8x1xf32> to vector<8x170xf32>
    %977 = arith.subf %957, %976 : vector<8x170xf32>
    %978 = vector.broadcast %966 : vector<8x1xf32> to vector<8x170xf32>
    %979 = arith.subf %957, %978 : vector<8x170xf32>
    %980 = arith.mulf %977, %979 : vector<8x170xf32>
    %cst_156 = arith.constant dense<0.000000e+00> : vector<8xf32>
    %981 = vector.multi_reduction <add>, %980, %cst_156 [1] : vector<8x170xf32> to vector<8xf32>
    %982 = vector.shape_cast %981 : vector<8xf32> to vector<8x1xf32>
    %983 = arith.addf %975, %982 : vector<8x1xf32>
    %cst_157 = arith.constant 0.00294117653 : f32
    %984 = vector.broadcast %cst_157 : f32 to vector<8x1xf32>
    %985 = arith.mulf %983, %984 : vector<8x1xf32>
    %cst_158 = arith.constant 9.99999974E-6 : f32
    %986 = vector.broadcast %cst_158 : f32 to vector<8x1xf32>
    %987 = arith.addf %985, %986 : vector<8x1xf32>
    %988 = math.rsqrt %987 : vector<8x1xf32>
    %c0_159 = arith.constant 0 : index
    %c0_160 = arith.constant 0 : index
    %989 = vector.load %arg5[%c0_159, %c0_160] : memref<8x1xf32, #tpu.memory_space<vmem>>, vector<8x1xf32>
    %990 = arith.mulf %988, %989 : vector<8x1xf32>
    %c0_161 = arith.constant 0 : index
    %c0_162 = arith.constant 0 : index
    %991 = vector.load %arg6[%c0_161, %c0_162] : memref<8x1xf32, #tpu.memory_space<vmem>>, vector<8x1xf32>
    %992 = arith.mulf %966, %990 : vector<8x1xf32>
    %993 = arith.subf %991, %992 : vector<8x1xf32>
    %994 = vector.broadcast %990 : vector<8x1xf32> to vector<8x170xf32>
    %995 = arith.mulf %506, %994 : vector<8x170xf32>
    %996 = vector.broadcast %993 : vector<8x1xf32> to vector<8x170xf32>
    %997 = arith.addf %995, %996 : vector<8x170xf32>
    %c0_163 = arith.constant 0 : index
    %c0_164 = arith.constant 0 : index
    %c0_165 = arith.constant 0 : index
    %998 = vector.load %arg7[%c0_163, %c0_164, %c0_165] : memref<2x8x170xf32, #tpu.memory_space<vmem>>, vector<1x8x170xf32>
    %999 = vector.shape_cast %998 : vector<1x8x170xf32> to vector<8x170xf32>
    %1000 = vector.shape_cast %997 : vector<8x170xf32> to vector<1x8x170xf32>
    tpu.vector_store %arg7[%c0_163, %c0_164, %c0_165], %1000 {strides = array<i32>} : memref<2x8x170xf32, #tpu.memory_space<vmem>>, vector<1x8x170xf32>,
    %1001 = vector.broadcast %990 : vector<8x1xf32> to vector<8x170xf32>
    %1002 = arith.mulf %957, %1001 : vector<8x170xf32>
    %1003 = vector.broadcast %993 : vector<8x1xf32> to vector<8x170xf32>
    %1004 = arith.addf %1002, %1003 : vector<8x170xf32>
    %c1_166 = arith.constant 1 : index
    %c0_167 = arith.constant 0 : index
    %c0_168 = arith.constant 0 : index
    %1005 = vector.load %arg7[%c1_166, %c0_167, %c0_168] : memref<2x8x170xf32, #tpu.memory_space<vmem>>, vector<1x8x170xf32>
    %1006 = vector.shape_cast %1005 : vector<1x8x170xf32> to vector<8x170xf32>
    %1007 = vector.shape_cast %1004 : vector<8x170xf32> to vector<1x8x170xf32>
    tpu.vector_store %arg7[%c1_166, %c0_167, %c0_168], %1007 {strides = array<i32>} : memref<2x8x170xf32, #tpu.memory_space<vmem>>, vector<1x8x170xf32>,
    return
  }
}

</mosaic_0001>

<llo_original>
// kernel: squeeze.4
$region0: #{squeeze.4}
  %s0 = inlined_call_operand.vmem [shape: f32[8,3,3], index: 0, kind: input, shape index: {}]
  %s1 = inlined_call_operand.vmem [shape: f32[8,9], index: 1, kind: output, shape index: {}]
  $region1: #{squeeze.4} parent=0
    #allocation0 [shape = 'u8[12288]{0}', space=vmem, size = 0x3000, scoped, tag = 'scoped mem for input reshape']
    %s3 = sshll.u32 1, 4
    %s4 = ssub.s32 %s3, 1
    %s5 = smul.addr 4, 2
    %s6 = scalar_lea.vmem %s0, %s5
    %v7 = vld [vmem:[%s6] sm:%s4]
    %s8 = scalar_lea.vmem [#allocation0], 16
    %9 = vst [vmem:[%s8] sm:%s4] %v7
    %s10 = scalar_lea.vmem %s0, 4
    %v11 = vld [vmem:[%s10] sm:%s4]
    %s12 = scalar_lea.vmem [#allocation0], 8
    %13 = vst [vmem:[%s12] sm:%s4] %v11
    %v14 = vld [vmem:[%s0] sm:%s4]
    %15 = vst [vmem:[#allocation0] sm:%s4] %v14
    %v16 = vld [vmem:[#allocation0] sm:$0x7]
    %vm17 = vcmask 64512
    %18 = vst.msk [vmem:[%s1] sm:$0x7] %vm17, %v16
    %s19 = scalar_lea.vmem [#allocation0], 8
    %v20 = vld [vmem:[%s19] sm:$0x7]
    %vm21 = vcmask 64512
    %s22 = scalar_lea.vmem %s1, 3
    %23 = vst.msk [vmem:[%s22] sm:$0x7] %vm21, %v20
    %s24 = scalar_lea.vmem [#allocation0], 16
    %v25 = vld [vmem:[%s24] sm:$0x7]
    %vm26 = vcmask 64512
    %s27 = scalar_lea.vmem %s1, 6
    %28 = vst.msk [vmem:[%s27] sm:$0x7] %vm26, %v25

// kernel: spatial_inception_block.1
$region0: #{spatial_inception_block.1}
  #allocation0 [shape = 'u32[]', space=smem, size = 0x4, offset = 0x4, fixed_abs, tag = 'smem constant byte address 0x4 - core index']
  #allocation1 [shape = 'u32[144,128]{1,0:T(1,128)}', space=vmem, size = 0x12000, scoped, tag = 'internal scratch']
  %s0 = inlined_call_operand.vmem [shape: f32[2,16,16], index: 0, kind: input, shape index: {}]
  %s1 = inlined_call_operand.vmem [shape: f32[8,9], index: 1, kind: input, shape index: {}]
  %s2 = inlined_call_operand.vmem [shape: f32[8,1], index: 2, kind: input, shape index: {}]
  %s3 = inlined_call_operand.vmem [shape: f32[8,25], index: 3, kind: input, shape index: {}]
  %s4 = inlined_call_operand.vmem [shape: f32[8,1], index: 4, kind: input, shape index: {}]
  %s5 = inlined_call_operand.vmem [shape: f32[8,1], index: 5, kind: input, shape index: {}]
  %s6 = inlined_call_operand.vmem [shape: f32[8,1], index: 6, kind: input, shape index: {}]
  %s7 = inlined_call_operand.vmem [shape: f32[2,8,170], index: 7, kind: output, shape index: {}]
  %s8 = sld [smem:[#allocation0]]
  $region38: #{spatial_inception_block.1} parent=0
    _
  %s10 = ssub.s32 1, %s8
  %s11 = scalar_select 0, %s10, %s8
  // Predicated region
  $region2: #{spatial_inception_block.1} parent=0 // pred_check
    _
  $region3: #{spatial_inception_block.1} parent=0 // pred_check_branch
    %13 = sbr.rel (0) target = $region5
  $region4: #{spatial_inception_block.1} parent=0 // pred_region
    _
  $region5: #{spatial_inception_block.1} parent=0 // pred_fallthru
    _
  // Predicated region
  $region6: #{spatial_inception_block.1} parent=0 // pred_check
    _
  $region7: #{spatial_inception_block.1} parent=0 // pred_check_branch
    %15 = sbr.rel (0) target = $region9
  $region8: #{spatial_inception_block.1} parent=0 // pred_region
    _
  $region9: #{spatial_inception_block.1} parent=0 // pred_fallthru
    _
  // Predicated region
  $region10: #{spatial_inception_block.1} parent=0 // pred_check
    _
  $region11: #{spatial_inception_block.1} parent=0 // pred_check_branch
    %17 = sbr.rel (0) target = $region13
  $region12: #{spatial_inception_block.1} parent=0 // pred_region
    _
  $region13: #{spatial_inception_block.1} parent=0 // pred_fallthru
    _
  // Predicated region
  $region14: #{spatial_inception_block.1} parent=0 // pred_check
    _
  $region15: #{spatial_inception_block.1} parent=0 // pred_check_branch
    %19 = sbr.rel (0) target = $region17
  $region16: #{spatial_inception_block.1} parent=0 // pred_region
    _
  $region17: #{spatial_inception_block.1} parent=0 // pred_fallthru
    _
  // Predicated region
  $region18: #{spatial_inception_block.1} parent=0 // pred_check
    _
  $region19: #{spatial_inception_block.1} parent=0 // pred_check_branch
    %21 = sbr.rel (0) target = $region21
  $region20: #{spatial_inception_block.1} parent=0 // pred_region
    _
  $region21: #{spatial_inception_block.1} parent=0 // pred_fallthru
    _
  // Predicated region
  $region22: #{spatial_inception_block.1} parent=0 // pred_check
    _
  $region23: #{spatial_inception_block.1} parent=0 // pred_check_branch
    %23 = sbr.rel (0) target = $region25
  $region24: #{spatial_inception_block.1} parent=0 // pred_region
    _
  $region25: #{spatial_inception_block.1} parent=0 // pred_fallthru
    _
  // Predicated region
  $region26: #{spatial_inception_block.1} parent=0 // pred_check
    _
  $region27: #{spatial_inception_block.1} parent=0 // pred_check_branch
    %25 = sbr.rel (0) target = $region29
  $region28: #{spatial_inception_block.1} parent=0 // pred_region
    _
  $region29: #{spatial_inception_block.1} parent=0 // pred_fallthru
    _
  %v26 = vld [vmem:[%s0] sm:$0xff]
  %v27 = vld [vmem:[%s0 + $0x8] sm:$0xff]
  %v28 = vld [vmem:[%s0 + $0x10] sm:$0xff]
  %v29 = vld [vmem:[%s0 + $0x18] sm:$0xff]
  %34 = vrot.lane.b32.xlu0 %v26, 127
  %v35 = vpop.permute.xlu0 %34
  %36 = vrot.lane.b32.xlu0 %v27, 127
  %v37 = vpop.permute.xlu0 %36
  %38 = vrot.lane.b32.xlu0 %v28, 127
  %v39 = vpop.permute.xlu0 %38
  %40 = vrot.lane.b32.xlu0 %v29, 127
  %v41 = vpop.permute.xlu0 %40
  %46 = vrot.lane.b32.xlu0 %v26, 126
  %v47 = vpop.permute.xlu0 %46
  %48 = vrot.lane.b32.xlu0 %v27, 126
  %v49 = vpop.permute.xlu0 %48
  %50 = vrot.lane.b32.xlu0 %v28, 126
  %v51 = vpop.permute.xlu0 %50
  %52 = vrot.lane.b32.xlu0 %v29, 126
  %v53 = vpop.permute.xlu0 %52
  %58 = vrot.lane.b32.xlu0 %v26, 125
  %v59 = vpop.permute.xlu0 %58
  %60 = vrot.lane.b32.xlu0 %v27, 125
  %v61 = vpop.permute.xlu0 %60
  %62 = vrot.lane.b32.xlu0 %v28, 125
  %v63 = vpop.permute.xlu0 %62
  %64 = vrot.lane.b32.xlu0 %v29, 125
  %v65 = vpop.permute.xlu0 %64
  %70 = vrot.lane.b32.xlu0 %v26, 124
  %v71 = vpop.permute.xlu0 %70
  %72 = vrot.lane.b32.xlu0 %v27, 124
  %v73 = vpop.permute.xlu0 %72
  %74 = vrot.lane.b32.xlu0 %v28, 124
  %v75 = vpop.permute.xlu0 %74
  %76 = vrot.lane.b32.xlu0 %v29, 124
  %v77 = vpop.permute.xlu0 %76
  %82 = vrot.lane.b32.xlu0 %v26, 123
  %v83 = vpop.permute.xlu0 %82
  %84 = vrot.lane.b32.xlu0 %v27, 123
  %v85 = vpop.permute.xlu0 %84
  %86 = vrot.lane.b32.xlu0 %v28, 123
  %v87 = vpop.permute.xlu0 %86
  %88 = vrot.lane.b32.xlu0 %v29, 123
  %v89 = vpop.permute.xlu0 %88
  %94 = vrot.lane.b32.xlu0 %v26, 122
  %v95 = vpop.permute.xlu0 %94
  %96 = vrot.lane.b32.xlu0 %v27, 122
  %v97 = vpop.permute.xlu0 %96
  %98 = vrot.lane.b32.xlu0 %v28, 122
  %v99 = vpop.permute.xlu0 %98
  %100 = vrot.lane.b32.xlu0 %v29, 122
  %v101 = vpop.permute.xlu0 %100
  %106 = vrot.lane.b32.xlu0 %v26, 121
  %v107 = vpop.permute.xlu0 %106
  %108 = vrot.lane.b32.xlu0 %v27, 121
  %v109 = vpop.permute.xlu0 %108
  %110 = vrot.lane.b32.xlu0 %v28, 121
  %v111 = vpop.permute.xlu0 %110
  %112 = vrot.lane.b32.xlu0 %v29, 121
  %v113 = vpop.permute.xlu0 %112
  %vm118 = vcmask 7168
  %v119 = vsel %vm118, %v26, %v35
  %v120 = vsel %vm118, %v27, %v37
  %v121 = vsel %vm118, %v28, %v39
  %v122 = vsel %vm118, %v29, %v41
  %vm123 = vcmask 15360
  %v124 = vsel %vm123, %v119, %v47
  %v125 = vsel %vm123, %v120, %v49
  %v126 = vsel %vm123, %v121, %v51
  %v127 = vsel %vm123, %v122, %v53
  %vm128 = vcmask 23552
  %v129 = vsel %vm128, %v124, %v59
  %v130 = vsel %vm128, %v125, %v61
  %v131 = vsel %vm128, %v126, %v63
  %v132 = vsel %vm128, %v127, %v65
  %vm133 = vcmask 31744
  %v134 = vsel %vm133, %v129, %v71
  %v135 = vsel %vm133, %v130, %v73
  %v136 = vsel %vm133, %v131, %v75
  %v137 = vsel %vm133, %v132, %v77
  %vm138 = vcmask 39936
  %v139 = vsel %vm138, %v134, %v83
  %v140 = vsel %vm138, %v135, %v85
  %v141 = vsel %vm138, %v136, %v87
  %v142 = vsel %vm138, %v137, %v89
  %vm143 = vcmask 48128
  %v144 = vsel %vm143, %v139, %v95
  %v145 = vsel %vm143, %v140, %v97
  %v146 = vsel %vm143, %v141, %v99
  %v147 = vsel %vm143, %v142, %v101
  %vm148 = vcmask 56320
  %v149 = vsel %vm148, %v144, %v107
  %v150 = vsel %vm148, %v145, %v109
  %v151 = vsel %vm148, %v146, %v111
  %v152 = vsel %vm148, %v147, %v113
  %153 = vrot.lane.b32.xlu0 %v26, 120
  %v154 = vpop.permute.xlu0 %153
  %155 = vrot.lane.b32.xlu0 %v27, 120
  %v156 = vpop.permute.xlu0 %155
  %157 = vrot.lane.b32.xlu0 %v28, 120
  %v158 = vpop.permute.xlu0 %157
  %159 = vrot.lane.b32.xlu0 %v29, 120
  %v160 = vpop.permute.xlu0 %159
  %v165 = vsel %vm118, %v35, %v47
  %v166 = vsel %vm118, %v37, %v49
  %v167 = vsel %vm118, %v39, %v51
  %v168 = vsel %vm118, %v41, %v53
  %v169 = vsel %vm123, %v165, %v59
  %v170 = vsel %vm123, %v166, %v61
  %v171 = vsel %vm123, %v167, %v63
  %v172 = vsel %vm123, %v168, %v65
  %v173 = vsel %vm128, %v169, %v71
  %v174 = vsel %vm128, %v170, %v73
  %v175 = vsel %vm128, %v171, %v75
  %v176 = vsel %vm128, %v172, %v77
  %v177 = vsel %vm133, %v173, %v83
  %v178 = vsel %vm133, %v174, %v85
  %v179 = vsel %vm133, %v175, %v87
  %v180 = vsel %vm133, %v176, %v89
  %v181 = vsel %vm138, %v177, %v95
  %v182 = vsel %vm138, %v178, %v97
  %v183 = vsel %vm138, %v179, %v99
  %v184 = vsel %vm138, %v180, %v101
  %v185 = vsel %vm143, %v181, %v107
  %v186 = vsel %vm143, %v182, %v109
  %v187 = vsel %vm143, %v183, %v111
  %v188 = vsel %vm143, %v184, %v113
  %v189 = vsel %vm148, %v185, %v154
  %v190 = vsel %vm148, %v186, %v156
  %v191 = vsel %vm148, %v187, %v158
  %v192 = vsel %vm148, %v188, %v160
  %v195 = vrot.slane %v149, 1
  %v196 = vrot.slane %v151, 1
  %197 = vrot.lane.b32.xlu0 %v195, 8
  %v198 = vpop.permute.xlu0 %197
  %199 = vrot.lane.b32.xlu0 %v196, 8
  %v200 = vpop.permute.xlu0 %199
  %v203 = vrot.slane %v149, 2
  %v204 = vrot.slane %v151, 2
  %205 = vrot.lane.b32.xlu0 %v203, 16
  %v206 = vpop.permute.xlu0 %205
  %207 = vrot.lane.b32.xlu0 %v204, 16
  %v208 = vpop.permute.xlu0 %207
  %v211 = vrot.slane %v149, 3
  %v212 = vrot.slane %v151, 3
  %213 = vrot.lane.b32.xlu0 %v211, 24
  %v214 = vpop.permute.xlu0 %213
  %215 = vrot.lane.b32.xlu0 %v212, 24
  %v216 = vpop.permute.xlu0 %215
  %v219 = vrot.slane %v149, 4
  %v220 = vrot.slane %v151, 4
  %221 = vrot.lane.b32.xlu0 %v219, 32
  %v222 = vpop.permute.xlu0 %221
  %223 = vrot.lane.b32.xlu0 %v220, 32
  %v224 = vpop.permute.xlu0 %223
  %v227 = vrot.slane %v149, 5
  %v228 = vrot.slane %v151, 5
  %229 = vrot.lane.b32.xlu0 %v227, 40
  %v230 = vpop.permute.xlu0 %229
  %231 = vrot.lane.b32.xlu0 %v228, 40
  %v232 = vpop.permute.xlu0 %231
  %v235 = vrot.slane %v149, 6
  %v236 = vrot.slane %v151, 6
  %237 = vrot.lane.b32.xlu0 %v235, 48
  %v238 = vpop.permute.xlu0 %237
  %239 = vrot.lane.b32.xlu0 %v236, 48
  %v240 = vpop.permute.xlu0 %239
  %v243 = vrot.slane %v149, 7
  %v244 = vrot.slane %v151, 7
  %245 = vrot.lane.b32.xlu0 %v243, 56
  %v246 = vpop.permute.xlu0 %245
  %247 = vrot.lane.b32.xlu0 %v244, 56
  %v248 = vpop.permute.xlu0 %247
  %253 = vrot.lane.b32.xlu0 %v150, 64
  %v254 = vpop.permute.xlu0 %253
  %255 = vrot.lane.b32.xlu0 %v152, 64
  %v256 = vpop.permute.xlu0 %255
  %v259 = vrot.slane %v150, 1
  %v260 = vrot.slane %v152, 1
  %261 = vrot.lane.b32.xlu0 %v259, 72
  %v262 = vpop.permute.xlu0 %261
  %263 = vrot.lane.b32.xlu0 %v260, 72
  %v264 = vpop.permute.xlu0 %263
  %v267 = vrot.slane %v150, 2
  %v268 = vrot.slane %v152, 2
  %269 = vrot.lane.b32.xlu0 %v267, 80
  %v270 = vpop.permute.xlu0 %269
  %271 = vrot.lane.b32.xlu0 %v268, 80
  %v272 = vpop.permute.xlu0 %271
  %v275 = vrot.slane %v150, 3
  %v276 = vrot.slane %v152, 3
  %277 = vrot.lane.b32.xlu0 %v275, 88
  %v278 = vpop.permute.xlu0 %277
  %279 = vrot.lane.b32.xlu0 %v276, 88
  %v280 = vpop.permute.xlu0 %279
  %v283 = vrot.slane %v150, 4
  %v284 = vrot.slane %v152, 4
  %285 = vrot.lane.b32.xlu0 %v283, 96
  %v286 = vpop.permute.xlu0 %285
  %287 = vrot.lane.b32.xlu0 %v284, 96
  %v288 = vpop.permute.xlu0 %287
  %v291 = vrot.slane %v150, 5
  %v292 = vrot.slane %v152, 5
  %293 = vrot.lane.b32.xlu0 %v291, 104
  %v294 = vpop.permute.xlu0 %293
  %295 = vrot.lane.b32.xlu0 %v292, 104
  %v296 = vpop.permute.xlu0 %295
  %v299 = vrot.slane %v150, 6
  %v300 = vrot.slane %v152, 6
  %301 = vrot.lane.b32.xlu0 %v299, 112
  %v302 = vpop.permute.xlu0 %301
  %303 = vrot.lane.b32.xlu0 %v300, 112
  %v304 = vpop.permute.xlu0 %303
  %v307 = vrot.slane %v150, 7
  %v308 = vrot.slane %v152, 7
  %309 = vrot.lane.b32.xlu0 %v307, 120
  %v310 = vpop.permute.xlu0 %309
  %311 = vrot.lane.b32.xlu0 %v308, 120
  %v312 = vpop.permute.xlu0 %311
  %vm315 = vcmask 64512
  %v316 = vsel %vm315, %v149, %v198
  %v317 = vsel %vm315, %v151, %v200
  %vm318 = vcmask 130048
  %v319 = vsel %vm318, %v316, %v206
  %v320 = vsel %vm318, %v317, %v208
  %vm321 = vcmask 195584
  %v322 = vsel %vm321, %v319, %v214
  %v323 = vsel %vm321, %v320, %v216
  %vm324 = vcmask 261120
  %v325 = vsel %vm324, %v322, %v222
  %v326 = vsel %vm324, %v323, %v224
  %vm327 = vcmask 326656
  %v328 = vsel %vm327, %v325, %v230
  %v329 = vsel %vm327, %v326, %v232
  %vm330 = vcmask 392192
  %v331 = vsel %vm330, %v328, %v238
  %v332 = vsel %vm330, %v329, %v240
  %vm333 = vcmask 457728
  %v334 = vsel %vm333, %v331, %v246
  %v335 = vsel %vm333, %v332, %v248
  %vm336 = vcmask 523264
  %v337 = vsel %vm336, %v334, %v254
  %v338 = vsel %vm336, %v335, %v256
  %vm339 = vcmask 588800
  %v340 = vsel %vm339, %v337, %v262
  %v341 = vsel %vm339, %v338, %v264
  %vm342 = vcmask 654336
  %v343 = vsel %vm342, %v340, %v270
  %v344 = vsel %vm342, %v341, %v272
  %vm345 = vcmask 719872
  %v346 = vsel %vm345, %v343, %v278
  %v347 = vsel %vm345, %v344, %v280
  %vm348 = vcmask 785408
  %v349 = vsel %vm348, %v346, %v286
  %v350 = vsel %vm348, %v347, %v288
  %vm351 = vcmask 850944
  %v352 = vsel %vm351, %v349, %v294
  %v353 = vsel %vm351, %v350, %v296
  %vm354 = vcmask 916480
  %v355 = vsel %vm354, %v352, %v302
  %v356 = vsel %vm354, %v353, %v304
  %vm357 = vcmask 982016
  %v358 = vsel %vm357, %v355, %v310
  %v359 = vsel %vm357, %v356, %v312
  %v362 = vrot.slane %v189, 1
  %v363 = vrot.slane %v191, 1
  %364 = vrot.lane.b32.xlu0 %v362, 8
  %v365 = vpop.permute.xlu0 %364
  %366 = vrot.lane.b32.xlu0 %v363, 8
  %v367 = vpop.permute.xlu0 %366
  %v370 = vrot.slane %v189, 2
  %v371 = vrot.slane %v191, 2
  %372 = vrot.lane.b32.xlu0 %v370, 16
  %v373 = vpop.permute.xlu0 %372
  %374 = vrot.lane.b32.xlu0 %v371, 16
  %v375 = vpop.permute.xlu0 %374
  %v378 = vrot.slane %v189, 3
  %v379 = vrot.slane %v191, 3
  %380 = vrot.lane.b32.xlu0 %v378, 24
  %v381 = vpop.permute.xlu0 %380
  %382 = vrot.lane.b32.xlu0 %v379, 24
  %v383 = vpop.permute.xlu0 %382
  %v386 = vrot.slane %v189, 4
  %v387 = vrot.slane %v191, 4
  %388 = vrot.lane.b32.xlu0 %v386, 32
  %v389 = vpop.permute.xlu0 %388
  %390 = vrot.lane.b32.xlu0 %v387, 32
  %v391 = vpop.permute.xlu0 %390
  %v394 = vrot.slane %v189, 5
  %v395 = vrot.slane %v191, 5
  %396 = vrot.lane.b32.xlu0 %v394, 40
  %v397 = vpop.permute.xlu0 %396
  %398 = vrot.lane.b32.xlu0 %v395, 40
  %v399 = vpop.permute.xlu0 %398
  %v402 = vrot.slane %v189, 6
  %v403 = vrot.slane %v191, 6
  %404 = vrot.lane.b32.xlu0 %v402, 48
  %v405 = vpop.permute.xlu0 %404
  %406 = vrot.lane.b32.xlu0 %v403, 48
  %v407 = vpop.permute.xlu0 %406
  %v410 = vrot.slane %v189, 7
  %v411 = vrot.slane %v191, 7
  %412 = vrot.lane.b32.xlu0 %v410, 56
  %v413 = vpop.permute.xlu0 %412
  %414 = vrot.lane.b32.xlu0 %v411, 56
  %v415 = vpop.permute.xlu0 %414
  %420 = vrot.lane.b32.xlu0 %v190, 64
  %v421 = vpop.permute.xlu0 %420
  %422 = vrot.lane.b32.xlu0 %v192, 64
  %v423 = vpop.permute.xlu0 %422
  %v426 = vrot.slane %v190, 1
  %v427 = vrot.slane %v192, 1
  %428 = vrot.lane.b32.xlu0 %v426, 72
  %v429 = vpop.permute.xlu0 %428
  %430 = vrot.lane.b32.xlu0 %v427, 72
  %v431 = vpop.permute.xlu0 %430
  %v434 = vrot.slane %v190, 2
  %v435 = vrot.slane %v192, 2
  %436 = vrot.lane.b32.xlu0 %v434, 80
  %v437 = vpop.permute.xlu0 %436
  %438 = vrot.lane.b32.xlu0 %v435, 80
  %v439 = vpop.permute.xlu0 %438
  %v442 = vrot.slane %v190, 3
  %v443 = vrot.slane %v192, 3
  %444 = vrot.lane.b32.xlu0 %v442, 88
  %v445 = vpop.permute.xlu0 %444
  %446 = vrot.lane.b32.xlu0 %v443, 88
  %v447 = vpop.permute.xlu0 %446
  %v450 = vrot.slane %v190, 4
  %v451 = vrot.slane %v192, 4
  %452 = vrot.lane.b32.xlu0 %v450, 96
  %v453 = vpop.permute.xlu0 %452
  %454 = vrot.lane.b32.xlu0 %v451, 96
  %v455 = vpop.permute.xlu0 %454
  %v458 = vrot.slane %v190, 5
  %v459 = vrot.slane %v192, 5
  %460 = vrot.lane.b32.xlu0 %v458, 104
  %v461 = vpop.permute.xlu0 %460
  %462 = vrot.lane.b32.xlu0 %v459, 104
  %v463 = vpop.permute.xlu0 %462
  %v466 = vrot.slane %v190, 6
  %v467 = vrot.slane %v192, 6
  %468 = vrot.lane.b32.xlu0 %v466, 112
  %v469 = vpop.permute.xlu0 %468
  %470 = vrot.lane.b32.xlu0 %v467, 112
  %v471 = vpop.permute.xlu0 %470
  %v474 = vrot.slane %v190, 7
  %v475 = vrot.slane %v192, 7
  %476 = vrot.lane.b32.xlu0 %v474, 120
  %v477 = vpop.permute.xlu0 %476
  %478 = vrot.lane.b32.xlu0 %v475, 120
  %v479 = vpop.permute.xlu0 %478
  %v482 = vsel %vm315, %v189, %v365
  %v483 = vsel %vm315, %v191, %v367
  %v484 = vsel %vm318, %v482, %v373
  %v485 = vsel %vm318, %v483, %v375
  %v486 = vsel %vm321, %v484, %v381
  %v487 = vsel %vm321, %v485, %v383
  %v488 = vsel %vm324, %v486, %v389
  %v489 = vsel %vm324, %v487, %v391
  %v490 = vsel %vm327, %v488, %v397
  %v491 = vsel %vm327, %v489, %v399
  %v492 = vsel %vm330, %v490, %v405
  %v493 = vsel %vm330, %v491, %v407
  %v494 = vsel %vm333, %v492, %v413
  %v495 = vsel %vm333, %v493, %v415
  %v496 = vsel %vm336, %v494, %v421
  %v497 = vsel %vm336, %v495, %v423
  %v498 = vsel %vm339, %v496, %v429
  %v499 = vsel %vm339, %v497, %v431
  %v500 = vsel %vm342, %v498, %v437
  %v501 = vsel %vm342, %v499, %v439
  %v502 = vsel %vm345, %v500, %v445
  %v503 = vsel %vm345, %v501, %v447
  %v504 = vsel %vm348, %v502, %v453
  %v505 = vsel %vm348, %v503, %v455
  %v506 = vsel %vm351, %v504, %v461
  %v507 = vsel %vm351, %v505, %v463
  %v508 = vsel %vm354, %v506, %v469
  %v509 = vsel %vm354, %v507, %v471
  %v510 = vsel %vm357, %v508, %v477
  %v511 = vsel %vm357, %v509, %v479
  %v512 = vld [vmem:[%s1] sm:$0xff]
  %514 = vset.pattern.permute.xlu0 0
  %515 = vperm.xlu0 %514, %v512
  %v516 = vpop.permute.xlu0 %515
  %v518 = vlaneseq
  %v519 = vshrl.u32 %v518, 7
  %v520 = vsub.s32 0, %v519
  %v521 = vrot.slane %v358, %v520
  %v522 = vmul.f32 %v516, %v521
  %v523 = vadd.f32 %v522, 0.0
  %v524 = vlaneseq
  %v525 = vshrl.u32 %v524, 7
  %v526 = vsub.s32 0, %v525
  %v527 = vrot.slane %v510, %v526
  %v528 = vmul.f32 %v516, %v527
  %v529 = vadd.f32 %v528, 0.0
  %530 = vset.pattern.permute.xlu0 1
  %531 = vperm.xlu0 %530, %v512
  %v532 = vpop.permute.xlu0 %531
  %v534 = vmul.f32 %v532, %v527
  %v535 = vadd.f32 %v523, %v534
  %v536 = vmul.f32 %v532, %v521
  %538 = vrot.lane.b32.xlu0 %v536, 127
  %v539 = vpop.permute.xlu0 %538
  %v541 = vadd.f32 %v529, %v539
  %542 = vset.pattern.permute.xlu0 2
  %543 = vperm.xlu0 %542, %v512
  %v544 = vpop.permute.xlu0 %543
  %v546 = vmul.f32 %v544, %v521
  %548 = vrot.lane.b32.xlu0 %v546, 127
  %v549 = vpop.permute.xlu0 %548
  %v551 = vadd.f32 %v535, %v549
  %v552 = vmul.f32 %v544, %v527
  %554 = vrot.lane.b32.xlu0 %v552, 127
  %v555 = vpop.permute.xlu0 %554
  %v557 = vadd.f32 %v541, %v555
  %558 = vset.pattern.permute.xlu0 3
  %559 = vperm.xlu0 %558, %v512
  %v560 = vpop.permute.xlu0 %559
  %v562 = vmul.f32 %v560, %v521
  %564 = vrot.lane.b32.xlu0 %v562, 120
  %v565 = vpop.permute.xlu0 %564
  %v567 = vadd.f32 %v551, %v565
  %v568 = vmul.f32 %v560, %v527
  %570 = vrot.lane.b32.xlu0 %v568, 120
  %v571 = vpop.permute.xlu0 %570
  %v573 = vadd.f32 %v557, %v571
  %574 = vset.pattern.permute.xlu0 4
  %575 = vperm.xlu0 %574, %v512
  %v576 = vpop.permute.xlu0 %575
  %v578 = vmul.f32 %v576, %v527
  %580 = vrot.lane.b32.xlu0 %v578, 120
  %v581 = vpop.permute.xlu0 %580
  %v583 = vadd.f32 %v567, %v581
  %v584 = vmul.f32 %v576, %v521
  %586 = vrot.lane.b32.xlu0 %v584, 119
  %v587 = vpop.permute.xlu0 %586
  %v589 = vadd.f32 %v573, %v587
  %590 = vset.pattern.permute.xlu0 5
  %591 = vperm.xlu0 %590, %v512
  %v592 = vpop.permute.xlu0 %591
  %v594 = vmul.f32 %v592, %v521
  %596 = vrot.lane.b32.xlu0 %v594, 119
  %v597 = vpop.permute.xlu0 %596
  %v599 = vadd.f32 %v583, %v597
  %v600 = vmul.f32 %v592, %v527
  %602 = vrot.lane.b32.xlu0 %v600, 119
  %v603 = vpop.permute.xlu0 %602
  %v605 = vadd.f32 %v589, %v603
  %606 = vset.pattern.permute.xlu0 6
  %607 = vperm.xlu0 %606, %v512
  %v608 = vpop.permute.xlu0 %607
  %v610 = vmul.f32 %v608, %v521
  %612 = vrot.lane.b32.xlu0 %v610, 112
  %v613 = vpop.permute.xlu0 %612
  %v615 = vadd.f32 %v599, %v613
  %v616 = vmul.f32 %v608, %v527
  %618 = vrot.lane.b32.xlu0 %v616, 112
  %v619 = vpop.permute.xlu0 %618
  %v621 = vadd.f32 %v605, %v619
  %622 = vset.pattern.permute.xlu0 7
  %623 = vperm.xlu0 %622, %v512
  %v624 = vpop.permute.xlu0 %623
  %v626 = vmul.f32 %v624, %v527
  %628 = vrot.lane.b32.xlu0 %v626, 112
  %v629 = vpop.permute.xlu0 %628
  %v631 = vadd.f32 %v615, %v629
  %v632 = vlaneseq
  %v633 = vshrl.u32 %v632, 7
  %v634 = vsub.s32 0, %v633
  %v635 = vmul.f32 %v624, %v521
  %v636 = vmul.f32 %v624, 0.0
  %639 = vrot.lane.b32.xlu0 %v635, 111
  %v640 = vpop.permute.xlu0 %639
  %641 = vrot.lane.b32.xlu0 %v636, 111
  %v642 = vpop.permute.xlu0 %641
  %vm643 = vcmask 908288
  %v644 = vsel %vm643, %v640, %v642
  %v646 = vadd.f32 %v621, %v644
  %647 = vset.pattern.permute.xlu0 8
  %648 = vperm.xlu0 %647, %v512
  %v649 = vpop.permute.xlu0 %648
  %v651 = vmul.f32 %v649, %v521
  %v652 = vmul.f32 %v649, 0.0
  %655 = vrot.lane.b32.xlu0 %v651, 111
  %v656 = vpop.permute.xlu0 %655
  %657 = vrot.lane.b32.xlu0 %v652, 111
  %v658 = vpop.permute.xlu0 %657
  %v659 = vsel %vm643, %v656, %v658
  %v661 = vadd.f32 %v631, %v659
  %v662 = vmul.f32 %v649, %v527
  %664 = vrot.lane.b32.xlu0 %v662, 111
  %v665 = vpop.permute.xlu0 %664
  %v666 = vsel %vm643, %v665, %v658
  %v668 = vadd.f32 %v646, %v666
  %v669 = vld [vmem:[%s2] sm:$0xff]
  %671 = vset.pattern.permute.xlu0 0
  %672 = vperm.xlu0 %671, %v669
  %v673 = vpop.permute.xlu0 %672
  %v675 = vadd.f32 %v661, %v673
  %v676 = vadd.f32 %v668, %v673
  %vm677 = vcmp.ge.f32.partialorder %v675, 0.0
  %v678 = vmul.f32 %v675, 0.01
  %v679 = vsel %vm677, %v675, %v678
  %vm680 = vcmp.ge.f32.partialorder %v676, 0.0
  %v681 = vmul.f32 %v676, 0.01
  %v682 = vsel %vm680, %v676, %v681
  %v683 = vadd.f32 %v679, %v682
  %v684 = vmul.f32 %v683, 0.5
  %686 = vrot.lane.b32.xlu0 %v684, 127
  %v687 = vpop.permute.xlu0 %686
  %689 = vrot.lane.b32.xlu0 %v684, 126
  %v690 = vpop.permute.xlu0 %689
  %692 = vrot.lane.b32.xlu0 %v684, 125
  %v693 = vpop.permute.xlu0 %692
  %695 = vrot.lane.b32.xlu0 %v684, 124
  %v696 = vpop.permute.xlu0 %695
  %698 = vrot.lane.b32.xlu0 %v684, 123
  %v699 = vpop.permute.xlu0 %698
  %701 = vrot.lane.b32.xlu0 %v684, 122
  %v702 = vpop.permute.xlu0 %701
  %704 = vrot.lane.b32.xlu0 %v684, 121
  %v705 = vpop.permute.xlu0 %704
  %707 = vrot.lane.b32.xlu0 %v684, 120
  %v708 = vpop.permute.xlu0 %707
  %710 = vrot.lane.b32.xlu0 %v684, 119
  %v711 = vpop.permute.xlu0 %710
  %713 = vrot.lane.b32.xlu0 %v684, 118
  %v714 = vpop.permute.xlu0 %713
  %716 = vrot.lane.b32.xlu0 %v684, 117
  %v717 = vpop.permute.xlu0 %716
  %719 = vrot.lane.b32.xlu0 %v684, 116
  %v720 = vpop.permute.xlu0 %719
  %722 = vrot.lane.b32.xlu0 %v684, 115
  %v723 = vpop.permute.xlu0 %722
  %v725 = vsel %vm148, %v684, %v687
  %vm726 = vcmask 113664
  %v727 = vsel %vm726, %v725, %v690
  %vm728 = vcmask 171008
  %v729 = vsel %vm728, %v727, %v693
  %vm730 = vcmask 228352
  %v731 = vsel %vm730, %v729, %v696
  %vm732 = vcmask 285696
  %v733 = vsel %vm732, %v731, %v699
  %vm734 = vcmask 343040
  %v735 = vsel %vm734, %v733, %v702
  %vm736 = vcmask 400384
  %v737 = vsel %vm736, %v735, %v705
  %v738 = vsel %vm333, %v737, %v708
  %vm739 = vcmask 515072
  %v740 = vsel %vm739, %v738, %v711
  %vm741 = vcmask 572416
  %v742 = vsel %vm741, %v740, %v714
  %vm743 = vcmask 629760
  %v744 = vsel %vm743, %v742, %v717
  %vm745 = vcmask 687104
  %v746 = vsel %vm745, %v744, %v720
  %vm747 = vcmask 744448
  %v748 = vsel %vm747, %v746, %v723
  %v749 = vld [vmem:[%s3] sm:$0xff]
  %751 = vset.pattern.permute.xlu0 0
  %752 = vperm.xlu0 %751, %v749
  %v753 = vpop.permute.xlu0 %752
  %v755 = vmul.f32 %v753, %v521
  %v756 = vadd.f32 %v755, 0.0
  %v757 = vmul.f32 %v753, %v527
  %v758 = vadd.f32 %v757, 0.0
  %759 = vset.pattern.permute.xlu0 1
  %760 = vperm.xlu0 %759, %v749
  %v761 = vpop.permute.xlu0 %760
  %v763 = vmul.f32 %v761, %v527
  %v764 = vadd.f32 %v756, %v763
  %v765 = vmul.f32 %v761, %v521
  %767 = vrot.lane.b32.xlu0 %v765, 127
  %v768 = vpop.permute.xlu0 %767
  %v770 = vadd.f32 %v758, %v768
  %771 = vset.pattern.permute.xlu0 2
  %772 = vperm.xlu0 %771, %v749
  %v773 = vpop.permute.xlu0 %772
  %v775 = vmul.f32 %v773, %v521
  %777 = vrot.lane.b32.xlu0 %v775, 127
  %v778 = vpop.permute.xlu0 %777
  %v780 = vadd.f32 %v764, %v778
  %v781 = vmul.f32 %v773, %v527
  %783 = vrot.lane.b32.xlu0 %v781, 127
  %v784 = vpop.permute.xlu0 %783
  %v786 = vadd.f32 %v770, %v784
  %787 = vset.pattern.permute.xlu0 3
  %788 = vperm.xlu0 %787, %v749
  %v789 = vpop.permute.xlu0 %788
  %v791 = vmul.f32 %v789, %v527
  %793 = vrot.lane.b32.xlu0 %v791, 127
  %v794 = vpop.permute.xlu0 %793
  %v796 = vadd.f32 %v780, %v794
  %v797 = vmul.f32 %v789, %v521
  %799 = vrot.lane.b32.xlu0 %v797, 126
  %v800 = vpop.permute.xlu0 %799
  %v802 = vadd.f32 %v786, %v800
  %803 = vset.pattern.permute.xlu0 4
  %804 = vperm.xlu0 %803, %v749
  %v805 = vpop.permute.xlu0 %804
  %v807 = vmul.f32 %v805, %v521
  %809 = vrot.lane.b32.xlu0 %v807, 126
  %v810 = vpop.permute.xlu0 %809
  %v812 = vadd.f32 %v796, %v810
  %v813 = vmul.f32 %v805, %v527
  %815 = vrot.lane.b32.xlu0 %v813, 126
  %v816 = vpop.permute.xlu0 %815
  %v818 = vadd.f32 %v802, %v816
  %819 = vset.pattern.permute.xlu0 5
  %820 = vperm.xlu0 %819, %v749
  %v821 = vpop.permute.xlu0 %820
  %v823 = vmul.f32 %v821, %v521
  %825 = vrot.lane.b32.xlu0 %v823, 120
  %v826 = vpop.permute.xlu0 %825
  %v828 = vadd.f32 %v812, %v826
  %v829 = vmul.f32 %v821, %v527
  %831 = vrot.lane.b32.xlu0 %v829, 120
  %v832 = vpop.permute.xlu0 %831
  %v834 = vadd.f32 %v818, %v832
  %835 = vset.pattern.permute.xlu0 6
  %836 = vperm.xlu0 %835, %v749
  %v837 = vpop.permute.xlu0 %836
  %v839 = vmul.f32 %v837, %v527
  %841 = vrot.lane.b32.xlu0 %v839, 120
  %v842 = vpop.permute.xlu0 %841
  %v844 = vadd.f32 %v828, %v842
  %v845 = vmul.f32 %v837, %v521
  %847 = vrot.lane.b32.xlu0 %v845, 119
  %v848 = vpop.permute.xlu0 %847
  %v850 = vadd.f32 %v834, %v848
  %851 = vset.pattern.permute.xlu0 7
  %852 = vperm.xlu0 %851, %v749
  %v853 = vpop.permute.xlu0 %852
  %v855 = vmul.f32 %v853, %v521
  %857 = vrot.lane.b32.xlu0 %v855, 119
  %v858 = vpop.permute.xlu0 %857
  %v860 = vadd.f32 %v844, %v858
  %v861 = vmul.f32 %v853, %v527
  %863 = vrot.lane.b32.xlu0 %v861, 119
  %v864 = vpop.permute.xlu0 %863
  %v866 = vadd.f32 %v850, %v864
  %867 = vset.pattern.permute.xlu0 8
  %868 = vperm.xlu0 %867, %v749
  %v869 = vpop.permute.xlu0 %868
  %v871 = vmul.f32 %v869, %v527
  %873 = vrot.lane.b32.xlu0 %v871, 119
  %v874 = vpop.permute.xlu0 %873
  %v876 = vadd.f32 %v860, %v874
  %v877 = vmul.f32 %v869, %v521
  %879 = vrot.lane.b32.xlu0 %v877, 118
  %v880 = vpop.permute.xlu0 %879
  %v882 = vadd.f32 %v866, %v880
  %883 = vset.pattern.permute.xlu0 9
  %884 = vperm.xlu0 %883, %v749
  %v885 = vpop.permute.xlu0 %884
  %v887 = vmul.f32 %v885, %v521
  %889 = vrot.lane.b32.xlu0 %v887, 118
  %v890 = vpop.permute.xlu0 %889
  %v892 = vadd.f32 %v876, %v890
  %v893 = vmul.f32 %v885, %v527
  %895 = vrot.lane.b32.xlu0 %v893, 118
  %v896 = vpop.permute.xlu0 %895
  %v898 = vadd.f32 %v882, %v896
  %899 = vset.pattern.permute.xlu0 10
  %900 = vperm.xlu0 %899, %v749
  %v901 = vpop.permute.xlu0 %900
  %v903 = vmul.f32 %v901, %v521
  %905 = vrot.lane.b32.xlu0 %v903, 112
  %v906 = vpop.permute.xlu0 %905
  %v908 = vadd.f32 %v892, %v906
  %v909 = vmul.f32 %v901, %v527
  %911 = vrot.lane.b32.xlu0 %v909, 112
  %v912 = vpop.permute.xlu0 %911
  %v914 = vadd.f32 %v898, %v912
  %915 = vset.pattern.permute.xlu0 11
  %916 = vperm.xlu0 %915, %v749
  %v917 = vpop.permute.xlu0 %916
  %v919 = vmul.f32 %v917, %v527
  %921 = vrot.lane.b32.xlu0 %v919, 112
  %v922 = vpop.permute.xlu0 %921
  %v924 = vadd.f32 %v908, %v922
  %v925 = vmul.f32 %v917, %v521
  %927 = vrot.lane.b32.xlu0 %v925, 111
  %v928 = vpop.permute.xlu0 %927
  %v930 = vadd.f32 %v914, %v928
  %931 = vset.pattern.permute.xlu0 12
  %932 = vperm.xlu0 %931, %v749
  %v933 = vpop.permute.xlu0 %932
  %v935 = vmul.f32 %v933, %v521
  %937 = vrot.lane.b32.xlu0 %v935, 111
  %v938 = vpop.permute.xlu0 %937
  %v940 = vadd.f32 %v924, %v938
  %v941 = vmul.f32 %v933, %v527
  %943 = vrot.lane.b32.xlu0 %v941, 111
  %v944 = vpop.permute.xlu0 %943
  %v946 = vadd.f32 %v930, %v944
  %947 = vset.pattern.permute.xlu0 13
  %948 = vperm.xlu0 %947, %v749
  %v949 = vpop.permute.xlu0 %948
  %v951 = vmul.f32 %v949, %v527
  %953 = vrot.lane.b32.xlu0 %v951, 111
  %v954 = vpop.permute.xlu0 %953
  %v956 = vadd.f32 %v940, %v954
  %v957 = vmul.f32 %v949, %v521
  %959 = vrot.lane.b32.xlu0 %v957, 110
  %v960 = vpop.permute.xlu0 %959
  %v962 = vadd.f32 %v946, %v960
  %963 = vset.pattern.permute.xlu0 14
  %964 = vperm.xlu0 %963, %v749
  %v965 = vpop.permute.xlu0 %964
  %v967 = vmul.f32 %v965, %v521
  %969 = vrot.lane.b32.xlu0 %v967, 110
  %v970 = vpop.permute.xlu0 %969
  %v972 = vadd.f32 %v956, %v970
  %v973 = vmul.f32 %v965, %v527
  %975 = vrot.lane.b32.xlu0 %v973, 110
  %v976 = vpop.permute.xlu0 %975
  %v978 = vadd.f32 %v962, %v976
  %979 = vset.pattern.permute.xlu0 15
  %980 = vperm.xlu0 %979, %v749
  %v981 = vpop.permute.xlu0 %980
  %v983 = vmul.f32 %v981, %v521
  %985 = vrot.lane.b32.xlu0 %v983, 104
  %v986 = vpop.permute.xlu0 %985
  %v988 = vadd.f32 %v972, %v986
  %v989 = vmul.f32 %v981, %v527
  %991 = vrot.lane.b32.xlu0 %v989, 104
  %v992 = vpop.permute.xlu0 %991
  %v994 = vadd.f32 %v978, %v992
  %995 = vset.pattern.permute.xlu0 16
  %996 = vperm.xlu0 %995, %v749
  %v997 = vpop.permute.xlu0 %996
  %v999 = vmul.f32 %v997, %v527
  %1001 = vrot.lane.b32.xlu0 %v999, 104
  %v1002 = vpop.permute.xlu0 %1001
  %v1004 = vadd.f32 %v988, %v1002
  %v1005 = vmul.f32 %v997, %v521
  %1007 = vrot.lane.b32.xlu0 %v1005, 103
  %v1008 = vpop.permute.xlu0 %1007
  %v1010 = vadd.f32 %v994, %v1008
  %1011 = vset.pattern.permute.xlu0 17
  %1012 = vperm.xlu0 %1011, %v749
  %v1013 = vpop.permute.xlu0 %1012
  %v1015 = vmul.f32 %v1013, %v521
  %1017 = vrot.lane.b32.xlu0 %v1015, 103
  %v1018 = vpop.permute.xlu0 %1017
  %v1020 = vadd.f32 %v1004, %v1018
  %v1021 = vmul.f32 %v1013, %v527
  %1023 = vrot.lane.b32.xlu0 %v1021, 103
  %v1024 = vpop.permute.xlu0 %1023
  %v1026 = vadd.f32 %v1010, %v1024
  %1027 = vset.pattern.permute.xlu0 18
  %1028 = vperm.xlu0 %1027, %v749
  %v1029 = vpop.permute.xlu0 %1028
  %v1031 = vmul.f32 %v1029, %v527
  %1033 = vrot.lane.b32.xlu0 %v1031, 103
  %v1034 = vpop.permute.xlu0 %1033
  %v1036 = vadd.f32 %v1020, %v1034
  %v1037 = vmul.f32 %v1029, %v521
  %1039 = vrot.lane.b32.xlu0 %v1037, 102
  %v1040 = vpop.permute.xlu0 %1039
  %v1042 = vadd.f32 %v1026, %v1040
  %1043 = vset.pattern.permute.xlu0 19
  %1044 = vperm.xlu0 %1043, %v749
  %v1045 = vpop.permute.xlu0 %1044
  %v1047 = vmul.f32 %v1045, %v521
  %1049 = vrot.lane.b32.xlu0 %v1047, 102
  %v1050 = vpop.permute.xlu0 %1049
  %v1052 = vadd.f32 %v1036, %v1050
  %v1053 = vmul.f32 %v1045, %v527
  %1055 = vrot.lane.b32.xlu0 %v1053, 102
  %v1056 = vpop.permute.xlu0 %1055
  %v1058 = vadd.f32 %v1042, %v1056
  %1059 = vset.pattern.permute.xlu0 20
  %1060 = vperm.xlu0 %1059, %v749
  %v1061 = vpop.permute.xlu0 %1060
  %v1063 = vmul.f32 %v1061, %v521
  %1065 = vrot.lane.b32.xlu0 %v1063, 96
  %v1066 = vpop.permute.xlu0 %1065
  %v1068 = vadd.f32 %v1052, %v1066
  %v1069 = vmul.f32 %v1061, %v527
  %1071 = vrot.lane.b32.xlu0 %v1069, 96
  %v1072 = vpop.permute.xlu0 %1071
  %v1074 = vadd.f32 %v1058, %v1072
  %1075 = vset.pattern.permute.xlu0 21
  %1076 = vperm.xlu0 %1075, %v749
  %v1077 = vpop.permute.xlu0 %1076
  %v1079 = vmul.f32 %v1077, %v527
  %1081 = vrot.lane.b32.xlu0 %v1079, 96
  %v1082 = vpop.permute.xlu0 %1081
  %v1084 = vadd.f32 %v1068, %v1082
  %v1085 = vmul.f32 %v1077, %v521
  %v1086 = vmul.f32 %v1077, 0.0
  %1089 = vrot.lane.b32.xlu0 %v1085, 95
  %v1090 = vpop.permute.xlu0 %1089
  %1091 = vrot.lane.b32.xlu0 %v1086, 95
  %v1092 = vpop.permute.xlu0 %1091
  %vm1093 = vcmask 777216
  %v1094 = vsel %vm1093, %v1090, %v1092
  %v1096 = vadd.f32 %v1074, %v1094
  %1097 = vset.pattern.permute.xlu0 22
  %1098 = vperm.xlu0 %1097, %v749
  %v1099 = vpop.permute.xlu0 %1098
  %v1101 = vmul.f32 %v1099, %v521
  %v1102 = vmul.f32 %v1099, 0.0
  %1105 = vrot.lane.b32.xlu0 %v1101, 95
  %v1106 = vpop.permute.xlu0 %1105
  %1107 = vrot.lane.b32.xlu0 %v1102, 95
  %v1108 = vpop.permute.xlu0 %1107
  %v1109 = vsel %vm1093, %v1106, %v1108
  %v1111 = vadd.f32 %v1084, %v1109
  %v1112 = vmul.f32 %v1099, %v527
  %1114 = vrot.lane.b32.xlu0 %v1112, 95
  %v1115 = vpop.permute.xlu0 %1114
  %v1116 = vsel %vm1093, %v1115, %v1108
  %v1118 = vadd.f32 %v1096, %v1116
  %1119 = vset.pattern.permute.xlu0 23
  %1120 = vperm.xlu0 %1119, %v749
  %v1121 = vpop.permute.xlu0 %1120
  %v1123 = vmul.f32 %v1121, %v527
  %v1124 = vmul.f32 %v1121, 0.0
  %1127 = vrot.lane.b32.xlu0 %v1123, 95
  %v1128 = vpop.permute.xlu0 %1127
  %1129 = vrot.lane.b32.xlu0 %v1124, 95
  %v1130 = vpop.permute.xlu0 %1129
  %v1131 = vsel %vm1093, %v1128, %v1130
  %v1133 = vadd.f32 %v1111, %v1131
  %v1134 = vmul.f32 %v1121, %v521
  %1136 = vrot.lane.b32.xlu0 %v1134, 94
  %v1137 = vpop.permute.xlu0 %1136
  %1138 = vrot.lane.b32.xlu0 %v1124, 94
  %v1139 = vpop.permute.xlu0 %1138
  %vm1140 = vcmask 769024
  %v1141 = vsel %vm1140, %v1137, %v1139
  %v1143 = vadd.f32 %v1118, %v1141
  %1144 = vset.pattern.permute.xlu0 24
  %1145 = vperm.xlu0 %1144, %v749
  %v1146 = vpop.permute.xlu0 %1145
  %v1148 = vmul.f32 %v1146, %v521
  %v1149 = vmul.f32 %v1146, 0.0
  %1152 = vrot.lane.b32.xlu0 %v1148, 94
  %v1153 = vpop.permute.xlu0 %1152
  %1154 = vrot.lane.b32.xlu0 %v1149, 94
  %v1155 = vpop.permute.xlu0 %1154
  %v1156 = vsel %vm1140, %v1153, %v1155
  %v1158 = vadd.f32 %v1133, %v1156
  %v1159 = vmul.f32 %v1146, %v527
  %1161 = vrot.lane.b32.xlu0 %v1159, 94
  %v1162 = vpop.permute.xlu0 %1161
  %v1163 = vsel %vm1140, %v1162, %v1155
  %v1165 = vadd.f32 %v1143, %v1163
  %v1166 = vld [vmem:[%s4] sm:$0xff]
  %1168 = vset.pattern.permute.xlu0 0
  %1169 = vperm.xlu0 %1168, %v1166
  %v1170 = vpop.permute.xlu0 %1169
  %v1172 = vadd.f32 %v1158, %v1170
  %v1173 = vadd.f32 %v1165, %v1170
  %vm1174 = vcmp.ge.f32.partialorder %v1172, 0.0
  %v1175 = vmul.f32 %v1172, 0.01
  %v1176 = vsel %vm1174, %v1172, %v1175
  %vm1177 = vcmp.ge.f32.partialorder %v1173, 0.0
  %v1178 = vmul.f32 %v1173, 0.01
  %v1179 = vsel %vm1177, %v1173, %v1178
  %v1180 = vadd.f32 %v1176, %v1179
  %v1181 = vmul.f32 %v1180, 0.5
  %1183 = vrot.lane.b32.xlu0 %v1181, 126
  %v1184 = vpop.permute.xlu0 %1183
  %1186 = vrot.lane.b32.xlu0 %v1181, 124
  %v1187 = vpop.permute.xlu0 %1186
  %1189 = vrot.lane.b32.xlu0 %v1181, 122
  %v1190 = vpop.permute.xlu0 %1189
  %1192 = vrot.lane.b32.xlu0 %v1181, 120
  %v1193 = vpop.permute.xlu0 %1192
  %1195 = vrot.lane.b32.xlu0 %v1181, 118
  %v1196 = vpop.permute.xlu0 %1195
  %1198 = vrot.lane.b32.xlu0 %v1181, 116
  %v1199 = vpop.permute.xlu0 %1198
  %1201 = vrot.lane.b32.xlu0 %v1181, 114
  %v1202 = vpop.permute.xlu0 %1201
  %1204 = vrot.lane.b32.xlu0 %v1181, 112
  %v1205 = vpop.permute.xlu0 %1204
  %1207 = vrot.lane.b32.xlu0 %v1181, 110
  %v1208 = vpop.permute.xlu0 %1207
  %1210 = vrot.lane.b32.xlu0 %v1181, 108
  %v1211 = vpop.permute.xlu0 %1210
  %1213 = vrot.lane.b32.xlu0 %v1181, 106
  %v1214 = vpop.permute.xlu0 %1213
  %v1216 = vsel %vm143, %v1181, %v1184
  %vm1217 = vcmask 97280
  %v1218 = vsel %vm1217, %v1216, %v1187
  %vm1219 = vcmask 146432
  %v1220 = vsel %vm1219, %v1218, %v1190
  %v1221 = vsel %vm321, %v1220, %v1193
  %vm1222 = vcmask 244736
  %v1223 = vsel %vm1222, %v1221, %v1196
  %vm1224 = vcmask 293888
  %v1225 = vsel %vm1224, %v1223, %v1199
  %v1226 = vsel %vm734, %v1225, %v1202
  %v1227 = vsel %vm330, %v1226, %v1205
  %vm1228 = vcmask 441344
  %v1229 = vsel %vm1228, %v1227, %v1208
  %vm1230 = vcmask 490496
  %v1231 = vsel %vm1230, %v1229, %v1211
  %vm1232 = vcmask 539648
  %v1233 = vsel %vm1232, %v1231, %v1214
  %1235 = vrot.lane.b32.xlu0 %v1233, 98
  %v1236 = vpop.permute.xlu0 %1235
  %vm1238 = vcmask 801792
  %v1239 = vsel %vm1238, %v748, %v1236
  %v1240 = vlaneseq
  %v1241 = vshrl.u32 %v1240, 7
  %v1242 = vsub.s32 0, %v1241
  %v1243 = vrot.slane %v359, %v1242
  %v1244 = vmul.f32 %v516, %v1243
  %v1245 = vadd.f32 %v1244, 0.0
  %v1246 = vlaneseq
  %v1247 = vshrl.u32 %v1246, 7
  %v1248 = vsub.s32 0, %v1247
  %v1249 = vrot.slane %v511, %v1248
  %v1250 = vmul.f32 %v516, %v1249
  %v1251 = vadd.f32 %v1250, 0.0
  %v1252 = vmul.f32 %v532, %v1249
  %v1253 = vadd.f32 %v1245, %v1252
  %v1254 = vmul.f32 %v532, %v1243
  %1256 = vrot.lane.b32.xlu0 %v1254, 127
  %v1257 = vpop.permute.xlu0 %1256
  %v1259 = vadd.f32 %v1251, %v1257
  %v1260 = vmul.f32 %v544, %v1243
  %1262 = vrot.lane.b32.xlu0 %v1260, 127
  %v1263 = vpop.permute.xlu0 %1262
  %v1265 = vadd.f32 %v1253, %v1263
  %v1266 = vmul.f32 %v544, %v1249
  %1268 = vrot.lane.b32.xlu0 %v1266, 127
  %v1269 = vpop.permute.xlu0 %1268
  %v1271 = vadd.f32 %v1259, %v1269
  %v1272 = vmul.f32 %v560, %v1243
  %1274 = vrot.lane.b32.xlu0 %v1272, 120
  %v1275 = vpop.permute.xlu0 %1274
  %v1277 = vadd.f32 %v1265, %v1275
  %v1278 = vmul.f32 %v560, %v1249
  %1280 = vrot.lane.b32.xlu0 %v1278, 120
  %v1281 = vpop.permute.xlu0 %1280
  %v1283 = vadd.f32 %v1271, %v1281
  %v1284 = vmul.f32 %v576, %v1249
  %1286 = vrot.lane.b32.xlu0 %v1284, 120
  %v1287 = vpop.permute.xlu0 %1286
  %v1289 = vadd.f32 %v1277, %v1287
  %v1290 = vmul.f32 %v576, %v1243
  %1292 = vrot.lane.b32.xlu0 %v1290, 119
  %v1293 = vpop.permute.xlu0 %1292
  %v1295 = vadd.f32 %v1283, %v1293
  %v1296 = vmul.f32 %v592, %v1243
  %1298 = vrot.lane.b32.xlu0 %v1296, 119
  %v1299 = vpop.permute.xlu0 %1298
  %v1301 = vadd.f32 %v1289, %v1299
  %v1302 = vmul.f32 %v592, %v1249
  %1304 = vrot.lane.b32.xlu0 %v1302, 119
  %v1305 = vpop.permute.xlu0 %1304
  %v1307 = vadd.f32 %v1295, %v1305
  %v1308 = vmul.f32 %v608, %v1243
  %1310 = vrot.lane.b32.xlu0 %v1308, 112
  %v1311 = vpop.permute.xlu0 %1310
  %v1313 = vadd.f32 %v1301, %v1311
  %v1314 = vmul.f32 %v608, %v1249
  %1316 = vrot.lane.b32.xlu0 %v1314, 112
  %v1317 = vpop.permute.xlu0 %1316
  %v1319 = vadd.f32 %v1307, %v1317
  %v1320 = vmul.f32 %v624, %v1249
  %1322 = vrot.lane.b32.xlu0 %v1320, 112
  %v1323 = vpop.permute.xlu0 %1322
  %v1325 = vadd.f32 %v1313, %v1323
  %v1326 = vmul.f32 %v624, %v1243
  %1328 = vrot.lane.b32.xlu0 %v1326, 111
  %v1329 = vpop.permute.xlu0 %1328
  %v1330 = vsel %vm643, %v1329, %v642
  %v1332 = vadd.f32 %v1319, %v1330
  %v1333 = vmul.f32 %v649, %v1243
  %1335 = vrot.lane.b32.xlu0 %v1333, 111
  %v1336 = vpop.permute.xlu0 %1335
  %v1337 = vsel %vm643, %v1336, %v658
  %v1339 = vadd.f32 %v1325, %v1337
  %v1340 = vmul.f32 %v649, %v1249
  %1342 = vrot.lane.b32.xlu0 %v1340, 111
  %v1343 = vpop.permute.xlu0 %1342
  %v1344 = vsel %vm643, %v1343, %v658
  %v1346 = vadd.f32 %v1332, %v1344
  %v1347 = vadd.f32 %v1339, %v673
  %v1348 = vadd.f32 %v1346, %v673
  %vm1349 = vcmp.ge.f32.partialorder %v1347, 0.0
  %v1350 = vmul.f32 %v1347, 0.01
  %v1351 = vsel %vm1349, %v1347, %v1350
  %vm1352 = vcmp.ge.f32.partialorder %v1348, 0.0
  %v1353 = vmul.f32 %v1348, 0.01
  %v1354 = vsel %vm1352, %v1348, %v1353
  %v1355 = vadd.f32 %v1351, %v1354
  %v1356 = vmul.f32 %v1355, 0.5
  %1358 = vrot.lane.b32.xlu0 %v1356, 127
  %v1359 = vpop.permute.xlu0 %1358
  %1361 = vrot.lane.b32.xlu0 %v1356, 126
  %v1362 = vpop.permute.xlu0 %1361
  %1364 = vrot.lane.b32.xlu0 %v1356, 125
  %v1365 = vpop.permute.xlu0 %1364
  %1367 = vrot.lane.b32.xlu0 %v1356, 124
  %v1368 = vpop.permute.xlu0 %1367
  %1370 = vrot.lane.b32.xlu0 %v1356, 123
  %v1371 = vpop.permute.xlu0 %1370
  %1373 = vrot.lane.b32.xlu0 %v1356, 122
  %v1374 = vpop.permute.xlu0 %1373
  %1376 = vrot.lane.b32.xlu0 %v1356, 121
  %v1377 = vpop.permute.xlu0 %1376
  %1379 = vrot.lane.b32.xlu0 %v1356, 120
  %v1380 = vpop.permute.xlu0 %1379
  %1382 = vrot.lane.b32.xlu0 %v1356, 119
  %v1383 = vpop.permute.xlu0 %1382
  %1385 = vrot.lane.b32.xlu0 %v1356, 118
  %v1386 = vpop.permute.xlu0 %1385
  %1388 = vrot.lane.b32.xlu0 %v1356, 117
  %v1389 = vpop.permute.xlu0 %1388
  %1391 = vrot.lane.b32.xlu0 %v1356, 116
  %v1392 = vpop.permute.xlu0 %1391
  %1394 = vrot.lane.b32.xlu0 %v1356, 115
  %v1395 = vpop.permute.xlu0 %1394
  %v1397 = vsel %vm148, %v1356, %v1359
  %v1398 = vsel %vm726, %v1397, %v1362
  %v1399 = vsel %vm728, %v1398, %v1365
  %v1400 = vsel %vm730, %v1399, %v1368
  %v1401 = vsel %vm732, %v1400, %v1371
  %v1402 = vsel %vm734, %v1401, %v1374
  %v1403 = vsel %vm736, %v1402, %v1377
  %v1404 = vsel %vm333, %v1403, %v1380
  %v1405 = vsel %vm739, %v1404, %v1383
  %v1406 = vsel %vm741, %v1405, %v1386
  %v1407 = vsel %vm743, %v1406, %v1389
  %v1408 = vsel %vm745, %v1407, %v1392
  %v1409 = vsel %vm747, %v1408, %v1395
  %v1410 = vmul.f32 %v753, %v1243
  %v1411 = vadd.f32 %v1410, 0.0
  %v1412 = vmul.f32 %v753, %v1249
  %v1413 = vadd.f32 %v1412, 0.0
  %v1414 = vmul.f32 %v761, %v1249
  %v1415 = vadd.f32 %v1411, %v1414
  %v1416 = vmul.f32 %v761, %v1243
  %1418 = vrot.lane.b32.xlu0 %v1416, 127
  %v1419 = vpop.permute.xlu0 %1418
  %v1421 = vadd.f32 %v1413, %v1419
  %v1422 = vmul.f32 %v773, %v1243
  %1424 = vrot.lane.b32.xlu0 %v1422, 127
  %v1425 = vpop.permute.xlu0 %1424
  %v1427 = vadd.f32 %v1415, %v1425
  %v1428 = vmul.f32 %v773, %v1249
  %1430 = vrot.lane.b32.xlu0 %v1428, 127
  %v1431 = vpop.permute.xlu0 %1430
  %v1433 = vadd.f32 %v1421, %v1431
  %v1434 = vmul.f32 %v789, %v1249
  %1436 = vrot.lane.b32.xlu0 %v1434, 127
  %v1437 = vpop.permute.xlu0 %1436
  %v1439 = vadd.f32 %v1427, %v1437
  %v1440 = vmul.f32 %v789, %v1243
  %1442 = vrot.lane.b32.xlu0 %v1440, 126
  %v1443 = vpop.permute.xlu0 %1442
  %v1445 = vadd.f32 %v1433, %v1443
  %v1446 = vmul.f32 %v805, %v1243
  %1448 = vrot.lane.b32.xlu0 %v1446, 126
  %v1449 = vpop.permute.xlu0 %1448
  %v1451 = vadd.f32 %v1439, %v1449
  %v1452 = vmul.f32 %v805, %v1249
  %1454 = vrot.lane.b32.xlu0 %v1452, 126
  %v1455 = vpop.permute.xlu0 %1454
  %v1457 = vadd.f32 %v1445, %v1455
  %v1458 = vmul.f32 %v821, %v1243
  %1460 = vrot.lane.b32.xlu0 %v1458, 120
  %v1461 = vpop.permute.xlu0 %1460
  %v1463 = vadd.f32 %v1451, %v1461
  %v1464 = vmul.f32 %v821, %v1249
  %1466 = vrot.lane.b32.xlu0 %v1464, 120
  %v1467 = vpop.permute.xlu0 %1466
  %v1469 = vadd.f32 %v1457, %v1467
  %v1470 = vmul.f32 %v837, %v1249
  %1472 = vrot.lane.b32.xlu0 %v1470, 120
  %v1473 = vpop.permute.xlu0 %1472
  %v1475 = vadd.f32 %v1463, %v1473
  %v1476 = vmul.f32 %v837, %v1243
  %1478 = vrot.lane.b32.xlu0 %v1476, 119
  %v1479 = vpop.permute.xlu0 %1478
  %v1481 = vadd.f32 %v1469, %v1479
  %v1482 = vmul.f32 %v853, %v1243
  %1484 = vrot.lane.b32.xlu0 %v1482, 119
  %v1485 = vpop.permute.xlu0 %1484
  %v1487 = vadd.f32 %v1475, %v1485
  %v1488 = vmul.f32 %v853, %v1249
  %1490 = vrot.lane.b32.xlu0 %v1488, 119
  %v1491 = vpop.permute.xlu0 %1490
  %v1493 = vadd.f32 %v1481, %v1491
  %v1494 = vmul.f32 %v869, %v1249
  %1496 = vrot.lane.b32.xlu0 %v1494, 119
  %v1497 = vpop.permute.xlu0 %1496
  %v1499 = vadd.f32 %v1487, %v1497
  %v1500 = vmul.f32 %v869, %v1243
  %1502 = vrot.lane.b32.xlu0 %v1500, 118
  %v1503 = vpop.permute.xlu0 %1502
  %v1505 = vadd.f32 %v1493, %v1503
  %v1506 = vmul.f32 %v885, %v1243
  %1508 = vrot.lane.b32.xlu0 %v1506, 118
  %v1509 = vpop.permute.xlu0 %1508
  %v1511 = vadd.f32 %v1499, %v1509
  %v1512 = vmul.f32 %v885, %v1249
  %1514 = vrot.lane.b32.xlu0 %v1512, 118
  %v1515 = vpop.permute.xlu0 %1514
  %v1517 = vadd.f32 %v1505, %v1515
  %v1518 = vmul.f32 %v901, %v1243
  %1520 = vrot.lane.b32.xlu0 %v1518, 112
  %v1521 = vpop.permute.xlu0 %1520
  %v1523 = vadd.f32 %v1511, %v1521
  %v1524 = vmul.f32 %v901, %v1249
  %1526 = vrot.lane.b32.xlu0 %v1524, 112
  %v1527 = vpop.permute.xlu0 %1526
  %v1529 = vadd.f32 %v1517, %v1527
  %v1530 = vmul.f32 %v917, %v1249
  %1532 = vrot.lane.b32.xlu0 %v1530, 112
  %v1533 = vpop.permute.xlu0 %1532
  %v1535 = vadd.f32 %v1523, %v1533
  %v1536 = vmul.f32 %v917, %v1243
  %1538 = vrot.lane.b32.xlu0 %v1536, 111
  %v1539 = vpop.permute.xlu0 %1538
  %v1541 = vadd.f32 %v1529, %v1539
  %v1542 = vmul.f32 %v933, %v1243
  %1544 = vrot.lane.b32.xlu0 %v1542, 111
  %v1545 = vpop.permute.xlu0 %1544
  %v1547 = vadd.f32 %v1535, %v1545
  %v1548 = vmul.f32 %v933, %v1249
  %1550 = vrot.lane.b32.xlu0 %v1548, 111
  %v1551 = vpop.permute.xlu0 %1550
  %v1553 = vadd.f32 %v1541, %v1551
  %v1554 = vmul.f32 %v949, %v1249
  %1556 = vrot.lane.b32.xlu0 %v1554, 111
  %v1557 = vpop.permute.xlu0 %1556
  %v1559 = vadd.f32 %v1547, %v1557
  %v1560 = vmul.f32 %v949, %v1243
  %1562 = vrot.lane.b32.xlu0 %v1560, 110
  %v1563 = vpop.permute.xlu0 %1562
  %v1565 = vadd.f32 %v1553, %v1563
  %v1566 = vmul.f32 %v965, %v1243
  %1568 = vrot.lane.b32.xlu0 %v1566, 110
  %v1569 = vpop.permute.xlu0 %1568
  %v1571 = vadd.f32 %v1559, %v1569
  %v1572 = vmul.f32 %v965, %v1249
  %1574 = vrot.lane.b32.xlu0 %v1572, 110
  %v1575 = vpop.permute.xlu0 %1574
  %v1577 = vadd.f32 %v1565, %v1575
  %v1578 = vmul.f32 %v981, %v1243
  %1580 = vrot.lane.b32.xlu0 %v1578, 104
  %v1581 = vpop.permute.xlu0 %1580
  %v1583 = vadd.f32 %v1571, %v1581
  %v1584 = vmul.f32 %v981, %v1249
  %1586 = vrot.lane.b32.xlu0 %v1584, 104
  %v1587 = vpop.permute.xlu0 %1586
  %v1589 = vadd.f32 %v1577, %v1587
  %v1590 = vmul.f32 %v997, %v1249
  %1592 = vrot.lane.b32.xlu0 %v1590, 104
  %v1593 = vpop.permute.xlu0 %1592
  %v1595 = vadd.f32 %v1583, %v1593
  %v1596 = vmul.f32 %v997, %v1243
  %1598 = vrot.lane.b32.xlu0 %v1596, 103
  %v1599 = vpop.permute.xlu0 %1598
  %v1601 = vadd.f32 %v1589, %v1599
  %v1602 = vmul.f32 %v1013, %v1243
  %1604 = vrot.lane.b32.xlu0 %v1602, 103
  %v1605 = vpop.permute.xlu0 %1604
  %v1607 = vadd.f32 %v1595, %v1605
  %v1608 = vmul.f32 %v1013, %v1249
  %1610 = vrot.lane.b32.xlu0 %v1608, 103
  %v1611 = vpop.permute.xlu0 %1610
  %v1613 = vadd.f32 %v1601, %v1611
  %v1614 = vmul.f32 %v1029, %v1249
  %1616 = vrot.lane.b32.xlu0 %v1614, 103
  %v1617 = vpop.permute.xlu0 %1616
  %v1619 = vadd.f32 %v1607, %v1617
  %v1620 = vmul.f32 %v1029, %v1243
  %1622 = vrot.lane.b32.xlu0 %v1620, 102
  %v1623 = vpop.permute.xlu0 %1622
  %v1625 = vadd.f32 %v1613, %v1623
  %v1626 = vmul.f32 %v1045, %v1243
  %1628 = vrot.lane.b32.xlu0 %v1626, 102
  %v1629 = vpop.permute.xlu0 %1628
  %v1631 = vadd.f32 %v1619, %v1629
  %v1632 = vmul.f32 %v1045, %v1249
  %1634 = vrot.lane.b32.xlu0 %v1632, 102
  %v1635 = vpop.permute.xlu0 %1634
  %v1637 = vadd.f32 %v1625, %v1635
  %v1638 = vmul.f32 %v1061, %v1243
  %1640 = vrot.lane.b32.xlu0 %v1638, 96
  %v1641 = vpop.permute.xlu0 %1640
  %v1643 = vadd.f32 %v1631, %v1641
  %v1644 = vmul.f32 %v1061, %v1249
  %1646 = vrot.lane.b32.xlu0 %v1644, 96
  %v1647 = vpop.permute.xlu0 %1646
  %v1649 = vadd.f32 %v1637, %v1647
  %v1650 = vmul.f32 %v1077, %v1249
  %1652 = vrot.lane.b32.xlu0 %v1650, 96
  %v1653 = vpop.permute.xlu0 %1652
  %v1655 = vadd.f32 %v1643, %v1653
  %v1656 = vmul.f32 %v1077, %v1243
  %1658 = vrot.lane.b32.xlu0 %v1656, 95
  %v1659 = vpop.permute.xlu0 %1658
  %v1660 = vsel %vm1093, %v1659, %v1092
  %v1662 = vadd.f32 %v1649, %v1660
  %v1663 = vmul.f32 %v1099, %v1243
  %1665 = vrot.lane.b32.xlu0 %v1663, 95
  %v1666 = vpop.permute.xlu0 %1665
  %v1667 = vsel %vm1093, %v1666, %v1108
  %v1669 = vadd.f32 %v1655, %v1667
  %v1670 = vmul.f32 %v1099, %v1249
  %1672 = vrot.lane.b32.xlu0 %v1670, 95
  %v1673 = vpop.permute.xlu0 %1672
  %v1674 = vsel %vm1093, %v1673, %v1108
  %v1676 = vadd.f32 %v1662, %v1674
  %v1677 = vmul.f32 %v1121, %v1249
  %1679 = vrot.lane.b32.xlu0 %v1677, 95
  %v1680 = vpop.permute.xlu0 %1679
  %v1681 = vsel %vm1093, %v1680, %v1130
  %v1683 = vadd.f32 %v1669, %v1681
  %v1684 = vmul.f32 %v1121, %v1243
  %1686 = vrot.lane.b32.xlu0 %v1684, 94
  %v1687 = vpop.permute.xlu0 %1686
  %v1688 = vsel %vm1140, %v1687, %v1139
  %v1690 = vadd.f32 %v1676, %v1688
  %v1691 = vmul.f32 %v1146, %v1243
  %1693 = vrot.lane.b32.xlu0 %v1691, 94
  %v1694 = vpop.permute.xlu0 %1693
  %v1695 = vsel %vm1140, %v1694, %v1155
  %v1697 = vadd.f32 %v1683, %v1695
  %v1698 = vmul.f32 %v1146, %v1249
  %1700 = vrot.lane.b32.xlu0 %v1698, 94
  %v1701 = vpop.permute.xlu0 %1700
  %v1702 = vsel %vm1140, %v1701, %v1155
  %v1704 = vadd.f32 %v1690, %v1702
  %v1705 = vadd.f32 %v1697, %v1170
  %v1706 = vadd.f32 %v1704, %v1170
  %vm1707 = vcmp.ge.f32.partialorder %v1705, 0.0
  %v1708 = vmul.f32 %v1705, 0.01
  %v1709 = vsel %vm1707, %v1705, %v1708
  %vm1710 = vcmp.ge.f32.partialorder %v1706, 0.0
  %v1711 = vmul.f32 %v1706, 0.01
  %v1712 = vsel %vm1710, %v1706, %v1711
  %v1713 = vadd.f32 %v1709, %v1712
  %v1714 = vmul.f32 %v1713, 0.5
  %1716 = vrot.lane.b32.xlu0 %v1714, 126
  %v1717 = vpop.permute.xlu0 %1716
  %1719 = vrot.lane.b32.xlu0 %v1714, 124
  %v1720 = vpop.permute.xlu0 %1719
  %1722 = vrot.lane.b32.xlu0 %v1714, 122
  %v1723 = vpop.permute.xlu0 %1722
  %1725 = vrot.lane.b32.xlu0 %v1714, 120
  %v1726 = vpop.permute.xlu0 %1725
  %1728 = vrot.lane.b32.xlu0 %v1714, 118
  %v1729 = vpop.permute.xlu0 %1728
  %1731 = vrot.lane.b32.xlu0 %v1714, 116
  %v1732 = vpop.permute.xlu0 %1731
  %1734 = vrot.lane.b32.xlu0 %v1714, 114
  %v1735 = vpop.permute.xlu0 %1734
  %1737 = vrot.lane.b32.xlu0 %v1714, 112
  %v1738 = vpop.permute.xlu0 %1737
  %1740 = vrot.lane.b32.xlu0 %v1714, 110
  %v1741 = vpop.permute.xlu0 %1740
  %1743 = vrot.lane.b32.xlu0 %v1714, 108
  %v1744 = vpop.permute.xlu0 %1743
  %1746 = vrot.lane.b32.xlu0 %v1714, 106
  %v1747 = vpop.permute.xlu0 %1746
  %v1749 = vsel %vm143, %v1714, %v1717
  %v1750 = vsel %vm1217, %v1749, %v1720
  %v1751 = vsel %vm1219, %v1750, %v1723
  %v1752 = vsel %vm321, %v1751, %v1726
  %v1753 = vsel %vm1222, %v1752, %v1729
  %v1754 = vsel %vm1224, %v1753, %v1732
  %v1755 = vsel %vm734, %v1754, %v1735
  %v1756 = vsel %vm330, %v1755, %v1738
  %v1757 = vsel %vm1228, %v1756, %v1741
  %v1758 = vsel %vm1230, %v1757, %v1744
  %v1759 = vsel %vm1232, %v1758, %v1747
  %1761 = vrot.lane.b32.xlu0 %v1759, 98
  %v1762 = vpop.permute.xlu0 %1761
  %v1764 = vsel %vm1238, %v1409, %v1762
  %v1765 = vsel %vm734, %v1236, 0.0
  %v1766 = vadd.f32 %v1239, %v1765
  %1767 = vadd.xlane.f32.xlu0 %v1766
  %v1768 = vpop.xlane.xlu0 %1767
  %v1769 = vadd.f32 %v1768, 0.0
  %v1770 = vsel %vm734, %v1762, 0.0
  %v1771 = vadd.f32 %v1764, %v1770
  %1772 = vadd.xlane.f32.xlu0 %v1771
  %v1773 = vpop.xlane.xlu0 %1772
  %v1774 = vadd.f32 %v1769, %v1773
  %v1775 = vmul.f32 %v1774, 0.0029411765
  %v1776 = vsub.f32 %v1239, %v1775
  %v1777 = vsub.f32 %v1236, %v1775
  %v1778 = vmul.f32 %v1776, %v1776
  %v1779 = vmul.f32 %v1777, %v1777
  %v1780 = vsel %vm734, %v1779, 0.0
  %v1781 = vadd.f32 %v1778, %v1780
  %1782 = vadd.xlane.f32.xlu0 %v1781
  %v1783 = vpop.xlane.xlu0 %1782
  %v1784 = vadd.f32 %v1783, 0.0
  %v1785 = vsub.f32 %v1764, %v1775
  %v1786 = vsub.f32 %v1762, %v1775
  %v1787 = vmul.f32 %v1785, %v1785
  %v1788 = vmul.f32 %v1786, %v1786
  %v1789 = vsel %vm734, %v1788, 0.0
  %v1790 = vadd.f32 %v1787, %v1789
  %1791 = vadd.xlane.f32.xlu0 %v1790
  %v1792 = vpop.xlane.xlu0 %1791
  %v1793 = vadd.f32 %v1784, %v1792
  %v1794 = vmul.f32 %v1793, 0.0029411765
  %v1795 = vadd.f32 %v1794, 1e-05
  %v1796 = vrsqrt.pop %v1795
  %v1797 = vld [vmem:[%s5] sm:$0xff]
  %v1798 = vmul.f32 %v1796, %v1797
  %v1799 = vld [vmem:[%s6] sm:$0xff]
  %v1800 = vmul.f32 %v1775, %v1798
  %v1801 = vsub.f32 %v1799, %v1800
  %1803 = vset.pattern.permute.xlu0 0
  %1804 = vperm.xlu0 %1803, %v1798
  %v1805 = vpop.permute.xlu0 %1804
  %v1807 = vmul.f32 %v1239, %v1805
  %v1808 = vmul.f32 %v1236, %v1805
  %1810 = vset.pattern.permute.xlu0 0
  %1811 = vperm.xlu0 %1810, %v1801
  %v1812 = vpop.permute.xlu0 %1811
  %v1814 = vadd.f32 %v1807, %v1812
  %v1815 = vadd.f32 %v1808, %v1812
  %1816 = vst [vmem:[%s7] sm:$0xff] %v1814
  %1817 = vst.msk [vmem:[%s7 + $0x8] sm:$0xff] %vm734, %v1815
  %v1818 = vmul.f32 %v1764, %v1805
  %v1819 = vmul.f32 %v1762, %v1805
  %v1820 = vadd.f32 %v1818, %v1812
  %v1821 = vadd.f32 %v1819, %v1812
  %s1822 = scalar_lea.vmem %s7, 16
  %1823 = vst [vmem:[%s1822] sm:$0xff] %v1820
  %1824 = vst.msk [vmem:[%s1822 + $0x8] sm:$0xff] %vm734, %v1821
  // Predicated region
  $region30: #{spatial_inception_block.1} parent=0 // pred_check
    _
  $region31: #{spatial_inception_block.1} parent=0 // pred_check_branch
    %1826 = sbr.rel (0) target = $region33
  $region32: #{spatial_inception_block.1} parent=0 // pred_region
    _
  $region33: #{spatial_inception_block.1} parent=0 // pred_fallthru
    _
  // Predicated region
  $region34: #{spatial_inception_block.1} parent=0 // pred_check
    _
  $region35: #{spatial_inception_block.1} parent=0 // pred_check_branch
    %1828 = sbr.rel (0) target = $region37
  $region36: #{spatial_inception_block.1} parent=0 // pred_region
    _
  $region37: #{spatial_inception_block.1} parent=0 // pred_fallthru
    _

</llo_original>
